<compile_context>
chip_gen: v7x
topology: tpu7x:2x2x1
jax: 0.10.0
libtpu: 0.0.40
codegen_flags: <defaults>
</compile_context>

<pallas_src>
import functools

import jax
import jax.numpy as jnp
from jax import lax
from jax.experimental import pallas as pl
from jax.experimental.pallas import tpu as pltpu

_EPS = 1e-5  # nn.BatchNorm2d default eps


# --------------------------- weight preprocessing ---------------------------
def _band_weights(w, W):
    """w: (3, 3, Cin, Cout) -> (3, W*Cin, W*Cout) W-banded matrices.

    band[ky][wi*Cin + ci, wo*Cout + co] = w[ky, wi - wo + 1, ci, co] when
    |wi - wo| <= 1, else 0.  Matmul of a folded row (lane = w*Cin + ci) with
    band[ky] performs the kx-sweep of the 3x3 conv *including* the W-direction
    'same' zero padding (out-of-range wi simply has no band entry).
    """
    kH, kW, Cin, Cout = w.shape
    wi = jnp.arange(W)[:, None]                       # (W, 1)
    wo = jnp.arange(W)[None, :]                       # (1, W)
    kx = wi - wo + 1                                  # (W, W)
    valid = (kx >= 0) & (kx < kW)
    kx = jnp.clip(kx, 0, kW - 1)
    bands = []
    for ky in range(kH):
        blk = w[ky][kx]                               # (W, W, Cin, Cout)
        blk = jnp.where(valid[:, :, None, None], blk, 0.0)
        band = jnp.transpose(blk, (0, 2, 1, 3)).reshape(W * Cin, W * Cout)
        bands.append(band)
    return jnp.stack(bands, axis=0)                   # (3, W*Cin, W*Cout)


# --------------------------------- kernel -----------------------------------
def basic_block_kernel(x_ref, wb1_ref, wb2_ref, g1_ref, b1_ref, g2_ref, b2_ref,
                       p_ref, out_ref, pad_ref, *, width):
    N, H, WC = x_ref.shape                            # folded: WC = W * C
    NH = N * H
    inv_count = 1.0 / float(N * H * width)            # BN count = N*H*W

    p = p_ref[...]                                    # (WC, WC) 0/1 channel-pool proj

    def conv(wb_ref):
        # pad_ref holds the bf16 activation at rows [2, H+2); rows [0, 2) and
        # [H+2, H+4) are zero (the H 'same' padding).  The W padding lives in
        # the banded weights.  Three per-band MXU matmuls, f32 accumulation.
        xp = pad_ref[...]                             # (N, H+4, WC) bf16
        acc = jnp.dot(xp[:, 1:H + 1, :].reshape(NH, WC), wb_ref[0],
                      preferred_element_type=jnp.float32)          # ky = 0
        acc += jnp.dot(xp[:, 2:H + 2, :].reshape(NH, WC), wb_ref[1],
                       preferred_element_type=jnp.float32)         # ky = 1
        acc += jnp.dot(xp[:, 3:H + 3, :].reshape(NH, WC), wb_ref[2],
                       preferred_element_type=jnp.float32)         # ky = 2
        return acc                                                  # (NH, WC) f32

    def bn(y, gamma_l, beta_l, relu):
        # Training-mode (biased) batch stats.  Per-channel pooling across the
        # W lane-groups via the single precomputed 0/1 projection P: 2 tiny
        # HIGHEST matmuls per BN (was 5).  gamma/beta arrive as lane vectors.
        s = jnp.sum(y, axis=0, keepdims=True)                          # (1, WC)
        mean_l = jnp.dot(s, p, preferred_element_type=jnp.float32,
                         precision=lax.Precision.HIGHEST) * inv_count  # (1, WC)
        d = y - mean_l
        s2 = jnp.sum(d * d, axis=0, keepdims=True)                     # (1, WC)
        var_l = jnp.dot(s2, p, preferred_element_type=jnp.float32,
                        precision=lax.Precision.HIGHEST) * inv_count   # (1, WC)
        out = d * (gamma_l * lax.rsqrt(var_l + _EPS)) + beta_l
        return jnp.maximum(out, 0.0) if relu else out

    x = x_ref[...]                                    # (N, H, WC) f32 (residual)

    # Zero only the (packed-word-aligned) H-halo rows, once.  The interior is
    # fully rewritten before every conv read; the W halo lives in the weights.
    zhalo = jnp.zeros((N, 2, WC), jnp.bfloat16)
    pad_ref[:, 0:2, :] = zhalo
    pad_ref[:, H + 2:H + 4, :] = zhalo

    # conv1 -> bn1 -> relu   (activation cast to bf16 once, stored already cast)
    pad_ref[:, 2:H + 2, :] = x.astype(jnp.bfloat16)
    y = bn(conv(wb1_ref), g1_ref[...], b1_ref[...], relu=True)

    # conv2 -> bn2           (BN1 output stored already cast; halo still zero)
    pad_ref[:, 2:H + 2, :] = y.astype(jnp.bfloat16).reshape(N, H, WC)
    y = bn(conv(wb2_ref), g2_ref[...], b2_ref[...], relu=False)

    # residual add + relu    (stride=1, downsample=None => identity = x, f32)
    out_ref[...] = jnp.maximum(y.reshape(N, H, WC) + x, 0.0).astype(out_ref.dtype)


# -------------------------------- wrapper ------------------------------------
def basic_block(x_nchw, w1, g1, b1, w2, g2, b2):
    """x_nchw: (N, C, H, W); w*: (3, 3, Cin, Cout) HWIO; g*/b*: (C,)."""
    N, C, H, W = x_nchw.shape
    Cout = w1.shape[-1]
    assert Cout == C, "identity residual requires in_channel == out_channel"
    WC = W * C

    # TODO(synk): keep the model in this folded NHWC layout (and bf16) between
    # blocks so the HBM relayout transposes and f32 casts disappear at scale.
    x = jnp.transpose(x_nchw, (0, 2, 3, 1)).astype(jnp.float32).reshape(N, H, WC)

    # Banded conv weights (bf16 MXU operands).
    wb1 = _band_weights(w1, W).astype(jnp.bfloat16)          # (3, WC, WC)
    wb2 = _band_weights(w2, W).astype(jnp.bfloat16)

    # Precomputed BN lane constants and the fold@unfold channel-pool projection.
    fold = jnp.tile(jnp.eye(C, dtype=jnp.float32), (W, 1))   # (WC, C)
    proj = fold @ fold.T                                     # (WC, WC), 0/1 entries
    g1l = jnp.tile(g1.astype(jnp.float32), W).reshape(1, WC)
    b1l = jnp.tile(b1.astype(jnp.float32), W).reshape(1, WC)
    g2l = jnp.tile(g2.astype(jnp.float32), W).reshape(1, WC)
    b2l = jnp.tile(b2.astype(jnp.float32), W).reshape(1, WC)

    args = (x, wb1, wb2, g1l, b1l, g2l, b2l, proj)

    flops = 2 * (2 * N * H * 3 * WC * WC) + 4 * (2 * WC * WC)
    bytes_accessed = int(sum(a.size * a.dtype.itemsize for a in args)
                         + N * H * WC * 4)

    out = pl.pallas_call(
        functools.partial(basic_block_kernel, width=W),
        out_shape=jax.ShapeDtypeStruct((N, H, WC), jnp.float32),
        in_specs=[pl.BlockSpec(memory_space=pltpu.MemorySpace.VMEM)] * len(args),
        out_specs=pl.BlockSpec(memory_space=pltpu.MemorySpace.VMEM),
        scratch_shapes=[pltpu.VMEM((N, H + 4, WC), jnp.bfloat16)],
        compiler_params=pltpu.CompilerParams(vmem_limit_bytes=4 * 1024 * 1024),
        cost_estimate=pl.CostEstimate(flops=flops, transcendentals=2 * WC,
                                      bytes_accessed=bytes_accessed),
    )(*args)

    return jnp.transpose(out.reshape(N, H, W, C), (0, 3, 1, 2))   # NHWC -> NCHW


# ------------------------- pure-JAX references (check) -----------------------
def _reference(x, w1, g1, b1, w2, g2, b2, matmul_dtype=jnp.float32):
    """Reference BasicBlock. matmul_dtype=bf16 mirrors the kernel's MXU
    numerics (bf16 operands, f32 accumulation); f32 uses HIGHEST precision."""
    prec = lax.Precision.HIGHEST if matmul_dtype == jnp.float32 else None

    def conv(xx, w):
        return lax.conv_general_dilated(
            xx.astype(matmul_dtype), w.astype(matmul_dtype),
            window_strides=(1, 1), padding=((1, 1), (1, 1)),
            dimension_numbers=("NCHW", "HWIO", "NCHW"),
            preferred_element_type=jnp.float32, precision=prec)

    def bn(y, gamma, beta):
        g = gamma.reshape(1, -1, 1, 1)
        bb = beta.reshape(1, -1, 1, 1)
        mean = jnp.mean(y, axis=(0, 2, 3), keepdims=True)
        var = jnp.mean((y - mean) ** 2, axis=(0, 2, 3), keepdims=True)
        return (y - mean) * lax.rsqrt(var + _EPS) * g + bb

    out = jax.nn.relu(bn(conv(x, w1), g1, b1))
    out = bn(conv(out, w2), g2, b2)
    return jax.nn.relu(out + x)


# ---------------------------------- main --------------------------------------
if __name__ == "__main__":
    key = jax.random.PRNGKey(0)
    kx, kw1, kw2, kg1, kb1, kg2, kb2 = jax.random.split(key, 7)

    N, C, H, W = 2, 8, 16, 16          # W * C = 128 -> fully lane-dense

    x = jax.random.normal(kx, (N, C, H, W), jnp.float32)

    scale = (2.0 / (9 * C)) ** 0.5     # kaiming-ish init
    w1 = jax.random.normal(kw1, (3, 3, C, C), jnp.float32) * scale
    w2 = jax.random.normal(kw2, (3, 3, C, C), jnp.float32) * scale

    g1 = 1.0 + 0.1 * jax.random.normal(kg1, (C,), jnp.float32)
    b1 = 0.1 * jax.random.normal(kb1, (C,), jnp.float32)
    g2 = 1.0 + 0.1 * jax.random.normal(kg2, (C,), jnp.float32)
    b2 = 0.1 * jax.random.normal(kb2, (C,), jnp.float32)

    out = jax.block_until_ready(basic_block(x, w1, g1, b1, w2, g2, b2))
    assert out.shape == (N, C, H, W)

    # Tight check against a reference with the same precision model (bf16
    # operands, f32 accumulation), plus a looser sanity check against the
    # full-f32 module semantics.  Conv accuracy is bf16-level by design.
    ref_bf16 = _reference(x, w1, g1, b1, w2, g2, b2, matmul_dtype=jnp.bfloat16)
    ref_f32 = _reference(x, w1, g1, b1, w2, g2, b2, matmul_dtype=jnp.float32)

    err_bf16 = float(jnp.max(jnp.abs(out - ref_bf16)))
    err_f32 = float(jnp.max(jnp.abs(out - ref_f32)))
    assert jnp.allclose(out, ref_bf16, atol=1e-2, rtol=1e-2), f"bf16-ref err={err_bf16}"
    assert jnp.allclose(out, ref_f32, atol=1e-1, rtol=1e-1), f"f32-ref err={err_f32}"

    print("KERNEL_OK")
</pallas_src>

<mosaic_0001>
module attributes {stable_mosaic.version = 11 : i64} {
  func.func @basic_block_kernel(%arg0: memref<2x16x128xf32, #tpu.memory_space<vmem>>, %arg1: memref<3x128x128xbf16, #tpu.memory_space<vmem>>, %arg2: memref<3x128x128xbf16, #tpu.memory_space<vmem>>, %arg3: memref<1x128xf32, #tpu.memory_space<vmem>>, %arg4: memref<1x128xf32, #tpu.memory_space<vmem>>, %arg5: memref<1x128xf32, #tpu.memory_space<vmem>>, %arg6: memref<1x128xf32, #tpu.memory_space<vmem>>, %arg7: memref<128x128xf32, #tpu.memory_space<vmem>>, %arg8: memref<2x16x128xf32, #tpu.memory_space<vmem>>, %arg9: memref<2x20x128xbf16, #tpu.memory_space<vmem>>) attributes {dimension_semantics = [], scalar_prefetch = 0 : i64, scratch_operands = 1 : i64, tpu.core_type = #tpu.core_type<tc>} {
    %c0 = arith.constant 0 : index
    %c0_0 = arith.constant 0 : index
    %0 = vector.load %arg7[%c0, %c0_0] : memref<128x128xf32, #tpu.memory_space<vmem>>, vector<128x128xf32>
    %c0_1 = arith.constant 0 : index
    %c0_2 = arith.constant 0 : index
    %c0_3 = arith.constant 0 : index
    %1 = vector.load %arg0[%c0_1, %c0_2, %c0_3] : memref<2x16x128xf32, #tpu.memory_space<vmem>>, vector<2x16x128xf32>
    %cst = arith.constant 0.000000e+00 : bf16
    %2 = vector.broadcast %cst : bf16 to vector<2x2x128xbf16>
    %c0_4 = arith.constant 0 : index
    %c0_5 = arith.constant 0 : index
    %c0_6 = arith.constant 0 : index
    %3 = vector.load %arg9[%c0_4, %c0_5, %c0_6] : memref<2x20x128xbf16, #tpu.memory_space<vmem>>, vector<2x2x128xbf16>
    tpu.vector_store %arg9[%c0_4, %c0_5, %c0_6], %2 {strides = array<i32>} : memref<2x20x128xbf16, #tpu.memory_space<vmem>>, vector<2x2x128xbf16>,
    %c0_7 = arith.constant 0 : index
    %c18 = arith.constant 18 : index
    %c0_8 = arith.constant 0 : index
    %4 = vector.load %arg9[%c0_7, %c18, %c0_8] : memref<2x20x128xbf16, #tpu.memory_space<vmem>>, vector<2x2x128xbf16>
    tpu.vector_store %arg9[%c0_7, %c18, %c0_8], %2 {strides = array<i32>} : memref<2x20x128xbf16, #tpu.memory_space<vmem>>, vector<2x2x128xbf16>,
    %5 = arith.truncf %1 : vector<2x16x128xf32> to vector<2x16x128xbf16>
    %c0_9 = arith.constant 0 : index
    %c2 = arith.constant 2 : index
    %c0_10 = arith.constant 0 : index
    %6 = vector.load %arg9[%c0_9, %c2, %c0_10] : memref<2x20x128xbf16, #tpu.memory_space<vmem>>, vector<2x16x128xbf16>
    tpu.vector_store %arg9[%c0_9, %c2, %c0_10], %5 {strides = array<i32>} : memref<2x20x128xbf16, #tpu.memory_space<vmem>>, vector<2x16x128xbf16>,
    %c0_11 = arith.constant 0 : index
    %c0_12 = arith.constant 0 : index
    %c0_13 = arith.constant 0 : index
    %7 = vector.load %arg9[%c0_11, %c0_12, %c0_13] : memref<2x20x128xbf16, #tpu.memory_space<vmem>>, vector<2x20x128xbf16>
    %8 = vector.extract_strided_slice %7 {offsets = [0, 1, 0], sizes = [2, 16, 128], strides = [1, 1, 1]} : vector<2x20x128xbf16> to vector<2x16x128xbf16>
    %9 = vector.shape_cast %8 : vector<2x16x128xbf16> to vector<32x128xbf16>
    %c0_14 = arith.constant 0 : index
    %c0_15 = arith.constant 0 : index
    %c0_16 = arith.constant 0 : index
    %10 = vector.load %arg1[%c0_14, %c0_15, %c0_16] : memref<3x128x128xbf16, #tpu.memory_space<vmem>>, vector<1x128x128xbf16>
    %11 = vector.shape_cast %10 : vector<1x128x128xbf16> to vector<128x128xbf16>
    %cst_17 = arith.constant dense<0.000000e+00> : vector<32x128xf32>
    %12 = tpu.matmul %9, %11, %cst_17 {dimension_numbers = #tpu.dot_dimension_numbers<[1], [0], [0], [1], [0, 0, 1, 1], [], []>} : vector<32x128xbf16>, vector<128x128xbf16>, vector<32x128xf32> -> vector<32x128xf32>
    %13 = vector.extract_strided_slice %7 {offsets = [0, 2, 0], sizes = [2, 16, 128], strides = [1, 1, 1]} : vector<2x20x128xbf16> to vector<2x16x128xbf16>
    %14 = vector.shape_cast %13 : vector<2x16x128xbf16> to vector<32x128xbf16>
    %c1 = arith.constant 1 : index
    %c0_18 = arith.constant 0 : index
    %c0_19 = arith.constant 0 : index
    %15 = vector.load %arg1[%c1, %c0_18, %c0_19] : memref<3x128x128xbf16, #tpu.memory_space<vmem>>, vector<1x128x128xbf16>
    %16 = vector.shape_cast %15 : vector<1x128x128xbf16> to vector<128x128xbf16>
    %cst_20 = arith.constant dense<0.000000e+00> : vector<32x128xf32>
    %17 = tpu.matmul %14, %16, %cst_20 {dimension_numbers = #tpu.dot_dimension_numbers<[1], [0], [0], [1], [0, 0, 1, 1], [], []>} : vector<32x128xbf16>, vector<128x128xbf16>, vector<32x128xf32> -> vector<32x128xf32>
    %18 = arith.addf %12, %17 : vector<32x128xf32>
    %19 = vector.extract_strided_slice %7 {offsets = [0, 3, 0], sizes = [2, 16, 128], strides = [1, 1, 1]} : vector<2x20x128xbf16> to vector<2x16x128xbf16>
    %20 = vector.shape_cast %19 : vector<2x16x128xbf16> to vector<32x128xbf16>
    %c2_21 = arith.constant 2 : index
    %c0_22 = arith.constant 0 : index
    %c0_23 = arith.constant 0 : index
    %21 = vector.load %arg1[%c2_21, %c0_22, %c0_23] : memref<3x128x128xbf16, #tpu.memory_space<vmem>>, vector<1x128x128xbf16>
    %22 = vector.shape_cast %21 : vector<1x128x128xbf16> to vector<128x128xbf16>
    %cst_24 = arith.constant dense<0.000000e+00> : vector<32x128xf32>
    %23 = tpu.matmul %20, %22, %cst_24 {dimension_numbers = #tpu.dot_dimension_numbers<[1], [0], [0], [1], [0, 0, 1, 1], [], []>} : vector<32x128xbf16>, vector<128x128xbf16>, vector<32x128xf32> -> vector<32x128xf32>
    %24 = arith.addf %18, %23 : vector<32x128xf32>
    %c0_25 = arith.constant 0 : index
    %c0_26 = arith.constant 0 : index
    %25 = vector.load %arg3[%c0_25, %c0_26] : memref<1x128xf32, #tpu.memory_space<vmem>>, vector<1x128xf32>
    %c0_27 = arith.constant 0 : index
    %c0_28 = arith.constant 0 : index
    %26 = vector.load %arg4[%c0_27, %c0_28] : memref<1x128xf32, #tpu.memory_space<vmem>>, vector<1x128xf32>
    %cst_29 = arith.constant dense<0.000000e+00> : vector<128xf32>
    %27 = vector.multi_reduction <add>, %24, %cst_29 [0] : vector<32x128xf32> to vector<128xf32>
    %28 = vector.shape_cast %27 : vector<128xf32> to vector<1x128xf32>
    %cst_30 = arith.constant dense<0.000000e+00> : vector<1x128xf32>
    %29 = tpu.matmul %28, %0, %cst_30 {dimension_numbers = #tpu.dot_dimension_numbers<[1], [0], [0], [1], [0, 0, 1, 1], [], []>, precision = #tpu.contract_precision<fp32>} : vector<1x128xf32>, vector<128x128xf32>, vector<1x128xf32> -> vector<1x128xf32>
    %cst_31 = arith.constant 0.001953125 : f32
    %30 = vector.broadcast %cst_31 : f32 to vector<1x128xf32>
    %31 = arith.mulf %29, %30 : vector<1x128xf32>
    %32 = vector.broadcast %31 : vector<1x128xf32> to vector<32x128xf32>
    %33 = arith.subf %24, %32 : vector<32x128xf32>
    %34 = arith.mulf %33, %33 : vector<32x128xf32>
    %cst_32 = arith.constant dense<0.000000e+00> : vector<128xf32>
    %35 = vector.multi_reduction <add>, %34, %cst_32 [0] : vector<32x128xf32> to vector<128xf32>
    %36 = vector.shape_cast %35 : vector<128xf32> to vector<1x128xf32>
    %cst_33 = arith.constant dense<0.000000e+00> : vector<1x128xf32>
    %37 = tpu.matmul %36, %0, %cst_33 {dimension_numbers = #tpu.dot_dimension_numbers<[1], [0], [0], [1], [0, 0, 1, 1], [], []>, precision = #tpu.contract_precision<fp32>} : vector<1x128xf32>, vector<128x128xf32>, vector<1x128xf32> -> vector<1x128xf32>
    %cst_34 = arith.constant 0.001953125 : f32
    %38 = vector.broadcast %cst_34 : f32 to vector<1x128xf32>
    %39 = arith.mulf %37, %38 : vector<1x128xf32>
    %cst_35 = arith.constant 9.99999974E-6 : f32
    %40 = vector.broadcast %cst_35 : f32 to vector<1x128xf32>
    %41 = arith.addf %39, %40 : vector<1x128xf32>
    %42 = math.rsqrt %41 : vector<1x128xf32>
    %43 = arith.mulf %25, %42 : vector<1x128xf32>
    %44 = vector.broadcast %43 : vector<1x128xf32> to vector<32x128xf32>
    %45 = arith.mulf %33, %44 : vector<32x128xf32>
    %46 = vector.broadcast %26 : vector<1x128xf32> to vector<32x128xf32>
    %47 = arith.addf %45, %46 : vector<32x128xf32>
    %cst_36 = arith.constant 0.000000e+00 : f32
    %48 = vector.broadcast %cst_36 : f32 to vector<32x128xf32>
    %49 = arith.maximumf %47, %48 : vector<32x128xf32>
    %50 = arith.truncf %49 : vector<32x128xf32> to vector<32x128xbf16>
    %51 = vector.shape_cast %50 : vector<32x128xbf16> to vector<2x16x128xbf16>
    %c0_37 = arith.constant 0 : index
    %c2_38 = arith.constant 2 : index
    %c0_39 = arith.constant 0 : index
    %52 = vector.load %arg9[%c0_37, %c2_38, %c0_39] : memref<2x20x128xbf16, #tpu.memory_space<vmem>>, vector<2x16x128xbf16>
    tpu.vector_store %arg9[%c0_37, %c2_38, %c0_39], %51 {strides = array<i32>} : memref<2x20x128xbf16, #tpu.memory_space<vmem>>, vector<2x16x128xbf16>,
    %c0_40 = arith.constant 0 : index
    %c0_41 = arith.constant 0 : index
    %c0_42 = arith.constant 0 : index
    %53 = vector.load %arg9[%c0_40, %c0_41, %c0_42] : memref<2x20x128xbf16, #tpu.memory_space<vmem>>, vector<2x20x128xbf16>
    %54 = vector.extract_strided_slice %53 {offsets = [0, 1, 0], sizes = [2, 16, 128], strides = [1, 1, 1]} : vector<2x20x128xbf16> to vector<2x16x128xbf16>
    %55 = vector.shape_cast %54 : vector<2x16x128xbf16> to vector<32x128xbf16>
    %c0_43 = arith.constant 0 : index
    %c0_44 = arith.constant 0 : index
    %c0_45 = arith.constant 0 : index
    %56 = vector.load %arg2[%c0_43, %c0_44, %c0_45] : memref<3x128x128xbf16, #tpu.memory_space<vmem>>, vector<1x128x128xbf16>
    %57 = vector.shape_cast %56 : vector<1x128x128xbf16> to vector<128x128xbf16>
    %cst_46 = arith.constant dense<0.000000e+00> : vector<32x128xf32>
    %58 = tpu.matmul %55, %57, %cst_46 {dimension_numbers = #tpu.dot_dimension_numbers<[1], [0], [0], [1], [0, 0, 1, 1], [], []>} : vector<32x128xbf16>, vector<128x128xbf16>, vector<32x128xf32> -> vector<32x128xf32>
    %59 = vector.extract_strided_slice %53 {offsets = [0, 2, 0], sizes = [2, 16, 128], strides = [1, 1, 1]} : vector<2x20x128xbf16> to vector<2x16x128xbf16>
    %60 = vector.shape_cast %59 : vector<2x16x128xbf16> to vector<32x128xbf16>
    %c1_47 = arith.constant 1 : index
    %c0_48 = arith.constant 0 : index
    %c0_49 = arith.constant 0 : index
    %61 = vector.load %arg2[%c1_47, %c0_48, %c0_49] : memref<3x128x128xbf16, #tpu.memory_space<vmem>>, vector<1x128x128xbf16>
    %62 = vector.shape_cast %61 : vector<1x128x128xbf16> to vector<128x128xbf16>
    %cst_50 = arith.constant dense<0.000000e+00> : vector<32x128xf32>
    %63 = tpu.matmul %60, %62, %cst_50 {dimension_numbers = #tpu.dot_dimension_numbers<[1], [0], [0], [1], [0, 0, 1, 1], [], []>} : vector<32x128xbf16>, vector<128x128xbf16>, vector<32x128xf32> -> vector<32x128xf32>
    %64 = arith.addf %58, %63 : vector<32x128xf32>
    %65 = vector.extract_strided_slice %53 {offsets = [0, 3, 0], sizes = [2, 16, 128], strides = [1, 1, 1]} : vector<2x20x128xbf16> to vector<2x16x128xbf16>
    %66 = vector.shape_cast %65 : vector<2x16x128xbf16> to vector<32x128xbf16>
    %c2_51 = arith.constant 2 : index
    %c0_52 = arith.constant 0 : index
    %c0_53 = arith.constant 0 : index
    %67 = vector.load %arg2[%c2_51, %c0_52, %c0_53] : memref<3x128x128xbf16, #tpu.memory_space<vmem>>, vector<1x128x128xbf16>
    %68 = vector.shape_cast %67 : vector<1x128x128xbf16> to vector<128x128xbf16>
    %cst_54 = arith.constant dense<0.000000e+00> : vector<32x128xf32>
    %69 = tpu.matmul %66, %68, %cst_54 {dimension_numbers = #tpu.dot_dimension_numbers<[1], [0], [0], [1], [0, 0, 1, 1], [], []>} : vector<32x128xbf16>, vector<128x128xbf16>, vector<32x128xf32> -> vector<32x128xf32>
    %70 = arith.addf %64, %69 : vector<32x128xf32>
    %c0_55 = arith.constant 0 : index
    %c0_56 = arith.constant 0 : index
    %71 = vector.load %arg5[%c0_55, %c0_56] : memref<1x128xf32, #tpu.memory_space<vmem>>, vector<1x128xf32>
    %c0_57 = arith.constant 0 : index
    %c0_58 = arith.constant 0 : index
    %72 = vector.load %arg6[%c0_57, %c0_58] : memref<1x128xf32, #tpu.memory_space<vmem>>, vector<1x128xf32>
    %cst_59 = arith.constant dense<0.000000e+00> : vector<128xf32>
    %73 = vector.multi_reduction <add>, %70, %cst_59 [0] : vector<32x128xf32> to vector<128xf32>
    %74 = vector.shape_cast %73 : vector<128xf32> to vector<1x128xf32>
    %cst_60 = arith.constant dense<0.000000e+00> : vector<1x128xf32>
    %75 = tpu.matmul %74, %0, %cst_60 {dimension_numbers = #tpu.dot_dimension_numbers<[1], [0], [0], [1], [0, 0, 1, 1], [], []>, precision = #tpu.contract_precision<fp32>} : vector<1x128xf32>, vector<128x128xf32>, vector<1x128xf32> -> vector<1x128xf32>
    %cst_61 = arith.constant 0.001953125 : f32
    %76 = vector.broadcast %cst_61 : f32 to vector<1x128xf32>
    %77 = arith.mulf %75, %76 : vector<1x128xf32>
    %78 = vector.broadcast %77 : vector<1x128xf32> to vector<32x128xf32>
    %79 = arith.subf %70, %78 : vector<32x128xf32>
    %80 = arith.mulf %79, %79 : vector<32x128xf32>
    %cst_62 = arith.constant dense<0.000000e+00> : vector<128xf32>
    %81 = vector.multi_reduction <add>, %80, %cst_62 [0] : vector<32x128xf32> to vector<128xf32>
    %82 = vector.shape_cast %81 : vector<128xf32> to vector<1x128xf32>
    %cst_63 = arith.constant dense<0.000000e+00> : vector<1x128xf32>
    %83 = tpu.matmul %82, %0, %cst_63 {dimension_numbers = #tpu.dot_dimension_numbers<[1], [0], [0], [1], [0, 0, 1, 1], [], []>, precision = #tpu.contract_precision<fp32>} : vector<1x128xf32>, vector<128x128xf32>, vector<1x128xf32> -> vector<1x128xf32>
    %cst_64 = arith.constant 0.001953125 : f32
    %84 = vector.broadcast %cst_64 : f32 to vector<1x128xf32>
    %85 = arith.mulf %83, %84 : vector<1x128xf32>
    %cst_65 = arith.constant 9.99999974E-6 : f32
    %86 = vector.broadcast %cst_65 : f32 to vector<1x128xf32>
    %87 = arith.addf %85, %86 : vector<1x128xf32>
    %88 = math.rsqrt %87 : vector<1x128xf32>
    %89 = arith.mulf %71, %88 : vector<1x128xf32>
    %90 = vector.broadcast %89 : vector<1x128xf32> to vector<32x128xf32>
    %91 = arith.mulf %79, %90 : vector<32x128xf32>
    %92 = vector.broadcast %72 : vector<1x128xf32> to vector<32x128xf32>
    %93 = arith.addf %91, %92 : vector<32x128xf32>
    %94 = vector.shape_cast %93 : vector<32x128xf32> to vector<2x16x128xf32>
    %95 = arith.addf %94, %1 : vector<2x16x128xf32>
    %cst_66 = arith.constant 0.000000e+00 : f32
    %96 = vector.broadcast %cst_66 : f32 to vector<2x16x128xf32>
    %97 = arith.maximumf %95, %96 : vector<2x16x128xf32>
    %c0_67 = arith.constant 0 : index
    %c0_68 = arith.constant 0 : index
    %c0_69 = arith.constant 0 : index
    %98 = vector.load %arg8[%c0_67, %c0_68, %c0_69] : memref<2x16x128xf32, #tpu.memory_space<vmem>>, vector<2x16x128xf32>
    tpu.vector_store %arg8[%c0_67, %c0_68, %c0_69], %97 {strides = array<i32>} : memref<2x16x128xf32, #tpu.memory_space<vmem>>, vector<2x16x128xf32>,
    return
  }
}

</mosaic_0001>

<llo_original>
// kernel: tpu_custom_call.1
$region0: #{tpu_custom_call.1}
  #allocation0 [shape = 'u32[]', space=smem, size = 0x4, offset = 0x4, fixed_abs, tag = 'smem constant byte address 0x4 - core index']
  #allocation1 [shape = 'u32[144,128]{1,0:T(1,128)}', space=vmem, size = 0x12000, scoped, tag = 'internal scratch']
  #allocation2 [shape = 'bf16[2,20,128]{2,1,0:T(8,128)(2,1)}', space=vmem, size = 0x3000, scoped, tag = 'scratch operand']
  %s0 = inlined_call_operand.hbm [shape: f32[2,16,128], index: 0, kind: input, shape index: {}]
  %s1 = inlined_call_operand.hbm [shape: bf16[3,128,128], index: 1, kind: input, shape index: {}]
  %s2 = inlined_call_operand.hbm [shape: bf16[3,128,128], index: 2, kind: input, shape index: {}]
  %s3 = inlined_call_operand.vmem [shape: f32[1,128], index: 3, kind: input, shape index: {}]
  %s4 = inlined_call_operand.vmem [shape: f32[1,128], index: 4, kind: input, shape index: {}]
  %s5 = inlined_call_operand.vmem [shape: f32[1,128], index: 5, kind: input, shape index: {}]
  %s6 = inlined_call_operand.vmem [shape: f32[1,128], index: 6, kind: input, shape index: {}]
  %s7 = inlined_call_operand.hbm [shape: f32[128,128], index: 7, kind: input, shape index: {}]
  %s8 = inlined_call_operand.hbm [shape: f32[2,16,128], index: 8, kind: output, shape index: {}]
  %s9 = sld [smem:[#allocation0]]
  $region58: #{tpu_custom_call.1} parent=0
    _
  %s11 = ssub.s32 1, %s9
  %s12 = scalar_select 0, %s11, %s9
  $region1: #{tpu_custom_call.1} parent=0
    #allocation3 [shape = 'u8[16384]{0}', space=vmem, size = 0x4000, scoped, tag = 'input window, operand 0, single buffered']
    #allocation4 [shape = 's32[1]{0}', space=sflag, size = 0x4, scoped, tag = 'scoped memory for tpu_custom_call.1']
    #allocation5 [shape = 's32[1]{0}', space=sflag, size = 0x4, scoped, tag = 'scoped memory for tpu_custom_call.1']
    #allocation6 [shape = 'u8[98304]{0}', space=vmem, size = 0x18000, scoped, tag = 'input window, operand 1, single buffered']
    #allocation7 [shape = 's32[1]{0}', space=sflag, size = 0x4, scoped, tag = 'scoped memory for tpu_custom_call.1']
    #allocation8 [shape = 'u8[98304]{0}', space=vmem, size = 0x18000, scoped, tag = 'input window, operand 2, single buffered']
    #allocation9 [shape = 'u8[65536]{0}', space=vmem, size = 0x10000, scoped, tag = 'input window, operand 7, single buffered']
    #allocation10 [shape = 's32[1]{0}', space=sflag, size = 0x4, scoped, tag = 'scoped memory for tpu_custom_call.1']
    #allocation11 [shape = 'u8[16384]{0}', space=vmem, size = 0x4000, scoped, tag = 'output window, operand 0, single buffered']
    %13 = vsyncpa [#allocation4], 0
    %14 = vsyncpa [#allocation7], 0
    %15 = vsyncpa [#allocation10], 0
    %16 = vsyncpa [#allocation5], 0
    // Predicated region
    $region2: #{tpu_custom_call.1} parent=1 // pred_check
      _
    $region3: #{tpu_custom_call.1} parent=1 // pred_check_branch
      %18 = sbr.rel (0) target = $region5
    $region4: #{tpu_custom_call.1} parent=1 // pred_region
      %s20 = ssub.s32 512, 512
      %21 = vsyncadd [#allocation4], %s20
      %s22 = sshll.u32 [#allocation3], 4
      %s23 = int_to_ptr.vmem [resolvable:$true] %s22
      %28 = dma.hbm_to_vmem [thread:$0]  %s0, 512, %s23, [#allocation4], 128, 128, 8
    $region5: #{tpu_custom_call.1} parent=1 // pred_fallthru
      _
    // Predicated region
    $region6: #{tpu_custom_call.1} parent=1 // pred_check
      _
    $region7: #{tpu_custom_call.1} parent=1 // pred_check_branch
      %30 = sbr.rel (0) target = $region9
    $region8: #{tpu_custom_call.1} parent=1 // pred_region
      %s32 = ssub.s32 3072, 3072
      %33 = vsyncadd [#allocation7], %s32
      %s34 = sshll.u32 [#allocation6], 4
      %s35 = int_to_ptr.vmem [resolvable:$true] %s34
      %40 = dma.hbm_to_vmem [thread:$0]  %s1, 3072, %s35, [#allocation7], 64, 64, 4
    $region9: #{tpu_custom_call.1} parent=1 // pred_fallthru
      _
    // Predicated region
    $region10: #{tpu_custom_call.1} parent=1 // pred_check
      _
    $region11: #{tpu_custom_call.1} parent=1 // pred_check_branch
      %42 = sbr.rel (0) target = $region13
    $region12: #{tpu_custom_call.1} parent=1 // pred_region
      %s44 = ssub.s32 3072, 3072
      %45 = vsyncadd [#allocation7], %s44
      %s46 = sshll.u32 [#allocation8], 4
      %s47 = int_to_ptr.vmem [resolvable:$true] %s46
      %52 = dma.hbm_to_vmem [thread:$0]  %s2, 3072, %s47, [#allocation7], 64, 64, 4
    $region13: #{tpu_custom_call.1} parent=1 // pred_fallthru
      _
    // Predicated region
    $region14: #{tpu_custom_call.1} parent=1 // pred_check
      _
    $region15: #{tpu_custom_call.1} parent=1 // pred_check_branch
      %54 = sbr.rel (0) target = $region17
    $region16: #{tpu_custom_call.1} parent=1 // pred_region
      _
    $region17: #{tpu_custom_call.1} parent=1 // pred_fallthru
      _
    // Predicated region
    $region18: #{tpu_custom_call.1} parent=1 // pred_check
      _
    $region19: #{tpu_custom_call.1} parent=1 // pred_check_branch
      %56 = sbr.rel (0) target = $region21
    $region20: #{tpu_custom_call.1} parent=1 // pred_region
      _
    $region21: #{tpu_custom_call.1} parent=1 // pred_fallthru
      _
    // Predicated region
    $region22: #{tpu_custom_call.1} parent=1 // pred_check
      _
    $region23: #{tpu_custom_call.1} parent=1 // pred_check_branch
      %58 = sbr.rel (0) target = $region25
    $region24: #{tpu_custom_call.1} parent=1 // pred_region
      _
    $region25: #{tpu_custom_call.1} parent=1 // pred_fallthru
      _
    // Predicated region
    $region26: #{tpu_custom_call.1} parent=1 // pred_check
      _
    $region27: #{tpu_custom_call.1} parent=1 // pred_check_branch
      %60 = sbr.rel (0) target = $region29
    $region28: #{tpu_custom_call.1} parent=1 // pred_region
      _
    $region29: #{tpu_custom_call.1} parent=1 // pred_fallthru
      _
    // Predicated region
    $region30: #{tpu_custom_call.1} parent=1 // pred_check
      _
    $region31: #{tpu_custom_call.1} parent=1 // pred_check_branch
      %62 = sbr.rel (0) target = $region33
    $region32: #{tpu_custom_call.1} parent=1 // pred_region
      %s64 = ssub.s32 2048, 2048
      %65 = vsyncadd [#allocation10], %s64
      %s66 = sshll.u32 [#allocation9], 4
      %s67 = int_to_ptr.vmem [resolvable:$true] %s66
      %72 = dma.hbm_to_vmem [thread:$0]  %s7, 2048, %s67, [#allocation10], 128, 128, 8
    $region33: #{tpu_custom_call.1} parent=1 // pred_fallthru
      _
    // Predicated region
    $region34: #{tpu_custom_call.1} parent=1 // pred_check
      _
    $region35: #{tpu_custom_call.1} parent=1 // pred_check_branch
      %74 = sbr.rel (0) target = $region37
    $region36: #{tpu_custom_call.1} parent=1 // pred_region
      %75 = dma.done [#allocation4], 512
    $region37: #{tpu_custom_call.1} parent=1 // pred_fallthru
      _
    // Predicated region
    $region38: #{tpu_custom_call.1} parent=1 // pred_check
      _
    $region39: #{tpu_custom_call.1} parent=1 // pred_check_branch
      %77 = sbr.rel (0) target = $region41
    $region40: #{tpu_custom_call.1} parent=1 // pred_region
      %78 = dma.done [#allocation7], 3072
    $region41: #{tpu_custom_call.1} parent=1 // pred_fallthru
      _
    // Predicated region
    $region42: #{tpu_custom_call.1} parent=1 // pred_check
      _
    $region43: #{tpu_custom_call.1} parent=1 // pred_check_branch
      %80 = sbr.rel (0) target = $region45
    $region44: #{tpu_custom_call.1} parent=1 // pred_region
      %81 = dma.done [#allocation7], 3072
    $region45: #{tpu_custom_call.1} parent=1 // pred_fallthru
      _
    // Predicated region
    $region46: #{tpu_custom_call.1} parent=1 // pred_check
      _
    $region47: #{tpu_custom_call.1} parent=1 // pred_check_branch
      %83 = sbr.rel (0) target = $region49
    $region48: #{tpu_custom_call.1} parent=1 // pred_region
      %84 = dma.done [#allocation10], 2048
    $region49: #{tpu_custom_call.1} parent=1 // pred_fallthru
      _
    %v86 = vld [vmem:[#allocation9] sm:$0xff]
    %v87 = vld [vmem:[#allocation9 + $0x8] sm:$0xff]
    %v88 = vld [vmem:[#allocation9 + $0x10] sm:$0xff]
    %v89 = vld [vmem:[#allocation9 + $0x18] sm:$0xff]
    %v90 = vld [vmem:[#allocation9 + $0x20] sm:$0xff]
    %v91 = vld [vmem:[#allocation9 + $0x28] sm:$0xff]
    %v92 = vld [vmem:[#allocation9 + $0x30] sm:$0xff]
    %v93 = vld [vmem:[#allocation9 + $0x38] sm:$0xff]
    %v94 = vld [vmem:[#allocation9 + $0x40] sm:$0xff]
    %v95 = vld [vmem:[#allocation9 + $0x48] sm:$0xff]
    %v96 = vld [vmem:[#allocation9 + $0x50] sm:$0xff]
    %v97 = vld [vmem:[#allocation9 + $0x58] sm:$0xff]
    %v98 = vld [vmem:[#allocation9 + $0x60] sm:$0xff]
    %v99 = vld [vmem:[#allocation9 + $0x68] sm:$0xff]
    %v100 = vld [vmem:[#allocation9 + $0x70] sm:$0xff]
    %v101 = vld [vmem:[#allocation9 + $0x78] sm:$0xff]
    %v102 = vld [vmem:[#allocation3] sm:$0xff]
    %v103 = vld [vmem:[#allocation3 + $0x8] sm:$0xff]
    %v104 = vld [vmem:[#allocation3 + $0x10] sm:$0xff]
    %v105 = vld [vmem:[#allocation3 + $0x18] sm:$0xff]
    %106 = vst [vmem:[#allocation2] sm:$0x1] 0
    %107 = vst [vmem:[#allocation2 + $0xc] sm:$0x1] 0
    %108 = vst [vmem:[#allocation2 + $0x8] sm:$0x2] 0
    %109 = vst [vmem:[#allocation2 + $0x14] sm:$0x2] 0
    %v110 = vpack.c.bf16 %v103, %v102
    %v111 = vpack.c.bf16 %v105, %v104
    %v114 = vunpack.c.l.b16 %v110
    %v115 = vunpack.c.h.b16 %v110
    %v116 = vunpack.c.l.b16 %v111
    %v117 = vunpack.c.h.b16 %v111
    %v118 = vpack.c.b16 %v114, %v114
    %v119 = vpack.c.b16 %v115, %v115
    %v120 = vpack.c.b16 %v116, %v116
    %v121 = vpack.c.b16 %v117, %v117
    %vm122 = vcmask 1040384
    %vm123 = vcmask 1044484
    %vm124 = vmor %vm122, %vm123
    %v125 = vrot.slane %v118, 7
    %v126 = vrot.slane %v125, 4
    %v127 = vrot.slane %v119, 7
    %v128 = vsel %vm124, %v126, %v127
    %v129 = vrot.slane %v127, 4
    %v130 = vrot.slane %v120, 7
    %v131 = vrot.slane %v130, 4
    %v132 = vrot.slane %v121, 7
    %v133 = vsel %vm124, %v131, %v132
    %v134 = vrot.slane %v132, 4
    %141 = vst [vmem:[#allocation2] sm:$0xe] %v125
    %142 = vst [vmem:[#allocation2 + $0x4] sm:$0xf] %v128
    %143 = vst [vmem:[#allocation2 + $0x8] sm:$0x1] %v129
    %144 = vst [vmem:[#allocation2 + $0xc] sm:$0xe] %v130
    %145 = vst [vmem:[#allocation2 + $0x10] sm:$0xf] %v133
    %146 = vst [vmem:[#allocation2 + $0x14] sm:$0x1] %v134
    %v147 = vld [vmem:[#allocation2] sm:$0xf]
    %v148 = vld [vmem:[#allocation2 + $0x4] sm:$0xf]
    %v149 = vld [vmem:[#allocation2 + $0x8] sm:$0x3]
    %v150 = vld [vmem:[#allocation2 + $0xc] sm:$0xf]
    %v151 = vld [vmem:[#allocation2 + $0x10] sm:$0xf]
    %v152 = vld [vmem:[#allocation2 + $0x14] sm:$0x3]
    %vm153 = vsmask.f32 3328
    %vm154 = vsmask.f32 7440
    %vm155 = vmor %vm153, %vm154
    %v157 = vshrl.u32 %v147, 16
    %v159 = vrot.slane %v157, 4
    %v160 = vshll.u32 %v147, 16
    %v162 = vrot.slane %v160, 5
    %v163 = vor.u32 %v159, %v162
    %v164 = vrot.slane %v163, 4
    %v166 = vshll.u32 %v148, 16
    %v168 = vrot.slane %v166, 5
    %v169 = vsel %vm155, %v164, %v168
    %v170 = vshrl.u32 %v148, 16
    %v172 = vrot.slane %v170, 4
    %v173 = vor.u32 %v172, %v168
    %v174 = vrot.slane %v173, 4
    %v176 = vshll.u32 %v149, 16
    %v178 = vrot.slane %v176, 5
    %v179 = vsel %vm155, %v174, %v178
    %v181 = vshrl.u32 %v150, 16
    %v183 = vrot.slane %v181, 4
    %v184 = vshll.u32 %v150, 16
    %v186 = vrot.slane %v184, 5
    %v187 = vor.u32 %v183, %v186
    %v188 = vrot.slane %v187, 4
    %v190 = vshll.u32 %v151, 16
    %v192 = vrot.slane %v190, 5
    %v193 = vsel %vm155, %v188, %v192
    %v194 = vshrl.u32 %v151, 16
    %v196 = vrot.slane %v194, 4
    %v197 = vor.u32 %v196, %v192
    %v198 = vrot.slane %v197, 4
    %v200 = vshll.u32 %v152, 16
    %v202 = vrot.slane %v200, 5
    %v203 = vsel %vm155, %v198, %v202
    %v204 = vld [vmem:[#allocation6] sm:$0xf]
    %v205 = vld [vmem:[#allocation6 + $0x4] sm:$0xf]
    %v206 = vld [vmem:[#allocation6 + $0x8] sm:$0xf]
    %v207 = vld [vmem:[#allocation6 + $0xc] sm:$0xf]
    %v208 = vld [vmem:[#allocation6 + $0x10] sm:$0xf]
    %v209 = vld [vmem:[#allocation6 + $0x14] sm:$0xf]
    %v210 = vld [vmem:[#allocation6 + $0x18] sm:$0xf]
    %v211 = vld [vmem:[#allocation6 + $0x1c] sm:$0xf]
    %v212 = vld [vmem:[#allocation6 + $0x20] sm:$0xf]
    %v213 = vld [vmem:[#allocation6 + $0x24] sm:$0xf]
    %v214 = vld [vmem:[#allocation6 + $0x28] sm:$0xf]
    %v215 = vld [vmem:[#allocation6 + $0x2c] sm:$0xf]
    %v216 = vld [vmem:[#allocation6 + $0x30] sm:$0xf]
    %v217 = vld [vmem:[#allocation6 + $0x34] sm:$0xf]
    %v218 = vld [vmem:[#allocation6 + $0x38] sm:$0xf]
    %v219 = vld [vmem:[#allocation6 + $0x3c] sm:$0xf]
    %vm226 = vcmask 1042432
    %vm227 = vcmask 1046532
    %vm228 = vmor %vm226, %vm227
    %v229 = vrot.slane %v147, 5
    %v230 = vrot.slane %v229, 4
    %v231 = vrot.slane %v148, 5
    %v232 = vsel %vm228, %v230, %v231
    %v233 = vrot.slane %v231, 4
    %v234 = vrot.slane %v149, 5
    %v235 = vsel %vm228, %v233, %v234
    %v236 = vrot.slane %v150, 5
    %v237 = vrot.slane %v236, 4
    %v238 = vrot.slane %v151, 5
    %v239 = vsel %vm228, %v237, %v238
    %v240 = vrot.slane %v238, 4
    %v241 = vrot.slane %v152, 5
    %v242 = vsel %vm228, %v240, %v241
    %s243 = scalar_lea.vmem [#allocation6], 64
    %v244 = vld [vmem:[%s243] sm:$0xf]
    %v245 = vld [vmem:[%s243 + $0x4] sm:$0xf]
    %v246 = vld [vmem:[%s243 + $0x8] sm:$0xf]
    %v247 = vld [vmem:[%s243 + $0xc] sm:$0xf]
    %v248 = vld [vmem:[%s243 + $0x10] sm:$0xf]
    %v249 = vld [vmem:[%s243 + $0x14] sm:$0xf]
    %v250 = vld [vmem:[%s243 + $0x18] sm:$0xf]
    %v251 = vld [vmem:[%s243 + $0x1c] sm:$0xf]
    %v252 = vld [vmem:[%s243 + $0x20] sm:$0xf]
    %v253 = vld [vmem:[%s243 + $0x24] sm:$0xf]
    %v254 = vld [vmem:[%s243 + $0x28] sm:$0xf]
    %v255 = vld [vmem:[%s243 + $0x2c] sm:$0xf]
    %v256 = vld [vmem:[%s243 + $0x30] sm:$0xf]
    %v257 = vld [vmem:[%s243 + $0x34] sm:$0xf]
    %v258 = vld [vmem:[%s243 + $0x38] sm:$0xf]
    %v259 = vld [vmem:[%s243 + $0x3c] sm:$0xf]
    %v260 = vunpack.c.l.b16 %v232
    %v261 = vunpack.c.l.b16 %v235
    %v262 = vunpack.c.l.b16 %v239
    %v263 = vunpack.c.l.b16 %v242
    %v264 = vpack.c.b16 %v261, %v260
    %v265 = vpack.c.b16 %v263, %v262
    %v284 = vunpack.c.l.b16 %v244
    %v285 = vunpack.c.l.b16 %v245
    %v286 = vunpack.c.l.b16 %v246
    %v287 = vunpack.c.l.b16 %v247
    %v288 = vunpack.c.l.b16 %v248
    %v289 = vunpack.c.l.b16 %v249
    %v290 = vunpack.c.l.b16 %v250
    %v291 = vunpack.c.l.b16 %v251
    %v292 = vunpack.c.l.b16 %v252
    %v293 = vunpack.c.l.b16 %v253
    %v294 = vunpack.c.l.b16 %v254
    %v295 = vunpack.c.l.b16 %v255
    %v296 = vunpack.c.l.b16 %v256
    %v297 = vunpack.c.l.b16 %v257
    %v298 = vunpack.c.l.b16 %v258
    %v299 = vunpack.c.l.b16 %v259
    %v300 = vpack.c.b16 %v285, %v284
    %v301 = vpack.c.b16 %v287, %v286
    %v302 = vpack.c.b16 %v289, %v288
    %v303 = vpack.c.b16 %v291, %v290
    %v304 = vpack.c.b16 %v293, %v292
    %v305 = vpack.c.b16 %v295, %v294
    %v306 = vpack.c.b16 %v297, %v296
    %v307 = vpack.c.b16 %v299, %v298
    %316 = vmatprep.subr.bf16.mxu0 0
    %317 = vmatpush1.bf16.msra.mxu0 %v300
    %318 = vmatprep.subr.bf16.mxu0 0
    %319 = vmatpush1.bf16.msra.mxu0 %v301
    %320 = vmatprep.subr.bf16.mxu0 0
    %321 = vmatpush1.bf16.msra.mxu0 %v302
    %322 = vmatprep.subr.bf16.mxu0 0
    %323 = vmatpush1.bf16.msra.mxu0 %v303
    %324 = vmatprep.subr.bf16.mxu0 0
    %325 = vmatpush1.bf16.msra.mxu0 %v304
    %326 = vmatprep.subr.bf16.mxu0 0
    %327 = vmatpush1.bf16.msra.mxu0 %v305
    %328 = vmatprep.subr.bf16.mxu0 0
    %329 = vmatpush1.bf16.msra.mxu0 %v306
    %330 = vmatprep.subr.bf16.mxu0 0
    %331 = vmatpush1.bf16.msra.mxu0 %v307
    %332 = vmatprep.subr.bf16.mxu0 0
    %333 = vmatpush1.bf16.msra.mxu0 0
    %334 = vmatprep.subr.bf16.mxu0 0
    %335 = vmatpush1.bf16.msra.mxu0 0
    %336 = vmatprep.subr.bf16.mxu0 0
    %337 = vmatpush1.bf16.msra.mxu0 0
    %338 = vmatprep.subr.bf16.mxu0 0
    %339 = vmatpush1.bf16.msra.mxu0 0
    %340 = vmatprep.subr.bf16.mxu0 0
    %341 = vmatpush1.bf16.msra.mxu0 0
    %342 = vmatprep.subr.bf16.mxu0 0
    %343 = vmatpush1.bf16.msra.mxu0 0
    %344 = vmatprep.subr.bf16.mxu0 0
    %345 = vmatpush1.bf16.msra.mxu0 0
    %346 = vmatprep.subr.bf16.mxu0 0
    %347 = vmatpush1.bf16.msra.mxu0 0
    %348 = vmatprep.mubr.bf16.mxu0 0
    %349 = vmatmul.mubr.bf16.gmra.mrb[0].mxu0 %v264
    %v350 = vpop.f32.mrb[0].mxu0
    %v351 = vadd.f32 0.0, %v350
    %v352 = vpop.f32.mrb[0].mxu0
    %v353 = vpop.f32.mrb[0].mxu0
    %v354 = vadd.f32 0.0, %v353
    %v355 = vpop.f32.mrb[0].mxu0
    %356 = vmatprep.mubr.bf16.mxu0 0
    %357 = vmatmul.mubr.bf16.gmra.mrb[0].mxu0 %v265
    %v358 = vpop.f32.mrb[0].mxu0
    %v359 = vadd.f32 0.0, %v358
    %v360 = vpop.f32.mrb[0].mxu0
    %v361 = vpop.f32.mrb[0].mxu0
    %v362 = vadd.f32 0.0, %v361
    %v363 = vpop.f32.mrb[0].mxu0
    %364 = vdwg.mxu0
    %v365 = vunpack.c.l.b16 %v169
    %v366 = vunpack.c.l.b16 %v179
    %v367 = vunpack.c.l.b16 %v193
    %v368 = vunpack.c.l.b16 %v203
    %v369 = vpack.c.b16 %v366, %v365
    %v370 = vpack.c.b16 %v368, %v367
    %v389 = vunpack.c.l.b16 %v204
    %v390 = vunpack.c.l.b16 %v205
    %v391 = vunpack.c.l.b16 %v206
    %v392 = vunpack.c.l.b16 %v207
    %v393 = vunpack.c.l.b16 %v208
    %v394 = vunpack.c.l.b16 %v209
    %v395 = vunpack.c.l.b16 %v210
    %v396 = vunpack.c.l.b16 %v211
    %v397 = vunpack.c.l.b16 %v212
    %v398 = vunpack.c.l.b16 %v213
    %v399 = vunpack.c.l.b16 %v214
    %v400 = vunpack.c.l.b16 %v215
    %v401 = vunpack.c.l.b16 %v216
    %v402 = vunpack.c.l.b16 %v217
    %v403 = vunpack.c.l.b16 %v218
    %v404 = vunpack.c.l.b16 %v219
    %v405 = vpack.c.b16 %v390, %v389
    %v406 = vpack.c.b16 %v392, %v391
    %v407 = vpack.c.b16 %v394, %v393
    %v408 = vpack.c.b16 %v396, %v395
    %v409 = vpack.c.b16 %v398, %v397
    %v410 = vpack.c.b16 %v400, %v399
    %v411 = vpack.c.b16 %v402, %v401
    %v412 = vpack.c.b16 %v404, %v403
    %421 = vmatprep.subr.bf16.mxu0 0
    %422 = vmatpush1.bf16.msra.mxu0 %v405
    %423 = vmatprep.subr.bf16.mxu0 0
    %424 = vmatpush1.bf16.msra.mxu0 %v406
    %425 = vmatprep.subr.bf16.mxu0 0
    %426 = vmatpush1.bf16.msra.mxu0 %v407
    %427 = vmatprep.subr.bf16.mxu0 0
    %428 = vmatpush1.bf16.msra.mxu0 %v408
    %429 = vmatprep.subr.bf16.mxu0 0
    %430 = vmatpush1.bf16.msra.mxu0 %v409
    %431 = vmatprep.subr.bf16.mxu0 0
    %432 = vmatpush1.bf16.msra.mxu0 %v410
    %433 = vmatprep.subr.bf16.mxu0 0
    %434 = vmatpush1.bf16.msra.mxu0 %v411
    %435 = vmatprep.subr.bf16.mxu0 0
    %436 = vmatpush1.bf16.msra.mxu0 %v412
    %437 = vmatprep.subr.bf16.mxu0 0
    %438 = vmatpush1.bf16.msra.mxu0 0
    %439 = vmatprep.subr.bf16.mxu0 0
    %440 = vmatpush1.bf16.msra.mxu0 0
    %441 = vmatprep.subr.bf16.mxu0 0
    %442 = vmatpush1.bf16.msra.mxu0 0
    %443 = vmatprep.subr.bf16.mxu0 0
    %444 = vmatpush1.bf16.msra.mxu0 0
    %445 = vmatprep.subr.bf16.mxu0 0
    %446 = vmatpush1.bf16.msra.mxu0 0
    %447 = vmatprep.subr.bf16.mxu0 0
    %448 = vmatpush1.bf16.msra.mxu0 0
    %449 = vmatprep.subr.bf16.mxu0 0
    %450 = vmatpush1.bf16.msra.mxu0 0
    %451 = vmatprep.subr.bf16.mxu0 0
    %452 = vmatpush1.bf16.msra.mxu0 0
    %453 = vmatprep.mubr.bf16.mxu0 0
    %454 = vmatmul.mubr.bf16.gmra.mrb[0].mxu0 %v369
    %v455 = vpop.f32.mrb[0].mxu0
    %v456 = vadd.f32 %v351, %v455
    %v457 = vpop.f32.mrb[0].mxu0
    %v458 = vpop.f32.mrb[0].mxu0
    %v459 = vadd.f32 %v354, %v458
    %v460 = vpop.f32.mrb[0].mxu0
    %461 = vmatprep.mubr.bf16.mxu0 0
    %462 = vmatmul.mubr.bf16.gmra.mrb[0].mxu0 %v370
    %v463 = vpop.f32.mrb[0].mxu0
    %v464 = vadd.f32 %v359, %v463
    %v465 = vpop.f32.mrb[0].mxu0
    %v466 = vpop.f32.mrb[0].mxu0
    %v467 = vadd.f32 %v362, %v466
    %v468 = vpop.f32.mrb[0].mxu0
    %469 = vdwg.mxu0
    %vm470 = vsmask.f32 2304
    %vm471 = vsmask.f32 6416
    %vm472 = vmor %vm470, %vm471
    %v473 = vrot.slane %v157, 5
    %v474 = vrot.slane %v160, 6
    %v475 = vor.u32 %v473, %v474
    %v476 = vrot.slane %v475, 4
    %v477 = vrot.slane %v170, 5
    %v478 = vrot.slane %v166, 6
    %v479 = vor.u32 %v477, %v478
    %v480 = vsel %vm472, %v476, %v479
    %v481 = vrot.slane %v479, 4
    %v482 = vshrl.u32 %v149, 16
    %v484 = vrot.slane %v482, 5
    %v485 = vrot.slane %v176, 6
    %v486 = vor.u32 %v484, %v485
    %v487 = vsel %vm472, %v481, %v486
    %v488 = vrot.slane %v181, 5
    %v489 = vrot.slane %v184, 6
    %v490 = vor.u32 %v488, %v489
    %v491 = vrot.slane %v490, 4
    %v492 = vrot.slane %v194, 5
    %v493 = vrot.slane %v190, 6
    %v494 = vor.u32 %v492, %v493
    %v495 = vsel %vm472, %v491, %v494
    %v496 = vrot.slane %v494, 4
    %v497 = vshrl.u32 %v152, 16
    %v499 = vrot.slane %v497, 5
    %v500 = vrot.slane %v200, 6
    %v501 = vor.u32 %v499, %v500
    %v502 = vsel %vm472, %v496, %v501
    %s503 = scalar_lea.vmem [#allocation6], 128
    %v504 = vld [vmem:[%s503] sm:$0xf]
    %v505 = vld [vmem:[%s503 + $0x4] sm:$0xf]
    %v506 = vld [vmem:[%s503 + $0x8] sm:$0xf]
    %v507 = vld [vmem:[%s503 + $0xc] sm:$0xf]
    %v508 = vld [vmem:[%s503 + $0x10] sm:$0xf]
    %v509 = vld [vmem:[%s503 + $0x14] sm:$0xf]
    %v510 = vld [vmem:[%s503 + $0x18] sm:$0xf]
    %v511 = vld [vmem:[%s503 + $0x1c] sm:$0xf]
    %v512 = vld [vmem:[%s503 + $0x20] sm:$0xf]
    %v513 = vld [vmem:[%s503 + $0x24] sm:$0xf]
    %v514 = vld [vmem:[%s503 + $0x28] sm:$0xf]
    %v515 = vld [vmem:[%s503 + $0x2c] sm:$0xf]
    %v516 = vld [vmem:[%s503 + $0x30] sm:$0xf]
    %v517 = vld [vmem:[%s503 + $0x34] sm:$0xf]
    %v518 = vld [vmem:[%s503 + $0x38] sm:$0xf]
    %v519 = vld [vmem:[%s503 + $0x3c] sm:$0xf]
    %v520 = vunpack.c.l.b16 %v480
    %v521 = vunpack.c.l.b16 %v487
    %v522 = vunpack.c.l.b16 %v495
    %v523 = vunpack.c.l.b16 %v502
    %v524 = vpack.c.b16 %v521, %v520
    %v525 = vpack.c.b16 %v523, %v522
    %v544 = vunpack.c.l.b16 %v504
    %v545 = vunpack.c.l.b16 %v505
    %v546 = vunpack.c.l.b16 %v506
    %v547 = vunpack.c.l.b16 %v507
    %v548 = vunpack.c.l.b16 %v508
    %v549 = vunpack.c.l.b16 %v509
    %v550 = vunpack.c.l.b16 %v510
    %v551 = vunpack.c.l.b16 %v511
    %v552 = vunpack.c.l.b16 %v512
    %v553 = vunpack.c.l.b16 %v513
    %v554 = vunpack.c.l.b16 %v514
    %v555 = vunpack.c.l.b16 %v515
    %v556 = vunpack.c.l.b16 %v516
    %v557 = vunpack.c.l.b16 %v517
    %v558 = vunpack.c.l.b16 %v518
    %v559 = vunpack.c.l.b16 %v519
    %v560 = vpack.c.b16 %v545, %v544
    %v561 = vpack.c.b16 %v547, %v546
    %v562 = vpack.c.b16 %v549, %v548
    %v563 = vpack.c.b16 %v551, %v550
    %v564 = vpack.c.b16 %v553, %v552
    %v565 = vpack.c.b16 %v555, %v554
    %v566 = vpack.c.b16 %v557, %v556
    %v567 = vpack.c.b16 %v559, %v558
    %576 = vmatprep.subr.bf16.mxu0 0
    %577 = vmatpush1.bf16.msra.mxu0 %v560
    %578 = vmatprep.subr.bf16.mxu0 0
    %579 = vmatpush1.bf16.msra.mxu0 %v561
    %580 = vmatprep.subr.bf16.mxu0 0
    %581 = vmatpush1.bf16.msra.mxu0 %v562
    %582 = vmatprep.subr.bf16.mxu0 0
    %583 = vmatpush1.bf16.msra.mxu0 %v563
    %584 = vmatprep.subr.bf16.mxu0 0
    %585 = vmatpush1.bf16.msra.mxu0 %v564
    %586 = vmatprep.subr.bf16.mxu0 0
    %587 = vmatpush1.bf16.msra.mxu0 %v565
    %588 = vmatprep.subr.bf16.mxu0 0
    %589 = vmatpush1.bf16.msra.mxu0 %v566
    %590 = vmatprep.subr.bf16.mxu0 0
    %591 = vmatpush1.bf16.msra.mxu0 %v567
    %592 = vmatprep.subr.bf16.mxu0 0
    %593 = vmatpush1.bf16.msra.mxu0 0
    %594 = vmatprep.subr.bf16.mxu0 0
    %595 = vmatpush1.bf16.msra.mxu0 0
    %596 = vmatprep.subr.bf16.mxu0 0
    %597 = vmatpush1.bf16.msra.mxu0 0
    %598 = vmatprep.subr.bf16.mxu0 0
    %599 = vmatpush1.bf16.msra.mxu0 0
    %600 = vmatprep.subr.bf16.mxu0 0
    %601 = vmatpush1.bf16.msra.mxu0 0
    %602 = vmatprep.subr.bf16.mxu0 0
    %603 = vmatpush1.bf16.msra.mxu0 0
    %604 = vmatprep.subr.bf16.mxu0 0
    %605 = vmatpush1.bf16.msra.mxu0 0
    %606 = vmatprep.subr.bf16.mxu0 0
    %607 = vmatpush1.bf16.msra.mxu0 0
    %608 = vmatprep.mubr.bf16.mxu0 0
    %609 = vmatmul.mubr.bf16.gmra.mrb[0].mxu0 %v524
    %v610 = vpop.f32.mrb[0].mxu0
    %v611 = vadd.f32 0.0, %v610
    %v612 = vpop.f32.mrb[0].mxu0
    %v613 = vpop.f32.mrb[0].mxu0
    %v614 = vadd.f32 0.0, %v613
    %v615 = vpop.f32.mrb[0].mxu0
    %616 = vmatprep.mubr.bf16.mxu0 0
    %617 = vmatmul.mubr.bf16.gmra.mrb[0].mxu0 %v525
    %v618 = vpop.f32.mrb[0].mxu0
    %v619 = vadd.f32 0.0, %v618
    %v620 = vpop.f32.mrb[0].mxu0
    %v621 = vpop.f32.mrb[0].mxu0
    %v622 = vadd.f32 0.0, %v621
    %v623 = vpop.f32.mrb[0].mxu0
    %624 = vdwg.mxu0
    %v625 = vadd.f32 %v456, %v611
    %v626 = vadd.f32 %v459, %v614
    %v627 = vadd.f32 %v464, %v619
    %v628 = vadd.f32 %v467, %v622
    %v629 = vld [vmem:[%s3] sm:$0x1]
    %v630 = vld [vmem:[%s4] sm:$0x1]
    %v631 = vadd.f32 %v625, %v626
    %v632 = vadd.f32 %v631, %v627
    %v633 = vadd.f32 %v632, %v628
    %v634 = vrot.slane %v633, 4
    %v635 = vadd.f32 %v633, %v634
    %v636 = vrot.slane %v635, 2
    %v637 = vadd.f32 %v635, %v636
    %v638 = vrot.slane %v637, 1
    %v639 = vadd.f32 %v637, %v638
    %640 = vmatprep.subr.mxu0 0.0
    %v641 = vand.u32 %v86, 4294901760
    %642 = vmatpush1.msra.mxu0 %v641
    %643 = vmatprep.subr.mxu0 0.0
    %v644 = vand.u32 %v87, 4294901760
    %645 = vmatpush1.msra.mxu0 %v644
    %646 = vmatprep.subr.mxu0 0.0
    %v647 = vand.u32 %v88, 4294901760
    %648 = vmatpush1.msra.mxu0 %v647
    %649 = vmatprep.subr.mxu0 0.0
    %v650 = vand.u32 %v89, 4294901760
    %651 = vmatpush1.msra.mxu0 %v650
    %652 = vmatprep.subr.mxu0 0.0
    %v653 = vand.u32 %v90, 4294901760
    %654 = vmatpush1.msra.mxu0 %v653
    %655 = vmatprep.subr.mxu0 0.0
    %v656 = vand.u32 %v91, 4294901760
    %657 = vmatpush1.msra.mxu0 %v656
    %658 = vmatprep.subr.mxu0 0.0
    %v659 = vand.u32 %v92, 4294901760
    %660 = vmatpush1.msra.mxu0 %v659
    %661 = vmatprep.subr.mxu0 0.0
    %v662 = vand.u32 %v93, 4294901760
    %663 = vmatpush1.msra.mxu0 %v662
    %664 = vmatprep.subr.mxu0 0.0
    %v665 = vand.u32 %v94, 4294901760
    %666 = vmatpush1.msra.mxu0 %v665
    %667 = vmatprep.subr.mxu0 0.0
    %v668 = vand.u32 %v95, 4294901760
    %669 = vmatpush1.msra.mxu0 %v668
    %670 = vmatprep.subr.mxu0 0.0
    %v671 = vand.u32 %v96, 4294901760
    %672 = vmatpush1.msra.mxu0 %v671
    %673 = vmatprep.subr.mxu0 0.0
    %v674 = vand.u32 %v97, 4294901760
    %675 = vmatpush1.msra.mxu0 %v674
    %676 = vmatprep.subr.mxu0 0.0
    %v677 = vand.u32 %v98, 4294901760
    %678 = vmatpush1.msra.mxu0 %v677
    %679 = vmatprep.subr.mxu0 0.0
    %v680 = vand.u32 %v99, 4294901760
    %681 = vmatpush1.msra.mxu0 %v680
    %682 = vmatprep.subr.mxu0 0.0
    %v683 = vand.u32 %v100, 4294901760
    %684 = vmatpush1.msra.mxu0 %v683
    %685 = vmatprep.subr.mxu0 0.0
    %v686 = vand.u32 %v101, 4294901760
    %687 = vmatpush1.msra.mxu0 %v686
    %688 = vmatprep.subr.mxu0 0.0
    %689 = vmatpush1.msra.mxu0 0.0
    %690 = vmatprep.subr.mxu0 0.0
    %691 = vmatpush1.msra.mxu0 0.0
    %692 = vmatprep.subr.mxu0 0.0
    %693 = vmatpush1.msra.mxu0 0.0
    %694 = vmatprep.subr.mxu0 0.0
    %695 = vmatpush1.msra.mxu0 0.0
    %696 = vmatprep.subr.mxu0 0.0
    %697 = vmatpush1.msra.mxu0 0.0
    %698 = vmatprep.subr.mxu0 0.0
    %699 = vmatpush1.msra.mxu0 0.0
    %700 = vmatprep.subr.mxu0 0.0
    %701 = vmatpush1.msra.mxu0 0.0
    %702 = vmatprep.subr.mxu0 0.0
    %703 = vmatpush1.msra.mxu0 0.0
    %704 = vmatprep.subr.mxu0 0.0
    %705 = vmatpush1.msra.mxu0 0.0
    %706 = vmatprep.subr.mxu0 0.0
    %707 = vmatpush1.msra.mxu0 0.0
    %708 = vmatprep.subr.mxu0 0.0
    %709 = vmatpush1.msra.mxu0 0.0
    %710 = vmatprep.subr.mxu0 0.0
    %711 = vmatpush1.msra.mxu0 0.0
    %712 = vmatprep.subr.mxu0 0.0
    %713 = vmatpush1.msra.mxu0 0.0
    %714 = vmatprep.subr.mxu0 0.0
    %715 = vmatpush1.msra.mxu0 0.0
    %716 = vmatprep.subr.mxu0 0.0
    %717 = vmatpush1.msra.mxu0 0.0
    %718 = vmatprep.subr.mxu0 0.0
    %719 = vmatpush1.msra.mxu0 0.0
    %720 = vmatprep.mubr.f32.mxu0 0.0
    %v721 = vand.u32 %v639, 4294901760
    %v722 = vsub.f32 %v639, %v721
    %v723 = vand.u32 %v722, 4294901760
    %v724 = vsub.f32 %v722, %v723
    %v725 = vand.u32 %v724, 4294901760
    %726 = vmatmul.mubr.f32.gmra.mrb[0].mxu0 %v725
    %v727 = vpop.f32.mrb[0].mxu0
    %v728 = vadd.f32 0.0, %v727
    %v729 = vpop.f32.mrb[0].mxu0
    %730 = vdwg.mxu0
    %731 = vmatprep.subr.mxu0 0.0
    %v732 = vand.u32 %v86, 4294901760
    %v733 = vsub.f32 %v86, %v732
    %v734 = vand.u32 %v733, 4294901760
    %v735 = vsub.f32 %v733, %v734
    %v736 = vand.u32 %v735, 4294901760
    %737 = vmatpush1.msra.mxu0 %v736
    %738 = vmatprep.subr.mxu0 0.0
    %v739 = vand.u32 %v87, 4294901760
    %v740 = vsub.f32 %v87, %v739
    %v741 = vand.u32 %v740, 4294901760
    %v742 = vsub.f32 %v740, %v741
    %v743 = vand.u32 %v742, 4294901760
    %744 = vmatpush1.msra.mxu0 %v743
    %745 = vmatprep.subr.mxu0 0.0
    %v746 = vand.u32 %v88, 4294901760
    %v747 = vsub.f32 %v88, %v746
    %v748 = vand.u32 %v747, 4294901760
    %v749 = vsub.f32 %v747, %v748
    %v750 = vand.u32 %v749, 4294901760
    %751 = vmatpush1.msra.mxu0 %v750
    %752 = vmatprep.subr.mxu0 0.0
    %v753 = vand.u32 %v89, 4294901760
    %v754 = vsub.f32 %v89, %v753
    %v755 = vand.u32 %v754, 4294901760
    %v756 = vsub.f32 %v754, %v755
    %v757 = vand.u32 %v756, 4294901760
    %758 = vmatpush1.msra.mxu0 %v757
    %759 = vmatprep.subr.mxu0 0.0
    %v760 = vand.u32 %v90, 4294901760
    %v761 = vsub.f32 %v90, %v760
    %v762 = vand.u32 %v761, 4294901760
    %v763 = vsub.f32 %v761, %v762
    %v764 = vand.u32 %v763, 4294901760
    %765 = vmatpush1.msra.mxu0 %v764
    %766 = vmatprep.subr.mxu0 0.0
    %v767 = vand.u32 %v91, 4294901760
    %v768 = vsub.f32 %v91, %v767
    %v769 = vand.u32 %v768, 4294901760
    %v770 = vsub.f32 %v768, %v769
    %v771 = vand.u32 %v770, 4294901760
    %772 = vmatpush1.msra.mxu0 %v771
    %773 = vmatprep.subr.mxu0 0.0
    %v774 = vand.u32 %v92, 4294901760
    %v775 = vsub.f32 %v92, %v774
    %v776 = vand.u32 %v775, 4294901760
    %v777 = vsub.f32 %v775, %v776
    %v778 = vand.u32 %v777, 4294901760
    %779 = vmatpush1.msra.mxu0 %v778
    %780 = vmatprep.subr.mxu0 0.0
    %v781 = vand.u32 %v93, 4294901760
    %v782 = vsub.f32 %v93, %v781
    %v783 = vand.u32 %v782, 4294901760
    %v784 = vsub.f32 %v782, %v783
    %v785 = vand.u32 %v784, 4294901760
    %786 = vmatpush1.msra.mxu0 %v785
    %787 = vmatprep.subr.mxu0 0.0
    %v788 = vand.u32 %v94, 4294901760
    %v789 = vsub.f32 %v94, %v788
    %v790 = vand.u32 %v789, 4294901760
    %v791 = vsub.f32 %v789, %v790
    %v792 = vand.u32 %v791, 4294901760
    %793 = vmatpush1.msra.mxu0 %v792
    %794 = vmatprep.subr.mxu0 0.0
    %v795 = vand.u32 %v95, 4294901760
    %v796 = vsub.f32 %v95, %v795
    %v797 = vand.u32 %v796, 4294901760
    %v798 = vsub.f32 %v796, %v797
    %v799 = vand.u32 %v798, 4294901760
    %800 = vmatpush1.msra.mxu0 %v799
    %801 = vmatprep.subr.mxu0 0.0
    %v802 = vand.u32 %v96, 4294901760
    %v803 = vsub.f32 %v96, %v802
    %v804 = vand.u32 %v803, 4294901760
    %v805 = vsub.f32 %v803, %v804
    %v806 = vand.u32 %v805, 4294901760
    %807 = vmatpush1.msra.mxu0 %v806
    %808 = vmatprep.subr.mxu0 0.0
    %v809 = vand.u32 %v97, 4294901760
    %v810 = vsub.f32 %v97, %v809
    %v811 = vand.u32 %v810, 4294901760
    %v812 = vsub.f32 %v810, %v811
    %v813 = vand.u32 %v812, 4294901760
    %814 = vmatpush1.msra.mxu0 %v813
    %815 = vmatprep.subr.mxu0 0.0
    %v816 = vand.u32 %v98, 4294901760
    %v817 = vsub.f32 %v98, %v816
    %v818 = vand.u32 %v817, 4294901760
    %v819 = vsub.f32 %v817, %v818
    %v820 = vand.u32 %v819, 4294901760
    %821 = vmatpush1.msra.mxu0 %v820
    %822 = vmatprep.subr.mxu0 0.0
    %v823 = vand.u32 %v99, 4294901760
    %v824 = vsub.f32 %v99, %v823
    %v825 = vand.u32 %v824, 4294901760
    %v826 = vsub.f32 %v824, %v825
    %v827 = vand.u32 %v826, 4294901760
    %828 = vmatpush1.msra.mxu0 %v827
    %829 = vmatprep.subr.mxu0 0.0
    %v830 = vand.u32 %v100, 4294901760
    %v831 = vsub.f32 %v100, %v830
    %v832 = vand.u32 %v831, 4294901760
    %v833 = vsub.f32 %v831, %v832
    %v834 = vand.u32 %v833, 4294901760
    %835 = vmatpush1.msra.mxu0 %v834
    %836 = vmatprep.subr.mxu0 0.0
    %v837 = vand.u32 %v101, 4294901760
    %v838 = vsub.f32 %v101, %v837
    %v839 = vand.u32 %v838, 4294901760
    %v840 = vsub.f32 %v838, %v839
    %v841 = vand.u32 %v840, 4294901760
    %842 = vmatpush1.msra.mxu0 %v841
    %843 = vmatprep.subr.mxu0 0.0
    %844 = vmatpush1.msra.mxu0 0.0
    %845 = vmatprep.subr.mxu0 0.0
    %846 = vmatpush1.msra.mxu0 0.0
    %847 = vmatprep.subr.mxu0 0.0
    %848 = vmatpush1.msra.mxu0 0.0
    %849 = vmatprep.subr.mxu0 0.0
    %850 = vmatpush1.msra.mxu0 0.0
    %851 = vmatprep.subr.mxu0 0.0
    %852 = vmatpush1.msra.mxu0 0.0
    %853 = vmatprep.subr.mxu0 0.0
    %854 = vmatpush1.msra.mxu0 0.0
    %855 = vmatprep.subr.mxu0 0.0
    %856 = vmatpush1.msra.mxu0 0.0
    %857 = vmatprep.subr.mxu0 0.0
    %858 = vmatpush1.msra.mxu0 0.0
    %859 = vmatprep.subr.mxu0 0.0
    %860 = vmatpush1.msra.mxu0 0.0
    %861 = vmatprep.subr.mxu0 0.0
    %862 = vmatpush1.msra.mxu0 0.0
    %863 = vmatprep.subr.mxu0 0.0
    %864 = vmatpush1.msra.mxu0 0.0
    %865 = vmatprep.subr.mxu0 0.0
    %866 = vmatpush1.msra.mxu0 0.0
    %867 = vmatprep.subr.mxu0 0.0
    %868 = vmatpush1.msra.mxu0 0.0
    %869 = vmatprep.subr.mxu0 0.0
    %870 = vmatpush1.msra.mxu0 0.0
    %871 = vmatprep.subr.mxu0 0.0
    %872 = vmatpush1.msra.mxu0 0.0
    %873 = vmatprep.subr.mxu0 0.0
    %874 = vmatpush1.msra.mxu0 0.0
    %875 = vmatprep.mubr.f32.mxu0 0.0
    %v876 = vand.u32 %v639, 4294901760
    %877 = vmatmul.mubr.f32.gmra.mrb[0].mxu0 %v876
    %v878 = vpop.f32.mrb[0].mxu0
    %v879 = vadd.f32 %v728, %v878
    %v880 = vpop.f32.mrb[0].mxu0
    %881 = vdwg.mxu0
    %882 = vmatprep.subr.mxu0 0.0
    %v883 = vand.u32 %v86, 4294901760
    %v884 = vsub.f32 %v86, %v883
    %885 = vmatpush1.msra.mxu0 %v884
    %886 = vmatprep.subr.mxu0 0.0
    %v887 = vand.u32 %v87, 4294901760
    %v888 = vsub.f32 %v87, %v887
    %889 = vmatpush1.msra.mxu0 %v888
    %890 = vmatprep.subr.mxu0 0.0
    %v891 = vand.u32 %v88, 4294901760
    %v892 = vsub.f32 %v88, %v891
    %893 = vmatpush1.msra.mxu0 %v892
    %894 = vmatprep.subr.mxu0 0.0
    %v895 = vand.u32 %v89, 4294901760
    %v896 = vsub.f32 %v89, %v895
    %897 = vmatpush1.msra.mxu0 %v896
    %898 = vmatprep.subr.mxu0 0.0
    %v899 = vand.u32 %v90, 4294901760
    %v900 = vsub.f32 %v90, %v899
    %901 = vmatpush1.msra.mxu0 %v900
    %902 = vmatprep.subr.mxu0 0.0
    %v903 = vand.u32 %v91, 4294901760
    %v904 = vsub.f32 %v91, %v903
    %905 = vmatpush1.msra.mxu0 %v904
    %906 = vmatprep.subr.mxu0 0.0
    %v907 = vand.u32 %v92, 4294901760
    %v908 = vsub.f32 %v92, %v907
    %909 = vmatpush1.msra.mxu0 %v908
    %910 = vmatprep.subr.mxu0 0.0
    %v911 = vand.u32 %v93, 4294901760
    %v912 = vsub.f32 %v93, %v911
    %913 = vmatpush1.msra.mxu0 %v912
    %914 = vmatprep.subr.mxu0 0.0
    %v915 = vand.u32 %v94, 4294901760
    %v916 = vsub.f32 %v94, %v915
    %917 = vmatpush1.msra.mxu0 %v916
    %918 = vmatprep.subr.mxu0 0.0
    %v919 = vand.u32 %v95, 4294901760
    %v920 = vsub.f32 %v95, %v919
    %921 = vmatpush1.msra.mxu0 %v920
    %922 = vmatprep.subr.mxu0 0.0
    %v923 = vand.u32 %v96, 4294901760
    %v924 = vsub.f32 %v96, %v923
    %925 = vmatpush1.msra.mxu0 %v924
    %926 = vmatprep.subr.mxu0 0.0
    %v927 = vand.u32 %v97, 4294901760
    %v928 = vsub.f32 %v97, %v927
    %929 = vmatpush1.msra.mxu0 %v928
    %930 = vmatprep.subr.mxu0 0.0
    %v931 = vand.u32 %v98, 4294901760
    %v932 = vsub.f32 %v98, %v931
    %933 = vmatpush1.msra.mxu0 %v932
    %934 = vmatprep.subr.mxu0 0.0
    %v935 = vand.u32 %v99, 4294901760
    %v936 = vsub.f32 %v99, %v935
    %937 = vmatpush1.msra.mxu0 %v936
    %938 = vmatprep.subr.mxu0 0.0
    %v939 = vand.u32 %v100, 4294901760
    %v940 = vsub.f32 %v100, %v939
    %941 = vmatpush1.msra.mxu0 %v940
    %942 = vmatprep.subr.mxu0 0.0
    %v943 = vand.u32 %v101, 4294901760
    %v944 = vsub.f32 %v101, %v943
    %945 = vmatpush1.msra.mxu0 %v944
    %946 = vmatprep.subr.mxu0 0.0
    %947 = vmatpush1.msra.mxu0 0.0
    %948 = vmatprep.subr.mxu0 0.0
    %949 = vmatpush1.msra.mxu0 0.0
    %950 = vmatprep.subr.mxu0 0.0
    %951 = vmatpush1.msra.mxu0 0.0
    %952 = vmatprep.subr.mxu0 0.0
    %953 = vmatpush1.msra.mxu0 0.0
    %954 = vmatprep.subr.mxu0 0.0
    %955 = vmatpush1.msra.mxu0 0.0
    %956 = vmatprep.subr.mxu0 0.0
    %957 = vmatpush1.msra.mxu0 0.0
    %958 = vmatprep.subr.mxu0 0.0
    %959 = vmatpush1.msra.mxu0 0.0
    %960 = vmatprep.subr.mxu0 0.0
    %961 = vmatpush1.msra.mxu0 0.0
    %962 = vmatprep.subr.mxu0 0.0
    %963 = vmatpush1.msra.mxu0 0.0
    %964 = vmatprep.subr.mxu0 0.0
    %965 = vmatpush1.msra.mxu0 0.0
    %966 = vmatprep.subr.mxu0 0.0
    %967 = vmatpush1.msra.mxu0 0.0
    %968 = vmatprep.subr.mxu0 0.0
    %969 = vmatpush1.msra.mxu0 0.0
    %970 = vmatprep.subr.mxu0 0.0
    %971 = vmatpush1.msra.mxu0 0.0
    %972 = vmatprep.subr.mxu0 0.0
    %973 = vmatpush1.msra.mxu0 0.0
    %974 = vmatprep.subr.mxu0 0.0
    %975 = vmatpush1.msra.mxu0 0.0
    %976 = vmatprep.subr.mxu0 0.0
    %977 = vmatpush1.msra.mxu0 0.0
    %978 = vmatprep.mubr.f32.mxu0 0.0
    %v979 = vand.u32 %v639, 4294901760
    %v980 = vsub.f32 %v639, %v979
    %981 = vmatmul.mubr.f32.gmra.mrb[0].mxu0 %v980
    %v982 = vpop.f32.mrb[0].mxu0
    %v983 = vadd.f32 %v879, %v982
    %v984 = vpop.f32.mrb[0].mxu0
    %985 = vdwg.mxu0
    %986 = vmatprep.subr.mxu0 0.0
    %v987 = vand.u32 %v86, 4294901760
    %988 = vmatpush1.msra.mxu0 %v987
    %989 = vmatprep.subr.mxu0 0.0
    %v990 = vand.u32 %v87, 4294901760
    %991 = vmatpush1.msra.mxu0 %v990
    %992 = vmatprep.subr.mxu0 0.0
    %v993 = vand.u32 %v88, 4294901760
    %994 = vmatpush1.msra.mxu0 %v993
    %995 = vmatprep.subr.mxu0 0.0
    %v996 = vand.u32 %v89, 4294901760
    %997 = vmatpush1.msra.mxu0 %v996
    %998 = vmatprep.subr.mxu0 0.0
    %v999 = vand.u32 %v90, 4294901760
    %1000 = vmatpush1.msra.mxu0 %v999
    %1001 = vmatprep.subr.mxu0 0.0
    %v1002 = vand.u32 %v91, 4294901760
    %1003 = vmatpush1.msra.mxu0 %v1002
    %1004 = vmatprep.subr.mxu0 0.0
    %v1005 = vand.u32 %v92, 4294901760
    %1006 = vmatpush1.msra.mxu0 %v1005
    %1007 = vmatprep.subr.mxu0 0.0
    %v1008 = vand.u32 %v93, 4294901760
    %1009 = vmatpush1.msra.mxu0 %v1008
    %1010 = vmatprep.subr.mxu0 0.0
    %v1011 = vand.u32 %v94, 4294901760
    %1012 = vmatpush1.msra.mxu0 %v1011
    %1013 = vmatprep.subr.mxu0 0.0
    %v1014 = vand.u32 %v95, 4294901760
    %1015 = vmatpush1.msra.mxu0 %v1014
    %1016 = vmatprep.subr.mxu0 0.0
    %v1017 = vand.u32 %v96, 4294901760
    %1018 = vmatpush1.msra.mxu0 %v1017
    %1019 = vmatprep.subr.mxu0 0.0
    %v1020 = vand.u32 %v97, 4294901760
    %1021 = vmatpush1.msra.mxu0 %v1020
    %1022 = vmatprep.subr.mxu0 0.0
    %v1023 = vand.u32 %v98, 4294901760
    %1024 = vmatpush1.msra.mxu0 %v1023
    %1025 = vmatprep.subr.mxu0 0.0
    %v1026 = vand.u32 %v99, 4294901760
    %1027 = vmatpush1.msra.mxu0 %v1026
    %1028 = vmatprep.subr.mxu0 0.0
    %v1029 = vand.u32 %v100, 4294901760
    %1030 = vmatpush1.msra.mxu0 %v1029
    %1031 = vmatprep.subr.mxu0 0.0
    %v1032 = vand.u32 %v101, 4294901760
    %1033 = vmatpush1.msra.mxu0 %v1032
    %1034 = vmatprep.subr.mxu0 0.0
    %1035 = vmatpush1.msra.mxu0 0.0
    %1036 = vmatprep.subr.mxu0 0.0
    %1037 = vmatpush1.msra.mxu0 0.0
    %1038 = vmatprep.subr.mxu0 0.0
    %1039 = vmatpush1.msra.mxu0 0.0
    %1040 = vmatprep.subr.mxu0 0.0
    %1041 = vmatpush1.msra.mxu0 0.0
    %1042 = vmatprep.subr.mxu0 0.0
    %1043 = vmatpush1.msra.mxu0 0.0
    %1044 = vmatprep.subr.mxu0 0.0
    %1045 = vmatpush1.msra.mxu0 0.0
    %1046 = vmatprep.subr.mxu0 0.0
    %1047 = vmatpush1.msra.mxu0 0.0
    %1048 = vmatprep.subr.mxu0 0.0
    %1049 = vmatpush1.msra.mxu0 0.0
    %1050 = vmatprep.subr.mxu0 0.0
    %1051 = vmatpush1.msra.mxu0 0.0
    %1052 = vmatprep.subr.mxu0 0.0
    %1053 = vmatpush1.msra.mxu0 0.0
    %1054 = vmatprep.subr.mxu0 0.0
    %1055 = vmatpush1.msra.mxu0 0.0
    %1056 = vmatprep.subr.mxu0 0.0
    %1057 = vmatpush1.msra.mxu0 0.0
    %1058 = vmatprep.subr.mxu0 0.0
    %1059 = vmatpush1.msra.mxu0 0.0
    %1060 = vmatprep.subr.mxu0 0.0
    %1061 = vmatpush1.msra.mxu0 0.0
    %1062 = vmatprep.subr.mxu0 0.0
    %1063 = vmatpush1.msra.mxu0 0.0
    %1064 = vmatprep.subr.mxu0 0.0
    %1065 = vmatpush1.msra.mxu0 0.0
    %1066 = vmatprep.mubr.f32.mxu0 0.0
    %v1067 = vand.u32 %v639, 4294901760
    %v1068 = vsub.f32 %v639, %v1067
    %v1069 = vand.u32 %v1068, 4294901760
    %1070 = vmatmul.mubr.f32.gmra.mrb[0].mxu0 %v1069
    %v1071 = vpop.f32.mrb[0].mxu0
    %v1072 = vadd.f32 %v983, %v1071
    %v1073 = vpop.f32.mrb[0].mxu0
    %1074 = vdwg.mxu0
    %1075 = vmatprep.subr.mxu0 0.0
    %v1076 = vand.u32 %v86, 4294901760
    %v1077 = vsub.f32 %v86, %v1076
    %v1078 = vand.u32 %v1077, 4294901760
    %1079 = vmatpush1.msra.mxu0 %v1078
    %1080 = vmatprep.subr.mxu0 0.0
    %v1081 = vand.u32 %v87, 4294901760
    %v1082 = vsub.f32 %v87, %v1081
    %v1083 = vand.u32 %v1082, 4294901760
    %1084 = vmatpush1.msra.mxu0 %v1083
    %1085 = vmatprep.subr.mxu0 0.0
    %v1086 = vand.u32 %v88, 4294901760
    %v1087 = vsub.f32 %v88, %v1086
    %v1088 = vand.u32 %v1087, 4294901760
    %1089 = vmatpush1.msra.mxu0 %v1088
    %1090 = vmatprep.subr.mxu0 0.0
    %v1091 = vand.u32 %v89, 4294901760
    %v1092 = vsub.f32 %v89, %v1091
    %v1093 = vand.u32 %v1092, 4294901760
    %1094 = vmatpush1.msra.mxu0 %v1093
    %1095 = vmatprep.subr.mxu0 0.0
    %v1096 = vand.u32 %v90, 4294901760
    %v1097 = vsub.f32 %v90, %v1096
    %v1098 = vand.u32 %v1097, 4294901760
    %1099 = vmatpush1.msra.mxu0 %v1098
    %1100 = vmatprep.subr.mxu0 0.0
    %v1101 = vand.u32 %v91, 4294901760
    %v1102 = vsub.f32 %v91, %v1101
    %v1103 = vand.u32 %v1102, 4294901760
    %1104 = vmatpush1.msra.mxu0 %v1103
    %1105 = vmatprep.subr.mxu0 0.0
    %v1106 = vand.u32 %v92, 4294901760
    %v1107 = vsub.f32 %v92, %v1106
    %v1108 = vand.u32 %v1107, 4294901760
    %1109 = vmatpush1.msra.mxu0 %v1108
    %1110 = vmatprep.subr.mxu0 0.0
    %v1111 = vand.u32 %v93, 4294901760
    %v1112 = vsub.f32 %v93, %v1111
    %v1113 = vand.u32 %v1112, 4294901760
    %1114 = vmatpush1.msra.mxu0 %v1113
    %1115 = vmatprep.subr.mxu0 0.0
    %v1116 = vand.u32 %v94, 4294901760
    %v1117 = vsub.f32 %v94, %v1116
    %v1118 = vand.u32 %v1117, 4294901760
    %1119 = vmatpush1.msra.mxu0 %v1118
    %1120 = vmatprep.subr.mxu0 0.0
    %v1121 = vand.u32 %v95, 4294901760
    %v1122 = vsub.f32 %v95, %v1121
    %v1123 = vand.u32 %v1122, 4294901760
    %1124 = vmatpush1.msra.mxu0 %v1123
    %1125 = vmatprep.subr.mxu0 0.0
    %v1126 = vand.u32 %v96, 4294901760
    %v1127 = vsub.f32 %v96, %v1126
    %v1128 = vand.u32 %v1127, 4294901760
    %1129 = vmatpush1.msra.mxu0 %v1128
    %1130 = vmatprep.subr.mxu0 0.0
    %v1131 = vand.u32 %v97, 4294901760
    %v1132 = vsub.f32 %v97, %v1131
    %v1133 = vand.u32 %v1132, 4294901760
    %1134 = vmatpush1.msra.mxu0 %v1133
    %1135 = vmatprep.subr.mxu0 0.0
    %v1136 = vand.u32 %v98, 4294901760
    %v1137 = vsub.f32 %v98, %v1136
    %v1138 = vand.u32 %v1137, 4294901760
    %1139 = vmatpush1.msra.mxu0 %v1138
    %1140 = vmatprep.subr.mxu0 0.0
    %v1141 = vand.u32 %v99, 4294901760
    %v1142 = vsub.f32 %v99, %v1141
    %v1143 = vand.u32 %v1142, 4294901760
    %1144 = vmatpush1.msra.mxu0 %v1143
    %1145 = vmatprep.subr.mxu0 0.0
    %v1146 = vand.u32 %v100, 4294901760
    %v1147 = vsub.f32 %v100, %v1146
    %v1148 = vand.u32 %v1147, 4294901760
    %1149 = vmatpush1.msra.mxu0 %v1148
    %1150 = vmatprep.subr.mxu0 0.0
    %v1151 = vand.u32 %v101, 4294901760
    %v1152 = vsub.f32 %v101, %v1151
    %v1153 = vand.u32 %v1152, 4294901760
    %1154 = vmatpush1.msra.mxu0 %v1153
    %1155 = vmatprep.subr.mxu0 0.0
    %1156 = vmatpush1.msra.mxu0 0.0
    %1157 = vmatprep.subr.mxu0 0.0
    %1158 = vmatpush1.msra.mxu0 0.0
    %1159 = vmatprep.subr.mxu0 0.0
    %1160 = vmatpush1.msra.mxu0 0.0
    %1161 = vmatprep.subr.mxu0 0.0
    %1162 = vmatpush1.msra.mxu0 0.0
    %1163 = vmatprep.subr.mxu0 0.0
    %1164 = vmatpush1.msra.mxu0 0.0
    %1165 = vmatprep.subr.mxu0 0.0
    %1166 = vmatpush1.msra.mxu0 0.0
    %1167 = vmatprep.subr.mxu0 0.0
    %1168 = vmatpush1.msra.mxu0 0.0
    %1169 = vmatprep.subr.mxu0 0.0
    %1170 = vmatpush1.msra.mxu0 0.0
    %1171 = vmatprep.subr.mxu0 0.0
    %1172 = vmatpush1.msra.mxu0 0.0
    %1173 = vmatprep.subr.mxu0 0.0
    %1174 = vmatpush1.msra.mxu0 0.0
    %1175 = vmatprep.subr.mxu0 0.0
    %1176 = vmatpush1.msra.mxu0 0.0
    %1177 = vmatprep.subr.mxu0 0.0
    %1178 = vmatpush1.msra.mxu0 0.0
    %1179 = vmatprep.subr.mxu0 0.0
    %1180 = vmatpush1.msra.mxu0 0.0
    %1181 = vmatprep.subr.mxu0 0.0
    %1182 = vmatpush1.msra.mxu0 0.0
    %1183 = vmatprep.subr.mxu0 0.0
    %1184 = vmatpush1.msra.mxu0 0.0
    %1185 = vmatprep.subr.mxu0 0.0
    %1186 = vmatpush1.msra.mxu0 0.0
    %1187 = vmatprep.mubr.f32.mxu0 0.0
    %v1188 = vand.u32 %v639, 4294901760
    %1189 = vmatmul.mubr.f32.gmra.mrb[0].mxu0 %v1188
    %v1190 = vpop.f32.mrb[0].mxu0
    %v1191 = vadd.f32 %v1072, %v1190
    %v1192 = vpop.f32.mrb[0].mxu0
    %1193 = vdwg.mxu0
    %1194 = vmatprep.subr.mxu0 0.0
    %v1195 = vand.u32 %v86, 4294901760
    %1196 = vmatpush1.msra.mxu0 %v1195
    %1197 = vmatprep.subr.mxu0 0.0
    %v1198 = vand.u32 %v87, 4294901760
    %1199 = vmatpush1.msra.mxu0 %v1198
    %1200 = vmatprep.subr.mxu0 0.0
    %v1201 = vand.u32 %v88, 4294901760
    %1202 = vmatpush1.msra.mxu0 %v1201
    %1203 = vmatprep.subr.mxu0 0.0
    %v1204 = vand.u32 %v89, 4294901760
    %1205 = vmatpush1.msra.mxu0 %v1204
    %1206 = vmatprep.subr.mxu0 0.0
    %v1207 = vand.u32 %v90, 4294901760
    %1208 = vmatpush1.msra.mxu0 %v1207
    %1209 = vmatprep.subr.mxu0 0.0
    %v1210 = vand.u32 %v91, 4294901760
    %1211 = vmatpush1.msra.mxu0 %v1210
    %1212 = vmatprep.subr.mxu0 0.0
    %v1213 = vand.u32 %v92, 4294901760
    %1214 = vmatpush1.msra.mxu0 %v1213
    %1215 = vmatprep.subr.mxu0 0.0
    %v1216 = vand.u32 %v93, 4294901760
    %1217 = vmatpush1.msra.mxu0 %v1216
    %1218 = vmatprep.subr.mxu0 0.0
    %v1219 = vand.u32 %v94, 4294901760
    %1220 = vmatpush1.msra.mxu0 %v1219
    %1221 = vmatprep.subr.mxu0 0.0
    %v1222 = vand.u32 %v95, 4294901760
    %1223 = vmatpush1.msra.mxu0 %v1222
    %1224 = vmatprep.subr.mxu0 0.0
    %v1225 = vand.u32 %v96, 4294901760
    %1226 = vmatpush1.msra.mxu0 %v1225
    %1227 = vmatprep.subr.mxu0 0.0
    %v1228 = vand.u32 %v97, 4294901760
    %1229 = vmatpush1.msra.mxu0 %v1228
    %1230 = vmatprep.subr.mxu0 0.0
    %v1231 = vand.u32 %v98, 4294901760
    %1232 = vmatpush1.msra.mxu0 %v1231
    %1233 = vmatprep.subr.mxu0 0.0
    %v1234 = vand.u32 %v99, 4294901760
    %1235 = vmatpush1.msra.mxu0 %v1234
    %1236 = vmatprep.subr.mxu0 0.0
    %v1237 = vand.u32 %v100, 4294901760
    %1238 = vmatpush1.msra.mxu0 %v1237
    %1239 = vmatprep.subr.mxu0 0.0
    %v1240 = vand.u32 %v101, 4294901760
    %1241 = vmatpush1.msra.mxu0 %v1240
    %1242 = vmatprep.subr.mxu0 0.0
    %1243 = vmatpush1.msra.mxu0 0.0
    %1244 = vmatprep.subr.mxu0 0.0
    %1245 = vmatpush1.msra.mxu0 0.0
    %1246 = vmatprep.subr.mxu0 0.0
    %1247 = vmatpush1.msra.mxu0 0.0
    %1248 = vmatprep.subr.mxu0 0.0
    %1249 = vmatpush1.msra.mxu0 0.0
    %1250 = vmatprep.subr.mxu0 0.0
    %1251 = vmatpush1.msra.mxu0 0.0
    %1252 = vmatprep.subr.mxu0 0.0
    %1253 = vmatpush1.msra.mxu0 0.0
    %1254 = vmatprep.subr.mxu0 0.0
    %1255 = vmatpush1.msra.mxu0 0.0
    %1256 = vmatprep.subr.mxu0 0.0
    %1257 = vmatpush1.msra.mxu0 0.0
    %1258 = vmatprep.subr.mxu0 0.0
    %1259 = vmatpush1.msra.mxu0 0.0
    %1260 = vmatprep.subr.mxu0 0.0
    %1261 = vmatpush1.msra.mxu0 0.0
    %1262 = vmatprep.subr.mxu0 0.0
    %1263 = vmatpush1.msra.mxu0 0.0
    %1264 = vmatprep.subr.mxu0 0.0
    %1265 = vmatpush1.msra.mxu0 0.0
    %1266 = vmatprep.subr.mxu0 0.0
    %1267 = vmatpush1.msra.mxu0 0.0
    %1268 = vmatprep.subr.mxu0 0.0
    %1269 = vmatpush1.msra.mxu0 0.0
    %1270 = vmatprep.subr.mxu0 0.0
    %1271 = vmatpush1.msra.mxu0 0.0
    %1272 = vmatprep.subr.mxu0 0.0
    %1273 = vmatpush1.msra.mxu0 0.0
    %1274 = vmatprep.mubr.f32.mxu0 0.0
    %v1275 = vand.u32 %v639, 4294901760
    %1276 = vmatmul.mubr.f32.gmra.mrb[0].mxu0 %v1275
    %v1277 = vpop.f32.mrb[0].mxu0
    %v1278 = vadd.f32 %v1191, %v1277
    %v1279 = vpop.f32.mrb[0].mxu0
    %1280 = vdwg.mxu0
    %v1281 = vmul.f32 %v1278, 0.001953125
    %v1282 = vlaneseq
    %v1283 = vshrl.u32 %v1282, 7
    %v1284 = vsub.s32 0, %v1283
    %v1285 = vrot.slane %v1281, %v1284
    %v1286 = vsub.f32 %v625, %v1285
    %v1287 = vsub.f32 %v626, %v1285
    %v1288 = vsub.f32 %v627, %v1285
    %v1289 = vsub.f32 %v628, %v1285
    %v1290 = vmul.f32 %v1286, %v1286
    %v1291 = vmul.f32 %v1287, %v1287
    %v1292 = vmul.f32 %v1288, %v1288
    %v1293 = vmul.f32 %v1289, %v1289
    %v1294 = vadd.f32 %v1290, %v1291
    %v1295 = vadd.f32 %v1294, %v1292
    %v1296 = vadd.f32 %v1295, %v1293
    %v1297 = vrot.slane %v1296, 4
    %v1298 = vadd.f32 %v1296, %v1297
    %v1299 = vrot.slane %v1298, 2
    %v1300 = vadd.f32 %v1298, %v1299
    %v1301 = vrot.slane %v1300, 1
    %v1302 = vadd.f32 %v1300, %v1301
    %1303 = vmatprep.subr.mxu0 0.0
    %v1304 = vand.u32 %v86, 4294901760
    %1305 = vmatpush1.msra.mxu0 %v1304
    %1306 = vmatprep.subr.mxu0 0.0
    %v1307 = vand.u32 %v87, 4294901760
    %1308 = vmatpush1.msra.mxu0 %v1307
    %1309 = vmatprep.subr.mxu0 0.0
    %v1310 = vand.u32 %v88, 4294901760
    %1311 = vmatpush1.msra.mxu0 %v1310
    %1312 = vmatprep.subr.mxu0 0.0
    %v1313 = vand.u32 %v89, 4294901760
    %1314 = vmatpush1.msra.mxu0 %v1313
    %1315 = vmatprep.subr.mxu0 0.0
    %v1316 = vand.u32 %v90, 4294901760
    %1317 = vmatpush1.msra.mxu0 %v1316
    %1318 = vmatprep.subr.mxu0 0.0
    %v1319 = vand.u32 %v91, 4294901760
    %1320 = vmatpush1.msra.mxu0 %v1319
    %1321 = vmatprep.subr.mxu0 0.0
    %v1322 = vand.u32 %v92, 4294901760
    %1323 = vmatpush1.msra.mxu0 %v1322
    %1324 = vmatprep.subr.mxu0 0.0
    %v1325 = vand.u32 %v93, 4294901760
    %1326 = vmatpush1.msra.mxu0 %v1325
    %1327 = vmatprep.subr.mxu0 0.0
    %v1328 = vand.u32 %v94, 4294901760
    %1329 = vmatpush1.msra.mxu0 %v1328
    %1330 = vmatprep.subr.mxu0 0.0
    %v1331 = vand.u32 %v95, 4294901760
    %1332 = vmatpush1.msra.mxu0 %v1331
    %1333 = vmatprep.subr.mxu0 0.0
    %v1334 = vand.u32 %v96, 4294901760
    %1335 = vmatpush1.msra.mxu0 %v1334
    %1336 = vmatprep.subr.mxu0 0.0
    %v1337 = vand.u32 %v97, 4294901760
    %1338 = vmatpush1.msra.mxu0 %v1337
    %1339 = vmatprep.subr.mxu0 0.0
    %v1340 = vand.u32 %v98, 4294901760
    %1341 = vmatpush1.msra.mxu0 %v1340
    %1342 = vmatprep.subr.mxu0 0.0
    %v1343 = vand.u32 %v99, 4294901760
    %1344 = vmatpush1.msra.mxu0 %v1343
    %1345 = vmatprep.subr.mxu0 0.0
    %v1346 = vand.u32 %v100, 4294901760
    %1347 = vmatpush1.msra.mxu0 %v1346
    %1348 = vmatprep.subr.mxu0 0.0
    %v1349 = vand.u32 %v101, 4294901760
    %1350 = vmatpush1.msra.mxu0 %v1349
    %1351 = vmatprep.subr.mxu0 0.0
    %1352 = vmatpush1.msra.mxu0 0.0
    %1353 = vmatprep.subr.mxu0 0.0
    %1354 = vmatpush1.msra.mxu0 0.0
    %1355 = vmatprep.subr.mxu0 0.0
    %1356 = vmatpush1.msra.mxu0 0.0
    %1357 = vmatprep.subr.mxu0 0.0
    %1358 = vmatpush1.msra.mxu0 0.0
    %1359 = vmatprep.subr.mxu0 0.0
    %1360 = vmatpush1.msra.mxu0 0.0
    %1361 = vmatprep.subr.mxu0 0.0
    %1362 = vmatpush1.msra.mxu0 0.0
    %1363 = vmatprep.subr.mxu0 0.0
    %1364 = vmatpush1.msra.mxu0 0.0
    %1365 = vmatprep.subr.mxu0 0.0
    %1366 = vmatpush1.msra.mxu0 0.0
    %1367 = vmatprep.subr.mxu0 0.0
    %1368 = vmatpush1.msra.mxu0 0.0
    %1369 = vmatprep.subr.mxu0 0.0
    %1370 = vmatpush1.msra.mxu0 0.0
    %1371 = vmatprep.subr.mxu0 0.0
    %1372 = vmatpush1.msra.mxu0 0.0
    %1373 = vmatprep.subr.mxu0 0.0
    %1374 = vmatpush1.msra.mxu0 0.0
    %1375 = vmatprep.subr.mxu0 0.0
    %1376 = vmatpush1.msra.mxu0 0.0
    %1377 = vmatprep.subr.mxu0 0.0
    %1378 = vmatpush1.msra.mxu0 0.0
    %1379 = vmatprep.subr.mxu0 0.0
    %1380 = vmatpush1.msra.mxu0 0.0
    %1381 = vmatprep.subr.mxu0 0.0
    %1382 = vmatpush1.msra.mxu0 0.0
    %1383 = vmatprep.mubr.f32.mxu0 0.0
    %v1384 = vand.u32 %v1302, 4294901760
    %v1385 = vsub.f32 %v1302, %v1384
    %v1386 = vand.u32 %v1385, 4294901760
    %v1387 = vsub.f32 %v1385, %v1386
    %v1388 = vand.u32 %v1387, 4294901760
    %1389 = vmatmul.mubr.f32.gmra.mrb[0].mxu0 %v1388
    %v1390 = vpop.f32.mrb[0].mxu0
    %v1391 = vadd.f32 0.0, %v1390
    %v1392 = vpop.f32.mrb[0].mxu0
    %1393 = vdwg.mxu0
    %1394 = vmatprep.subr.mxu0 0.0
    %v1395 = vand.u32 %v86, 4294901760
    %v1396 = vsub.f32 %v86, %v1395
    %v1397 = vand.u32 %v1396, 4294901760
    %v1398 = vsub.f32 %v1396, %v1397
    %v1399 = vand.u32 %v1398, 4294901760
    %1400 = vmatpush1.msra.mxu0 %v1399
    %1401 = vmatprep.subr.mxu0 0.0
    %v1402 = vand.u32 %v87, 4294901760
    %v1403 = vsub.f32 %v87, %v1402
    %v1404 = vand.u32 %v1403, 4294901760
    %v1405 = vsub.f32 %v1403, %v1404
    %v1406 = vand.u32 %v1405, 4294901760
    %1407 = vmatpush1.msra.mxu0 %v1406
    %1408 = vmatprep.subr.mxu0 0.0
    %v1409 = vand.u32 %v88, 4294901760
    %v1410 = vsub.f32 %v88, %v1409
    %v1411 = vand.u32 %v1410, 4294901760
    %v1412 = vsub.f32 %v1410, %v1411
    %v1413 = vand.u32 %v1412, 4294901760
    %1414 = vmatpush1.msra.mxu0 %v1413
    %1415 = vmatprep.subr.mxu0 0.0
    %v1416 = vand.u32 %v89, 4294901760
    %v1417 = vsub.f32 %v89, %v1416
    %v1418 = vand.u32 %v1417, 4294901760
    %v1419 = vsub.f32 %v1417, %v1418
    %v1420 = vand.u32 %v1419, 4294901760
    %1421 = vmatpush1.msra.mxu0 %v1420
    %1422 = vmatprep.subr.mxu0 0.0
    %v1423 = vand.u32 %v90, 4294901760
    %v1424 = vsub.f32 %v90, %v1423
    %v1425 = vand.u32 %v1424, 4294901760
    %v1426 = vsub.f32 %v1424, %v1425
    %v1427 = vand.u32 %v1426, 4294901760
    %1428 = vmatpush1.msra.mxu0 %v1427
    %1429 = vmatprep.subr.mxu0 0.0
    %v1430 = vand.u32 %v91, 4294901760
    %v1431 = vsub.f32 %v91, %v1430
    %v1432 = vand.u32 %v1431, 4294901760
    %v1433 = vsub.f32 %v1431, %v1432
    %v1434 = vand.u32 %v1433, 4294901760
    %1435 = vmatpush1.msra.mxu0 %v1434
    %1436 = vmatprep.subr.mxu0 0.0
    %v1437 = vand.u32 %v92, 4294901760
    %v1438 = vsub.f32 %v92, %v1437
    %v1439 = vand.u32 %v1438, 4294901760
    %v1440 = vsub.f32 %v1438, %v1439
    %v1441 = vand.u32 %v1440, 4294901760
    %1442 = vmatpush1.msra.mxu0 %v1441
    %1443 = vmatprep.subr.mxu0 0.0
    %v1444 = vand.u32 %v93, 4294901760
    %v1445 = vsub.f32 %v93, %v1444
    %v1446 = vand.u32 %v1445, 4294901760
    %v1447 = vsub.f32 %v1445, %v1446
    %v1448 = vand.u32 %v1447, 4294901760
    %1449 = vmatpush1.msra.mxu0 %v1448
    %1450 = vmatprep.subr.mxu0 0.0
    %v1451 = vand.u32 %v94, 4294901760
    %v1452 = vsub.f32 %v94, %v1451
    %v1453 = vand.u32 %v1452, 4294901760
    %v1454 = vsub.f32 %v1452, %v1453
    %v1455 = vand.u32 %v1454, 4294901760
    %1456 = vmatpush1.msra.mxu0 %v1455
    %1457 = vmatprep.subr.mxu0 0.0
    %v1458 = vand.u32 %v95, 4294901760
    %v1459 = vsub.f32 %v95, %v1458
    %v1460 = vand.u32 %v1459, 4294901760
    %v1461 = vsub.f32 %v1459, %v1460
    %v1462 = vand.u32 %v1461, 4294901760
    %1463 = vmatpush1.msra.mxu0 %v1462
    %1464 = vmatprep.subr.mxu0 0.0
    %v1465 = vand.u32 %v96, 4294901760
    %v1466 = vsub.f32 %v96, %v1465
    %v1467 = vand.u32 %v1466, 4294901760
    %v1468 = vsub.f32 %v1466, %v1467
    %v1469 = vand.u32 %v1468, 4294901760
    %1470 = vmatpush1.msra.mxu0 %v1469
    %1471 = vmatprep.subr.mxu0 0.0
    %v1472 = vand.u32 %v97, 4294901760
    %v1473 = vsub.f32 %v97, %v1472
    %v1474 = vand.u32 %v1473, 4294901760
    %v1475 = vsub.f32 %v1473, %v1474
    %v1476 = vand.u32 %v1475, 4294901760
    %1477 = vmatpush1.msra.mxu0 %v1476
    %1478 = vmatprep.subr.mxu0 0.0
    %v1479 = vand.u32 %v98, 4294901760
    %v1480 = vsub.f32 %v98, %v1479
    %v1481 = vand.u32 %v1480, 4294901760
    %v1482 = vsub.f32 %v1480, %v1481
    %v1483 = vand.u32 %v1482, 4294901760
    %1484 = vmatpush1.msra.mxu0 %v1483
    %1485 = vmatprep.subr.mxu0 0.0
    %v1486 = vand.u32 %v99, 4294901760
    %v1487 = vsub.f32 %v99, %v1486
    %v1488 = vand.u32 %v1487, 4294901760
    %v1489 = vsub.f32 %v1487, %v1488
    %v1490 = vand.u32 %v1489, 4294901760
    %1491 = vmatpush1.msra.mxu0 %v1490
    %1492 = vmatprep.subr.mxu0 0.0
    %v1493 = vand.u32 %v100, 4294901760
    %v1494 = vsub.f32 %v100, %v1493
    %v1495 = vand.u32 %v1494, 4294901760
    %v1496 = vsub.f32 %v1494, %v1495
    %v1497 = vand.u32 %v1496, 4294901760
    %1498 = vmatpush1.msra.mxu0 %v1497
    %1499 = vmatprep.subr.mxu0 0.0
    %v1500 = vand.u32 %v101, 4294901760
    %v1501 = vsub.f32 %v101, %v1500
    %v1502 = vand.u32 %v1501, 4294901760
    %v1503 = vsub.f32 %v1501, %v1502
    %v1504 = vand.u32 %v1503, 4294901760
    %1505 = vmatpush1.msra.mxu0 %v1504
    %1506 = vmatprep.subr.mxu0 0.0
    %1507 = vmatpush1.msra.mxu0 0.0
    %1508 = vmatprep.subr.mxu0 0.0
    %1509 = vmatpush1.msra.mxu0 0.0
    %1510 = vmatprep.subr.mxu0 0.0
    %1511 = vmatpush1.msra.mxu0 0.0
    %1512 = vmatprep.subr.mxu0 0.0
    %1513 = vmatpush1.msra.mxu0 0.0
    %1514 = vmatprep.subr.mxu0 0.0
    %1515 = vmatpush1.msra.mxu0 0.0
    %1516 = vmatprep.subr.mxu0 0.0
    %1517 = vmatpush1.msra.mxu0 0.0
    %1518 = vmatprep.subr.mxu0 0.0
    %1519 = vmatpush1.msra.mxu0 0.0
    %1520 = vmatprep.subr.mxu0 0.0
    %1521 = vmatpush1.msra.mxu0 0.0
    %1522 = vmatprep.subr.mxu0 0.0
    %1523 = vmatpush1.msra.mxu0 0.0
    %1524 = vmatprep.subr.mxu0 0.0
    %1525 = vmatpush1.msra.mxu0 0.0
    %1526 = vmatprep.subr.mxu0 0.0
    %1527 = vmatpush1.msra.mxu0 0.0
    %1528 = vmatprep.subr.mxu0 0.0
    %1529 = vmatpush1.msra.mxu0 0.0
    %1530 = vmatprep.subr.mxu0 0.0
    %1531 = vmatpush1.msra.mxu0 0.0
    %1532 = vmatprep.subr.mxu0 0.0
    %1533 = vmatpush1.msra.mxu0 0.0
    %1534 = vmatprep.subr.mxu0 0.0
    %1535 = vmatpush1.msra.mxu0 0.0
    %1536 = vmatprep.subr.mxu0 0.0
    %1537 = vmatpush1.msra.mxu0 0.0
    %1538 = vmatprep.mubr.f32.mxu0 0.0
    %v1539 = vand.u32 %v1302, 4294901760
    %1540 = vmatmul.mubr.f32.gmra.mrb[0].mxu0 %v1539
    %v1541 = vpop.f32.mrb[0].mxu0
    %v1542 = vadd.f32 %v1391, %v1541
    %v1543 = vpop.f32.mrb[0].mxu0
    %1544 = vdwg.mxu0
    %1545 = vmatprep.subr.mxu0 0.0
    %v1546 = vand.u32 %v86, 4294901760
    %v1547 = vsub.f32 %v86, %v1546
    %1548 = vmatpush1.msra.mxu0 %v1547
    %1549 = vmatprep.subr.mxu0 0.0
    %v1550 = vand.u32 %v87, 4294901760
    %v1551 = vsub.f32 %v87, %v1550
    %1552 = vmatpush1.msra.mxu0 %v1551
    %1553 = vmatprep.subr.mxu0 0.0
    %v1554 = vand.u32 %v88, 4294901760
    %v1555 = vsub.f32 %v88, %v1554
    %1556 = vmatpush1.msra.mxu0 %v1555
    %1557 = vmatprep.subr.mxu0 0.0
    %v1558 = vand.u32 %v89, 4294901760
    %v1559 = vsub.f32 %v89, %v1558
    %1560 = vmatpush1.msra.mxu0 %v1559
    %1561 = vmatprep.subr.mxu0 0.0
    %v1562 = vand.u32 %v90, 4294901760
    %v1563 = vsub.f32 %v90, %v1562
    %1564 = vmatpush1.msra.mxu0 %v1563
    %1565 = vmatprep.subr.mxu0 0.0
    %v1566 = vand.u32 %v91, 4294901760
    %v1567 = vsub.f32 %v91, %v1566
    %1568 = vmatpush1.msra.mxu0 %v1567
    %1569 = vmatprep.subr.mxu0 0.0
    %v1570 = vand.u32 %v92, 4294901760
    %v1571 = vsub.f32 %v92, %v1570
    %1572 = vmatpush1.msra.mxu0 %v1571
    %1573 = vmatprep.subr.mxu0 0.0
    %v1574 = vand.u32 %v93, 4294901760
    %v1575 = vsub.f32 %v93, %v1574
    %1576 = vmatpush1.msra.mxu0 %v1575
    %1577 = vmatprep.subr.mxu0 0.0
    %v1578 = vand.u32 %v94, 4294901760
    %v1579 = vsub.f32 %v94, %v1578
    %1580 = vmatpush1.msra.mxu0 %v1579
    %1581 = vmatprep.subr.mxu0 0.0
    %v1582 = vand.u32 %v95, 4294901760
    %v1583 = vsub.f32 %v95, %v1582
    %1584 = vmatpush1.msra.mxu0 %v1583
    %1585 = vmatprep.subr.mxu0 0.0
    %v1586 = vand.u32 %v96, 4294901760
    %v1587 = vsub.f32 %v96, %v1586
    %1588 = vmatpush1.msra.mxu0 %v1587
    %1589 = vmatprep.subr.mxu0 0.0
    %v1590 = vand.u32 %v97, 4294901760
    %v1591 = vsub.f32 %v97, %v1590
    %1592 = vmatpush1.msra.mxu0 %v1591
    %1593 = vmatprep.subr.mxu0 0.0
    %v1594 = vand.u32 %v98, 4294901760
    %v1595 = vsub.f32 %v98, %v1594
    %1596 = vmatpush1.msra.mxu0 %v1595
    %1597 = vmatprep.subr.mxu0 0.0
    %v1598 = vand.u32 %v99, 4294901760
    %v1599 = vsub.f32 %v99, %v1598
    %1600 = vmatpush1.msra.mxu0 %v1599
    %1601 = vmatprep.subr.mxu0 0.0
    %v1602 = vand.u32 %v100, 4294901760
    %v1603 = vsub.f32 %v100, %v1602
    %1604 = vmatpush1.msra.mxu0 %v1603
    %1605 = vmatprep.subr.mxu0 0.0
    %v1606 = vand.u32 %v101, 4294901760
    %v1607 = vsub.f32 %v101, %v1606
    %1608 = vmatpush1.msra.mxu0 %v1607
    %1609 = vmatprep.subr.mxu0 0.0
    %1610 = vmatpush1.msra.mxu0 0.0
    %1611 = vmatprep.subr.mxu0 0.0
    %1612 = vmatpush1.msra.mxu0 0.0
    %1613 = vmatprep.subr.mxu0 0.0
    %1614 = vmatpush1.msra.mxu0 0.0
    %1615 = vmatprep.subr.mxu0 0.0
    %1616 = vmatpush1.msra.mxu0 0.0
    %1617 = vmatprep.subr.mxu0 0.0
    %1618 = vmatpush1.msra.mxu0 0.0
    %1619 = vmatprep.subr.mxu0 0.0
    %1620 = vmatpush1.msra.mxu0 0.0
    %1621 = vmatprep.subr.mxu0 0.0
    %1622 = vmatpush1.msra.mxu0 0.0
    %1623 = vmatprep.subr.mxu0 0.0
    %1624 = vmatpush1.msra.mxu0 0.0
    %1625 = vmatprep.subr.mxu0 0.0
    %1626 = vmatpush1.msra.mxu0 0.0
    %1627 = vmatprep.subr.mxu0 0.0
    %1628 = vmatpush1.msra.mxu0 0.0
    %1629 = vmatprep.subr.mxu0 0.0
    %1630 = vmatpush1.msra.mxu0 0.0
    %1631 = vmatprep.subr.mxu0 0.0
    %1632 = vmatpush1.msra.mxu0 0.0
    %1633 = vmatprep.subr.mxu0 0.0
    %1634 = vmatpush1.msra.mxu0 0.0
    %1635 = vmatprep.subr.mxu0 0.0
    %1636 = vmatpush1.msra.mxu0 0.0
    %1637 = vmatprep.subr.mxu0 0.0
    %1638 = vmatpush1.msra.mxu0 0.0
    %1639 = vmatprep.subr.mxu0 0.0
    %1640 = vmatpush1.msra.mxu0 0.0
    %1641 = vmatprep.mubr.f32.mxu0 0.0
    %v1642 = vand.u32 %v1302, 4294901760
    %v1643 = vsub.f32 %v1302, %v1642
    %1644 = vmatmul.mubr.f32.gmra.mrb[0].mxu0 %v1643
    %v1645 = vpop.f32.mrb[0].mxu0
    %v1646 = vadd.f32 %v1542, %v1645
    %v1647 = vpop.f32.mrb[0].mxu0
    %1648 = vdwg.mxu0
    %1649 = vmatprep.subr.mxu0 0.0
    %v1650 = vand.u32 %v86, 4294901760
    %1651 = vmatpush1.msra.mxu0 %v1650
    %1652 = vmatprep.subr.mxu0 0.0
    %v1653 = vand.u32 %v87, 4294901760
    %1654 = vmatpush1.msra.mxu0 %v1653
    %1655 = vmatprep.subr.mxu0 0.0
    %v1656 = vand.u32 %v88, 4294901760
    %1657 = vmatpush1.msra.mxu0 %v1656
    %1658 = vmatprep.subr.mxu0 0.0
    %v1659 = vand.u32 %v89, 4294901760
    %1660 = vmatpush1.msra.mxu0 %v1659
    %1661 = vmatprep.subr.mxu0 0.0
    %v1662 = vand.u32 %v90, 4294901760
    %1663 = vmatpush1.msra.mxu0 %v1662
    %1664 = vmatprep.subr.mxu0 0.0
    %v1665 = vand.u32 %v91, 4294901760
    %1666 = vmatpush1.msra.mxu0 %v1665
    %1667 = vmatprep.subr.mxu0 0.0
    %v1668 = vand.u32 %v92, 4294901760
    %1669 = vmatpush1.msra.mxu0 %v1668
    %1670 = vmatprep.subr.mxu0 0.0
    %v1671 = vand.u32 %v93, 4294901760
    %1672 = vmatpush1.msra.mxu0 %v1671
    %1673 = vmatprep.subr.mxu0 0.0
    %v1674 = vand.u32 %v94, 4294901760
    %1675 = vmatpush1.msra.mxu0 %v1674
    %1676 = vmatprep.subr.mxu0 0.0
    %v1677 = vand.u32 %v95, 4294901760
    %1678 = vmatpush1.msra.mxu0 %v1677
    %1679 = vmatprep.subr.mxu0 0.0
    %v1680 = vand.u32 %v96, 4294901760
    %1681 = vmatpush1.msra.mxu0 %v1680
    %1682 = vmatprep.subr.mxu0 0.0
    %v1683 = vand.u32 %v97, 4294901760
    %1684 = vmatpush1.msra.mxu0 %v1683
    %1685 = vmatprep.subr.mxu0 0.0
    %v1686 = vand.u32 %v98, 4294901760
    %1687 = vmatpush1.msra.mxu0 %v1686
    %1688 = vmatprep.subr.mxu0 0.0
    %v1689 = vand.u32 %v99, 4294901760
    %1690 = vmatpush1.msra.mxu0 %v1689
    %1691 = vmatprep.subr.mxu0 0.0
    %v1692 = vand.u32 %v100, 4294901760
    %1693 = vmatpush1.msra.mxu0 %v1692
    %1694 = vmatprep.subr.mxu0 0.0
    %v1695 = vand.u32 %v101, 4294901760
    %1696 = vmatpush1.msra.mxu0 %v1695
    %1697 = vmatprep.subr.mxu0 0.0
    %1698 = vmatpush1.msra.mxu0 0.0
    %1699 = vmatprep.subr.mxu0 0.0
    %1700 = vmatpush1.msra.mxu0 0.0
    %1701 = vmatprep.subr.mxu0 0.0
    %1702 = vmatpush1.msra.mxu0 0.0
    %1703 = vmatprep.subr.mxu0 0.0
    %1704 = vmatpush1.msra.mxu0 0.0
    %1705 = vmatprep.subr.mxu0 0.0
    %1706 = vmatpush1.msra.mxu0 0.0
    %1707 = vmatprep.subr.mxu0 0.0
    %1708 = vmatpush1.msra.mxu0 0.0
    %1709 = vmatprep.subr.mxu0 0.0
    %1710 = vmatpush1.msra.mxu0 0.0
    %1711 = vmatprep.subr.mxu0 0.0
    %1712 = vmatpush1.msra.mxu0 0.0
    %1713 = vmatprep.subr.mxu0 0.0
    %1714 = vmatpush1.msra.mxu0 0.0
    %1715 = vmatprep.subr.mxu0 0.0
    %1716 = vmatpush1.msra.mxu0 0.0
    %1717 = vmatprep.subr.mxu0 0.0
    %1718 = vmatpush1.msra.mxu0 0.0
    %1719 = vmatprep.subr.mxu0 0.0
    %1720 = vmatpush1.msra.mxu0 0.0
    %1721 = vmatprep.subr.mxu0 0.0
    %1722 = vmatpush1.msra.mxu0 0.0
    %1723 = vmatprep.subr.mxu0 0.0
    %1724 = vmatpush1.msra.mxu0 0.0
    %1725 = vmatprep.subr.mxu0 0.0
    %1726 = vmatpush1.msra.mxu0 0.0
    %1727 = vmatprep.subr.mxu0 0.0
    %1728 = vmatpush1.msra.mxu0 0.0
    %1729 = vmatprep.mubr.f32.mxu0 0.0
    %v1730 = vand.u32 %v1302, 4294901760
    %v1731 = vsub.f32 %v1302, %v1730
    %v1732 = vand.u32 %v1731, 4294901760
    %1733 = vmatmul.mubr.f32.gmra.mrb[0].mxu0 %v1732
    %v1734 = vpop.f32.mrb[0].mxu0
    %v1735 = vadd.f32 %v1646, %v1734
    %v1736 = vpop.f32.mrb[0].mxu0
    %1737 = vdwg.mxu0
    %1738 = vmatprep.subr.mxu0 0.0
    %v1739 = vand.u32 %v86, 4294901760
    %v1740 = vsub.f32 %v86, %v1739
    %v1741 = vand.u32 %v1740, 4294901760
    %1742 = vmatpush1.msra.mxu0 %v1741
    %1743 = vmatprep.subr.mxu0 0.0
    %v1744 = vand.u32 %v87, 4294901760
    %v1745 = vsub.f32 %v87, %v1744
    %v1746 = vand.u32 %v1745, 4294901760
    %1747 = vmatpush1.msra.mxu0 %v1746
    %1748 = vmatprep.subr.mxu0 0.0
    %v1749 = vand.u32 %v88, 4294901760
    %v1750 = vsub.f32 %v88, %v1749
    %v1751 = vand.u32 %v1750, 4294901760
    %1752 = vmatpush1.msra.mxu0 %v1751
    %1753 = vmatprep.subr.mxu0 0.0
    %v1754 = vand.u32 %v89, 4294901760
    %v1755 = vsub.f32 %v89, %v1754
    %v1756 = vand.u32 %v1755, 4294901760
    %1757 = vmatpush1.msra.mxu0 %v1756
    %1758 = vmatprep.subr.mxu0 0.0
    %v1759 = vand.u32 %v90, 4294901760
    %v1760 = vsub.f32 %v90, %v1759
    %v1761 = vand.u32 %v1760, 4294901760
    %1762 = vmatpush1.msra.mxu0 %v1761
    %1763 = vmatprep.subr.mxu0 0.0
    %v1764 = vand.u32 %v91, 4294901760
    %v1765 = vsub.f32 %v91, %v1764
    %v1766 = vand.u32 %v1765, 4294901760
    %1767 = vmatpush1.msra.mxu0 %v1766
    %1768 = vmatprep.subr.mxu0 0.0
    %v1769 = vand.u32 %v92, 4294901760
    %v1770 = vsub.f32 %v92, %v1769
    %v1771 = vand.u32 %v1770, 4294901760
    %1772 = vmatpush1.msra.mxu0 %v1771
    %1773 = vmatprep.subr.mxu0 0.0
    %v1774 = vand.u32 %v93, 4294901760
    %v1775 = vsub.f32 %v93, %v1774
    %v1776 = vand.u32 %v1775, 4294901760
    %1777 = vmatpush1.msra.mxu0 %v1776
    %1778 = vmatprep.subr.mxu0 0.0
    %v1779 = vand.u32 %v94, 4294901760
    %v1780 = vsub.f32 %v94, %v1779
    %v1781 = vand.u32 %v1780, 4294901760
    %1782 = vmatpush1.msra.mxu0 %v1781
    %1783 = vmatprep.subr.mxu0 0.0
    %v1784 = vand.u32 %v95, 4294901760
    %v1785 = vsub.f32 %v95, %v1784
    %v1786 = vand.u32 %v1785, 4294901760
    %1787 = vmatpush1.msra.mxu0 %v1786
    %1788 = vmatprep.subr.mxu0 0.0
    %v1789 = vand.u32 %v96, 4294901760
    %v1790 = vsub.f32 %v96, %v1789
    %v1791 = vand.u32 %v1790, 4294901760
    %1792 = vmatpush1.msra.mxu0 %v1791
    %1793 = vmatprep.subr.mxu0 0.0
    %v1794 = vand.u32 %v97, 4294901760
    %v1795 = vsub.f32 %v97, %v1794
    %v1796 = vand.u32 %v1795, 4294901760
    %1797 = vmatpush1.msra.mxu0 %v1796
    %1798 = vmatprep.subr.mxu0 0.0
    %v1799 = vand.u32 %v98, 4294901760
    %v1800 = vsub.f32 %v98, %v1799
    %v1801 = vand.u32 %v1800, 4294901760
    %1802 = vmatpush1.msra.mxu0 %v1801
    %1803 = vmatprep.subr.mxu0 0.0
    %v1804 = vand.u32 %v99, 4294901760
    %v1805 = vsub.f32 %v99, %v1804
    %v1806 = vand.u32 %v1805, 4294901760
    %1807 = vmatpush1.msra.mxu0 %v1806
    %1808 = vmatprep.subr.mxu0 0.0
    %v1809 = vand.u32 %v100, 4294901760
    %v1810 = vsub.f32 %v100, %v1809
    %v1811 = vand.u32 %v1810, 4294901760
    %1812 = vmatpush1.msra.mxu0 %v1811
    %1813 = vmatprep.subr.mxu0 0.0
    %v1814 = vand.u32 %v101, 4294901760
    %v1815 = vsub.f32 %v101, %v1814
    %v1816 = vand.u32 %v1815, 4294901760
    %1817 = vmatpush1.msra.mxu0 %v1816
    %1818 = vmatprep.subr.mxu0 0.0
    %1819 = vmatpush1.msra.mxu0 0.0
    %1820 = vmatprep.subr.mxu0 0.0
    %1821 = vmatpush1.msra.mxu0 0.0
    %1822 = vmatprep.subr.mxu0 0.0
    %1823 = vmatpush1.msra.mxu0 0.0
    %1824 = vmatprep.subr.mxu0 0.0
    %1825 = vmatpush1.msra.mxu0 0.0
    %1826 = vmatprep.subr.mxu0 0.0
    %1827 = vmatpush1.msra.mxu0 0.0
    %1828 = vmatprep.subr.mxu0 0.0
    %1829 = vmatpush1.msra.mxu0 0.0
    %1830 = vmatprep.subr.mxu0 0.0
    %1831 = vmatpush1.msra.mxu0 0.0
    %1832 = vmatprep.subr.mxu0 0.0
    %1833 = vmatpush1.msra.mxu0 0.0
    %1834 = vmatprep.subr.mxu0 0.0
    %1835 = vmatpush1.msra.mxu0 0.0
    %1836 = vmatprep.subr.mxu0 0.0
    %1837 = vmatpush1.msra.mxu0 0.0
    %1838 = vmatprep.subr.mxu0 0.0
    %1839 = vmatpush1.msra.mxu0 0.0
    %1840 = vmatprep.subr.mxu0 0.0
    %1841 = vmatpush1.msra.mxu0 0.0
    %1842 = vmatprep.subr.mxu0 0.0
    %1843 = vmatpush1.msra.mxu0 0.0
    %1844 = vmatprep.subr.mxu0 0.0
    %1845 = vmatpush1.msra.mxu0 0.0
    %1846 = vmatprep.subr.mxu0 0.0
    %1847 = vmatpush1.msra.mxu0 0.0
    %1848 = vmatprep.subr.mxu0 0.0
    %1849 = vmatpush1.msra.mxu0 0.0
    %1850 = vmatprep.mubr.f32.mxu0 0.0
    %v1851 = vand.u32 %v1302, 4294901760
    %1852 = vmatmul.mubr.f32.gmra.mrb[0].mxu0 %v1851
    %v1853 = vpop.f32.mrb[0].mxu0
    %v1854 = vadd.f32 %v1735, %v1853
    %v1855 = vpop.f32.mrb[0].mxu0
    %1856 = vdwg.mxu0
    %1857 = vmatprep.subr.mxu0 0.0
    %v1858 = vand.u32 %v86, 4294901760
    %1859 = vmatpush1.msra.mxu0 %v1858
    %1860 = vmatprep.subr.mxu0 0.0
    %v1861 = vand.u32 %v87, 4294901760
    %1862 = vmatpush1.msra.mxu0 %v1861
    %1863 = vmatprep.subr.mxu0 0.0
    %v1864 = vand.u32 %v88, 4294901760
    %1865 = vmatpush1.msra.mxu0 %v1864
    %1866 = vmatprep.subr.mxu0 0.0
    %v1867 = vand.u32 %v89, 4294901760
    %1868 = vmatpush1.msra.mxu0 %v1867
    %1869 = vmatprep.subr.mxu0 0.0
    %v1870 = vand.u32 %v90, 4294901760
    %1871 = vmatpush1.msra.mxu0 %v1870
    %1872 = vmatprep.subr.mxu0 0.0
    %v1873 = vand.u32 %v91, 4294901760
    %1874 = vmatpush1.msra.mxu0 %v1873
    %1875 = vmatprep.subr.mxu0 0.0
    %v1876 = vand.u32 %v92, 4294901760
    %1877 = vmatpush1.msra.mxu0 %v1876
    %1878 = vmatprep.subr.mxu0 0.0
    %v1879 = vand.u32 %v93, 4294901760
    %1880 = vmatpush1.msra.mxu0 %v1879
    %1881 = vmatprep.subr.mxu0 0.0
    %v1882 = vand.u32 %v94, 4294901760
    %1883 = vmatpush1.msra.mxu0 %v1882
    %1884 = vmatprep.subr.mxu0 0.0
    %v1885 = vand.u32 %v95, 4294901760
    %1886 = vmatpush1.msra.mxu0 %v1885
    %1887 = vmatprep.subr.mxu0 0.0
    %v1888 = vand.u32 %v96, 4294901760
    %1889 = vmatpush1.msra.mxu0 %v1888
    %1890 = vmatprep.subr.mxu0 0.0
    %v1891 = vand.u32 %v97, 4294901760
    %1892 = vmatpush1.msra.mxu0 %v1891
    %1893 = vmatprep.subr.mxu0 0.0
    %v1894 = vand.u32 %v98, 4294901760
    %1895 = vmatpush1.msra.mxu0 %v1894
    %1896 = vmatprep.subr.mxu0 0.0
    %v1897 = vand.u32 %v99, 4294901760
    %1898 = vmatpush1.msra.mxu0 %v1897
    %1899 = vmatprep.subr.mxu0 0.0
    %v1900 = vand.u32 %v100, 4294901760
    %1901 = vmatpush1.msra.mxu0 %v1900
    %1902 = vmatprep.subr.mxu0 0.0
    %v1903 = vand.u32 %v101, 4294901760
    %1904 = vmatpush1.msra.mxu0 %v1903
    %1905 = vmatprep.subr.mxu0 0.0
    %1906 = vmatpush1.msra.mxu0 0.0
    %1907 = vmatprep.subr.mxu0 0.0
    %1908 = vmatpush1.msra.mxu0 0.0
    %1909 = vmatprep.subr.mxu0 0.0
    %1910 = vmatpush1.msra.mxu0 0.0
    %1911 = vmatprep.subr.mxu0 0.0
    %1912 = vmatpush1.msra.mxu0 0.0
    %1913 = vmatprep.subr.mxu0 0.0
    %1914 = vmatpush1.msra.mxu0 0.0
    %1915 = vmatprep.subr.mxu0 0.0
    %1916 = vmatpush1.msra.mxu0 0.0
    %1917 = vmatprep.subr.mxu0 0.0
    %1918 = vmatpush1.msra.mxu0 0.0
    %1919 = vmatprep.subr.mxu0 0.0
    %1920 = vmatpush1.msra.mxu0 0.0
    %1921 = vmatprep.subr.mxu0 0.0
    %1922 = vmatpush1.msra.mxu0 0.0
    %1923 = vmatprep.subr.mxu0 0.0
    %1924 = vmatpush1.msra.mxu0 0.0
    %1925 = vmatprep.subr.mxu0 0.0
    %1926 = vmatpush1.msra.mxu0 0.0
    %1927 = vmatprep.subr.mxu0 0.0
    %1928 = vmatpush1.msra.mxu0 0.0
    %1929 = vmatprep.subr.mxu0 0.0
    %1930 = vmatpush1.msra.mxu0 0.0
    %1931 = vmatprep.subr.mxu0 0.0
    %1932 = vmatpush1.msra.mxu0 0.0
    %1933 = vmatprep.subr.mxu0 0.0
    %1934 = vmatpush1.msra.mxu0 0.0
    %1935 = vmatprep.subr.mxu0 0.0
    %1936 = vmatpush1.msra.mxu0 0.0
    %1937 = vmatprep.mubr.f32.mxu0 0.0
    %v1938 = vand.u32 %v1302, 4294901760
    %1939 = vmatmul.mubr.f32.gmra.mrb[0].mxu0 %v1938
    %v1940 = vpop.f32.mrb[0].mxu0
    %v1941 = vadd.f32 %v1854, %v1940
    %v1942 = vpop.f32.mrb[0].mxu0
    %1943 = vdwg.mxu0
    %v1944 = vmul.f32 %v1941, 0.001953125
    %v1945 = vadd.f32 %v1944, 1e-05
    %v1946 = vrsqrt.pop %v1945
    %v1947 = vmul.f32 %v629, %v1946
    %v1949 = vlaneseq
    %v1950 = vshrl.u32 %v1949, 7
    %v1951 = vsub.s32 0, %v1950
    %v1952 = vrot.slane %v1947, %v1951
    %v1954 = vmul.f32 %v1286, %v1952
    %v1955 = vmul.f32 %v1287, %v1952
    %v1956 = vmul.f32 %v1288, %v1952
    %v1957 = vmul.f32 %v1289, %v1952
    %v1959 = vlaneseq
    %v1960 = vshrl.u32 %v1959, 7
    %v1961 = vsub.s32 0, %v1960
    %v1962 = vrot.slane %v630, %v1961
    %v1964 = vadd.f32 %v1954, %v1962
    %v1965 = vadd.f32 %v1955, %v1962
    %v1966 = vadd.f32 %v1956, %v1962
    %v1967 = vadd.f32 %v1957, %v1962
    %v1968 = vmax.f32 %v1964, 0.0
    %v1969 = vmax.f32 %v1965, 0.0
    %v1970 = vmax.f32 %v1966, 0.0
    %v1971 = vmax.f32 %v1967, 0.0
    %v1972 = vpack.c.bf16 %v1969, %v1968
    %v1973 = vpack.c.bf16 %v1971, %v1970
    %v1976 = vunpack.c.l.b16 %v1972
    %v1977 = vunpack.c.h.b16 %v1972
    %v1978 = vunpack.c.l.b16 %v1973
    %v1979 = vunpack.c.h.b16 %v1973
    %v1980 = vpack.c.b16 %v1976, %v1976
    %v1981 = vpack.c.b16 %v1977, %v1977
    %v1982 = vpack.c.b16 %v1978, %v1978
    %v1983 = vpack.c.b16 %v1979, %v1979
    %v1984 = vrot.slane %v1980, 7
    %v1985 = vrot.slane %v1984, 4
    %v1986 = vrot.slane %v1981, 7
    %v1987 = vsel %vm124, %v1985, %v1986
    %v1988 = vrot.slane %v1986, 4
    %v1989 = vrot.slane %v1982, 7
    %v1990 = vrot.slane %v1989, 4
    %v1991 = vrot.slane %v1983, 7
    %v1992 = vsel %vm124, %v1990, %v1991
    %v1993 = vrot.slane %v1991, 4
    %2000 = vst [vmem:[#allocation2] sm:$0xe] %v1984
    %2001 = vst [vmem:[#allocation2 + $0x4] sm:$0xf] %v1987
    %2002 = vst [vmem:[#allocation2 + $0x8] sm:$0x1] %v1988
    %2003 = vst [vmem:[#allocation2 + $0xc] sm:$0xe] %v1989
    %2004 = vst [vmem:[#allocation2 + $0x10] sm:$0xf] %v1992
    %2005 = vst [vmem:[#allocation2 + $0x14] sm:$0x1] %v1993
    %v2006 = vld [vmem:[#allocation2] sm:$0xf]
    %v2007 = vld [vmem:[#allocation2 + $0x4] sm:$0xf]
    %v2008 = vld [vmem:[#allocation2 + $0x8] sm:$0x3]
    %v2009 = vld [vmem:[#allocation2 + $0xc] sm:$0xf]
    %v2010 = vld [vmem:[#allocation2 + $0x10] sm:$0xf]
    %v2011 = vld [vmem:[#allocation2 + $0x14] sm:$0x3]
    %v2013 = vshrl.u32 %v2006, 16
    %v2015 = vrot.slane %v2013, 4
    %v2016 = vshll.u32 %v2006, 16
    %v2018 = vrot.slane %v2016, 5
    %v2019 = vor.u32 %v2015, %v2018
    %v2020 = vrot.slane %v2019, 4
    %v2022 = vshll.u32 %v2007, 16
    %v2024 = vrot.slane %v2022, 5
    %v2025 = vsel %vm155, %v2020, %v2024
    %v2026 = vshrl.u32 %v2007, 16
    %v2028 = vrot.slane %v2026, 4
    %v2029 = vor.u32 %v2028, %v2024
    %v2030 = vrot.slane %v2029, 4
    %v2032 = vshll.u32 %v2008, 16
    %v2034 = vrot.slane %v2032, 5
    %v2035 = vsel %vm155, %v2030, %v2034
    %v2037 = vshrl.u32 %v2009, 16
    %v2039 = vrot.slane %v2037, 4
    %v2040 = vshll.u32 %v2009, 16
    %v2042 = vrot.slane %v2040, 5
    %v2043 = vor.u32 %v2039, %v2042
    %v2044 = vrot.slane %v2043, 4
    %v2046 = vshll.u32 %v2010, 16
    %v2048 = vrot.slane %v2046, 5
    %v2049 = vsel %vm155, %v2044, %v2048
    %v2050 = vshrl.u32 %v2010, 16
    %v2052 = vrot.slane %v2050, 4
    %v2053 = vor.u32 %v2052, %v2048
    %v2054 = vrot.slane %v2053, 4
    %v2056 = vshll.u32 %v2011, 16
    %v2058 = vrot.slane %v2056, 5
    %v2059 = vsel %vm155, %v2054, %v2058
    %v2060 = vld [vmem:[#allocation8] sm:$0xf]
    %v2061 = vld [vmem:[#allocation8 + $0x4] sm:$0xf]
    %v2062 = vld [vmem:[#allocation8 + $0x8] sm:$0xf]
    %v2063 = vld [vmem:[#allocation8 + $0xc] sm:$0xf]
    %v2064 = vld [vmem:[#allocation8 + $0x10] sm:$0xf]
    %v2065 = vld [vmem:[#allocation8 + $0x14] sm:$0xf]
    %v2066 = vld [vmem:[#allocation8 + $0x18] sm:$0xf]
    %v2067 = vld [vmem:[#allocation8 + $0x1c] sm:$0xf]
    %v2068 = vld [vmem:[#allocation8 + $0x20] sm:$0xf]
    %v2069 = vld [vmem:[#allocation8 + $0x24] sm:$0xf]
    %v2070 = vld [vmem:[#allocation8 + $0x28] sm:$0xf]
    %v2071 = vld [vmem:[#allocation8 + $0x2c] sm:$0xf]
    %v2072 = vld [vmem:[#allocation8 + $0x30] sm:$0xf]
    %v2073 = vld [vmem:[#allocation8 + $0x34] sm:$0xf]
    %v2074 = vld [vmem:[#allocation8 + $0x38] sm:$0xf]
    %v2075 = vld [vmem:[#allocation8 + $0x3c] sm:$0xf]
    %v2082 = vrot.slane %v2006, 5
    %v2083 = vrot.slane %v2082, 4
    %v2084 = vrot.slane %v2007, 5
    %v2085 = vsel %vm228, %v2083, %v2084
    %v2086 = vrot.slane %v2084, 4
    %v2087 = vrot.slane %v2008, 5
    %v2088 = vsel %vm228, %v2086, %v2087
    %v2089 = vrot.slane %v2009, 5
    %v2090 = vrot.slane %v2089, 4
    %v2091 = vrot.slane %v2010, 5
    %v2092 = vsel %vm228, %v2090, %v2091
    %v2093 = vrot.slane %v2091, 4
    %v2094 = vrot.slane %v2011, 5
    %v2095 = vsel %vm228, %v2093, %v2094
    %s2096 = scalar_lea.vmem [#allocation8], 64
    %v2097 = vld [vmem:[%s2096] sm:$0xf]
    %v2098 = vld [vmem:[%s2096 + $0x4] sm:$0xf]
    %v2099 = vld [vmem:[%s2096 + $0x8] sm:$0xf]
    %v2100 = vld [vmem:[%s2096 + $0xc] sm:$0xf]
    %v2101 = vld [vmem:[%s2096 + $0x10] sm:$0xf]
    %v2102 = vld [vmem:[%s2096 + $0x14] sm:$0xf]
    %v2103 = vld [vmem:[%s2096 + $0x18] sm:$0xf]
    %v2104 = vld [vmem:[%s2096 + $0x1c] sm:$0xf]
    %v2105 = vld [vmem:[%s2096 + $0x20] sm:$0xf]
    %v2106 = vld [vmem:[%s2096 + $0x24] sm:$0xf]
    %v2107 = vld [vmem:[%s2096 + $0x28] sm:$0xf]
    %v2108 = vld [vmem:[%s2096 + $0x2c] sm:$0xf]
    %v2109 = vld [vmem:[%s2096 + $0x30] sm:$0xf]
    %v2110 = vld [vmem:[%s2096 + $0x34] sm:$0xf]
    %v2111 = vld [vmem:[%s2096 + $0x38] sm:$0xf]
    %v2112 = vld [vmem:[%s2096 + $0x3c] sm:$0xf]
    %v2113 = vunpack.c.l.b16 %v2085
    %v2114 = vunpack.c.l.b16 %v2088
    %v2115 = vunpack.c.l.b16 %v2092
    %v2116 = vunpack.c.l.b16 %v2095
    %v2117 = vpack.c.b16 %v2114, %v2113
    %v2118 = vpack.c.b16 %v2116, %v2115
    %v2137 = vunpack.c.l.b16 %v2097
    %v2138 = vunpack.c.l.b16 %v2098
    %v2139 = vunpack.c.l.b16 %v2099
    %v2140 = vunpack.c.l.b16 %v2100
    %v2141 = vunpack.c.l.b16 %v2101
    %v2142 = vunpack.c.l.b16 %v2102
    %v2143 = vunpack.c.l.b16 %v2103
    %v2144 = vunpack.c.l.b16 %v2104
    %v2145 = vunpack.c.l.b16 %v2105
    %v2146 = vunpack.c.l.b16 %v2106
    %v2147 = vunpack.c.l.b16 %v2107
    %v2148 = vunpack.c.l.b16 %v2108
    %v2149 = vunpack.c.l.b16 %v2109
    %v2150 = vunpack.c.l.b16 %v2110
    %v2151 = vunpack.c.l.b16 %v2111
    %v2152 = vunpack.c.l.b16 %v2112
    %v2153 = vpack.c.b16 %v2138, %v2137
    %v2154 = vpack.c.b16 %v2140, %v2139
    %v2155 = vpack.c.b16 %v2142, %v2141
    %v2156 = vpack.c.b16 %v2144, %v2143
    %v2157 = vpack.c.b16 %v2146, %v2145
    %v2158 = vpack.c.b16 %v2148, %v2147
    %v2159 = vpack.c.b16 %v2150, %v2149
    %v2160 = vpack.c.b16 %v2152, %v2151
    %2169 = vmatprep.subr.bf16.mxu0 0
    %2170 = vmatpush1.bf16.msra.mxu0 %v2153
    %2171 = vmatprep.subr.bf16.mxu0 0
    %2172 = vmatpush1.bf16.msra.mxu0 %v2154
    %2173 = vmatprep.subr.bf16.mxu0 0
    %2174 = vmatpush1.bf16.msra.mxu0 %v2155
    %2175 = vmatprep.subr.bf16.mxu0 0
    %2176 = vmatpush1.bf16.msra.mxu0 %v2156
    %2177 = vmatprep.subr.bf16.mxu0 0
    %2178 = vmatpush1.bf16.msra.mxu0 %v2157
    %2179 = vmatprep.subr.bf16.mxu0 0
    %2180 = vmatpush1.bf16.msra.mxu0 %v2158
    %2181 = vmatprep.subr.bf16.mxu0 0
    %2182 = vmatpush1.bf16.msra.mxu0 %v2159
    %2183 = vmatprep.subr.bf16.mxu0 0
    %2184 = vmatpush1.bf16.msra.mxu0 %v2160
    %2185 = vmatprep.subr.bf16.mxu0 0
    %2186 = vmatpush1.bf16.msra.mxu0 0
    %2187 = vmatprep.subr.bf16.mxu0 0
    %2188 = vmatpush1.bf16.msra.mxu0 0
    %2189 = vmatprep.subr.bf16.mxu0 0
    %2190 = vmatpush1.bf16.msra.mxu0 0
    %2191 = vmatprep.subr.bf16.mxu0 0
    %2192 = vmatpush1.bf16.msra.mxu0 0
    %2193 = vmatprep.subr.bf16.mxu0 0
    %2194 = vmatpush1.bf16.msra.mxu0 0
    %2195 = vmatprep.subr.bf16.mxu0 0
    %2196 = vmatpush1.bf16.msra.mxu0 0
    %2197 = vmatprep.subr.bf16.mxu0 0
    %2198 = vmatpush1.bf16.msra.mxu0 0
    %2199 = vmatprep.subr.bf16.mxu0 0
    %2200 = vmatpush1.bf16.msra.mxu0 0
    %2201 = vmatprep.mubr.bf16.mxu0 0
    %2202 = vmatmul.mubr.bf16.gmra.mrb[0].mxu0 %v2117
    %v2203 = vpop.f32.mrb[0].mxu0
    %v2204 = vadd.f32 0.0, %v2203
    %v2205 = vpop.f32.mrb[0].mxu0
    %v2206 = vpop.f32.mrb[0].mxu0
    %v2207 = vadd.f32 0.0, %v2206
    %v2208 = vpop.f32.mrb[0].mxu0
    %2209 = vmatprep.mubr.bf16.mxu0 0
    %2210 = vmatmul.mubr.bf16.gmra.mrb[0].mxu0 %v2118
    %v2211 = vpop.f32.mrb[0].mxu0
    %v2212 = vadd.f32 0.0, %v2211
    %v2213 = vpop.f32.mrb[0].mxu0
    %v2214 = vpop.f32.mrb[0].mxu0
    %v2215 = vadd.f32 0.0, %v2214
    %v2216 = vpop.f32.mrb[0].mxu0
    %2217 = vdwg.mxu0
    %v2218 = vunpack.c.l.b16 %v2025
    %v2219 = vunpack.c.l.b16 %v2035
    %v2220 = vunpack.c.l.b16 %v2049
    %v2221 = vunpack.c.l.b16 %v2059
    %v2222 = vpack.c.b16 %v2219, %v2218
    %v2223 = vpack.c.b16 %v2221, %v2220
    %v2242 = vunpack.c.l.b16 %v2060
    %v2243 = vunpack.c.l.b16 %v2061
    %v2244 = vunpack.c.l.b16 %v2062
    %v2245 = vunpack.c.l.b16 %v2063
    %v2246 = vunpack.c.l.b16 %v2064
    %v2247 = vunpack.c.l.b16 %v2065
    %v2248 = vunpack.c.l.b16 %v2066
    %v2249 = vunpack.c.l.b16 %v2067
    %v2250 = vunpack.c.l.b16 %v2068
    %v2251 = vunpack.c.l.b16 %v2069
    %v2252 = vunpack.c.l.b16 %v2070
    %v2253 = vunpack.c.l.b16 %v2071
    %v2254 = vunpack.c.l.b16 %v2072
    %v2255 = vunpack.c.l.b16 %v2073
    %v2256 = vunpack.c.l.b16 %v2074
    %v2257 = vunpack.c.l.b16 %v2075
    %v2258 = vpack.c.b16 %v2243, %v2242
    %v2259 = vpack.c.b16 %v2245, %v2244
    %v2260 = vpack.c.b16 %v2247, %v2246
    %v2261 = vpack.c.b16 %v2249, %v2248
    %v2262 = vpack.c.b16 %v2251, %v2250
    %v2263 = vpack.c.b16 %v2253, %v2252
    %v2264 = vpack.c.b16 %v2255, %v2254
    %v2265 = vpack.c.b16 %v2257, %v2256
    %2274 = vmatprep.subr.bf16.mxu0 0
    %2275 = vmatpush1.bf16.msra.mxu0 %v2258
    %2276 = vmatprep.subr.bf16.mxu0 0
    %2277 = vmatpush1.bf16.msra.mxu0 %v2259
    %2278 = vmatprep.subr.bf16.mxu0 0
    %2279 = vmatpush1.bf16.msra.mxu0 %v2260
    %2280 = vmatprep.subr.bf16.mxu0 0
    %2281 = vmatpush1.bf16.msra.mxu0 %v2261
    %2282 = vmatprep.subr.bf16.mxu0 0
    %2283 = vmatpush1.bf16.msra.mxu0 %v2262
    %2284 = vmatprep.subr.bf16.mxu0 0
    %2285 = vmatpush1.bf16.msra.mxu0 %v2263
    %2286 = vmatprep.subr.bf16.mxu0 0
    %2287 = vmatpush1.bf16.msra.mxu0 %v2264
    %2288 = vmatprep.subr.bf16.mxu0 0
    %2289 = vmatpush1.bf16.msra.mxu0 %v2265
    %2290 = vmatprep.subr.bf16.mxu0 0
    %2291 = vmatpush1.bf16.msra.mxu0 0
    %2292 = vmatprep.subr.bf16.mxu0 0
    %2293 = vmatpush1.bf16.msra.mxu0 0
    %2294 = vmatprep.subr.bf16.mxu0 0
    %2295 = vmatpush1.bf16.msra.mxu0 0
    %2296 = vmatprep.subr.bf16.mxu0 0
    %2297 = vmatpush1.bf16.msra.mxu0 0
    %2298 = vmatprep.subr.bf16.mxu0 0
    %2299 = vmatpush1.bf16.msra.mxu0 0
    %2300 = vmatprep.subr.bf16.mxu0 0
    %2301 = vmatpush1.bf16.msra.mxu0 0
    %2302 = vmatprep.subr.bf16.mxu0 0
    %2303 = vmatpush1.bf16.msra.mxu0 0
    %2304 = vmatprep.subr.bf16.mxu0 0
    %2305 = vmatpush1.bf16.msra.mxu0 0
    %2306 = vmatprep.mubr.bf16.mxu0 0
    %2307 = vmatmul.mubr.bf16.gmra.mrb[0].mxu0 %v2222
    %v2308 = vpop.f32.mrb[0].mxu0
    %v2309 = vadd.f32 %v2204, %v2308
    %v2310 = vpop.f32.mrb[0].mxu0
    %v2311 = vpop.f32.mrb[0].mxu0
    %v2312 = vadd.f32 %v2207, %v2311
    %v2313 = vpop.f32.mrb[0].mxu0
    %2314 = vmatprep.mubr.bf16.mxu0 0
    %2315 = vmatmul.mubr.bf16.gmra.mrb[0].mxu0 %v2223
    %v2316 = vpop.f32.mrb[0].mxu0
    %v2317 = vadd.f32 %v2212, %v2316
    %v2318 = vpop.f32.mrb[0].mxu0
    %v2319 = vpop.f32.mrb[0].mxu0
    %v2320 = vadd.f32 %v2215, %v2319
    %v2321 = vpop.f32.mrb[0].mxu0
    %2322 = vdwg.mxu0
    %v2323 = vrot.slane %v2013, 5
    %v2324 = vrot.slane %v2016, 6
    %v2325 = vor.u32 %v2323, %v2324
    %v2326 = vrot.slane %v2325, 4
    %v2327 = vrot.slane %v2026, 5
    %v2328 = vrot.slane %v2022, 6
    %v2329 = vor.u32 %v2327, %v2328
    %v2330 = vsel %vm472, %v2326, %v2329
    %v2331 = vrot.slane %v2329, 4
    %v2332 = vshrl.u32 %v2008, 16
    %v2334 = vrot.slane %v2332, 5
    %v2335 = vrot.slane %v2032, 6
    %v2336 = vor.u32 %v2334, %v2335
    %v2337 = vsel %vm472, %v2331, %v2336
    %v2338 = vrot.slane %v2037, 5
    %v2339 = vrot.slane %v2040, 6
    %v2340 = vor.u32 %v2338, %v2339
    %v2341 = vrot.slane %v2340, 4
    %v2342 = vrot.slane %v2050, 5
    %v2343 = vrot.slane %v2046, 6
    %v2344 = vor.u32 %v2342, %v2343
    %v2345 = vsel %vm472, %v2341, %v2344
    %v2346 = vrot.slane %v2344, 4
    %v2347 = vshrl.u32 %v2011, 16
    %v2349 = vrot.slane %v2347, 5
    %v2350 = vrot.slane %v2056, 6
    %v2351 = vor.u32 %v2349, %v2350
    %v2352 = vsel %vm472, %v2346, %v2351
    %s2353 = scalar_lea.vmem [#allocation8], 128
    %v2354 = vld [vmem:[%s2353] sm:$0xf]
    %v2355 = vld [vmem:[%s2353 + $0x4] sm:$0xf]
    %v2356 = vld [vmem:[%s2353 + $0x8] sm:$0xf]
    %v2357 = vld [vmem:[%s2353 + $0xc] sm:$0xf]
    %v2358 = vld [vmem:[%s2353 + $0x10] sm:$0xf]
    %v2359 = vld [vmem:[%s2353 + $0x14] sm:$0xf]
    %v2360 = vld [vmem:[%s2353 + $0x18] sm:$0xf]
    %v2361 = vld [vmem:[%s2353 + $0x1c] sm:$0xf]
    %v2362 = vld [vmem:[%s2353 + $0x20] sm:$0xf]
    %v2363 = vld [vmem:[%s2353 + $0x24] sm:$0xf]
    %v2364 = vld [vmem:[%s2353 + $0x28] sm:$0xf]
    %v2365 = vld [vmem:[%s2353 + $0x2c] sm:$0xf]
    %v2366 = vld [vmem:[%s2353 + $0x30] sm:$0xf]
    %v2367 = vld [vmem:[%s2353 + $0x34] sm:$0xf]
    %v2368 = vld [vmem:[%s2353 + $0x38] sm:$0xf]
    %v2369 = vld [vmem:[%s2353 + $0x3c] sm:$0xf]
    %v2370 = vunpack.c.l.b16 %v2330
    %v2371 = vunpack.c.l.b16 %v2337
    %v2372 = vunpack.c.l.b16 %v2345
    %v2373 = vunpack.c.l.b16 %v2352
    %v2374 = vpack.c.b16 %v2371, %v2370
    %v2375 = vpack.c.b16 %v2373, %v2372
    %v2394 = vunpack.c.l.b16 %v2354
    %v2395 = vunpack.c.l.b16 %v2355
    %v2396 = vunpack.c.l.b16 %v2356
    %v2397 = vunpack.c.l.b16 %v2357
    %v2398 = vunpack.c.l.b16 %v2358
    %v2399 = vunpack.c.l.b16 %v2359
    %v2400 = vunpack.c.l.b16 %v2360
    %v2401 = vunpack.c.l.b16 %v2361
    %v2402 = vunpack.c.l.b16 %v2362
    %v2403 = vunpack.c.l.b16 %v2363
    %v2404 = vunpack.c.l.b16 %v2364
    %v2405 = vunpack.c.l.b16 %v2365
    %v2406 = vunpack.c.l.b16 %v2366
    %v2407 = vunpack.c.l.b16 %v2367
    %v2408 = vunpack.c.l.b16 %v2368
    %v2409 = vunpack.c.l.b16 %v2369
    %v2410 = vpack.c.b16 %v2395, %v2394
    %v2411 = vpack.c.b16 %v2397, %v2396
    %v2412 = vpack.c.b16 %v2399, %v2398
    %v2413 = vpack.c.b16 %v2401, %v2400
    %v2414 = vpack.c.b16 %v2403, %v2402
    %v2415 = vpack.c.b16 %v2405, %v2404
    %v2416 = vpack.c.b16 %v2407, %v2406
    %v2417 = vpack.c.b16 %v2409, %v2408
    %2426 = vmatprep.subr.bf16.mxu0 0
    %2427 = vmatpush1.bf16.msra.mxu0 %v2410
    %2428 = vmatprep.subr.bf16.mxu0 0
    %2429 = vmatpush1.bf16.msra.mxu0 %v2411
    %2430 = vmatprep.subr.bf16.mxu0 0
    %2431 = vmatpush1.bf16.msra.mxu0 %v2412
    %2432 = vmatprep.subr.bf16.mxu0 0
    %2433 = vmatpush1.bf16.msra.mxu0 %v2413
    %2434 = vmatprep.subr.bf16.mxu0 0
    %2435 = vmatpush1.bf16.msra.mxu0 %v2414
    %2436 = vmatprep.subr.bf16.mxu0 0
    %2437 = vmatpush1.bf16.msra.mxu0 %v2415
    %2438 = vmatprep.subr.bf16.mxu0 0
    %2439 = vmatpush1.bf16.msra.mxu0 %v2416
    %2440 = vmatprep.subr.bf16.mxu0 0
    %2441 = vmatpush1.bf16.msra.mxu0 %v2417
    %2442 = vmatprep.subr.bf16.mxu0 0
    %2443 = vmatpush1.bf16.msra.mxu0 0
    %2444 = vmatprep.subr.bf16.mxu0 0
    %2445 = vmatpush1.bf16.msra.mxu0 0
    %2446 = vmatprep.subr.bf16.mxu0 0
    %2447 = vmatpush1.bf16.msra.mxu0 0
    %2448 = vmatprep.subr.bf16.mxu0 0
    %2449 = vmatpush1.bf16.msra.mxu0 0
    %2450 = vmatprep.subr.bf16.mxu0 0
    %2451 = vmatpush1.bf16.msra.mxu0 0
    %2452 = vmatprep.subr.bf16.mxu0 0
    %2453 = vmatpush1.bf16.msra.mxu0 0
    %2454 = vmatprep.subr.bf16.mxu0 0
    %2455 = vmatpush1.bf16.msra.mxu0 0
    %2456 = vmatprep.subr.bf16.mxu0 0
    %2457 = vmatpush1.bf16.msra.mxu0 0
    %2458 = vmatprep.mubr.bf16.mxu0 0
    %2459 = vmatmul.mubr.bf16.gmra.mrb[0].mxu0 %v2374
    %v2460 = vpop.f32.mrb[0].mxu0
    %v2461 = vadd.f32 0.0, %v2460
    %v2462 = vpop.f32.mrb[0].mxu0
    %v2463 = vpop.f32.mrb[0].mxu0
    %v2464 = vadd.f32 0.0, %v2463
    %v2465 = vpop.f32.mrb[0].mxu0
    %2466 = vmatprep.mubr.bf16.mxu0 0
    %2467 = vmatmul.mubr.bf16.gmra.mrb[0].mxu0 %v2375
    %v2468 = vpop.f32.mrb[0].mxu0
    %v2469 = vadd.f32 0.0, %v2468
    %v2470 = vpop.f32.mrb[0].mxu0
    %v2471 = vpop.f32.mrb[0].mxu0
    %v2472 = vadd.f32 0.0, %v2471
    %v2473 = vpop.f32.mrb[0].mxu0
    %2474 = vdwg.mxu0
    %v2475 = vadd.f32 %v2309, %v2461
    %v2476 = vadd.f32 %v2312, %v2464
    %v2477 = vadd.f32 %v2317, %v2469
    %v2478 = vadd.f32 %v2320, %v2472
    %v2479 = vld [vmem:[%s5] sm:$0x1]
    %v2480 = vld [vmem:[%s6] sm:$0x1]
    %v2481 = vadd.f32 %v2475, %v2476
    %v2482 = vadd.f32 %v2481, %v2477
    %v2483 = vadd.f32 %v2482, %v2478
    %v2484 = vrot.slane %v2483, 4
    %v2485 = vadd.f32 %v2483, %v2484
    %v2486 = vrot.slane %v2485, 2
    %v2487 = vadd.f32 %v2485, %v2486
    %v2488 = vrot.slane %v2487, 1
    %v2489 = vadd.f32 %v2487, %v2488
    %2490 = vmatprep.subr.mxu0 0.0
    %v2491 = vand.u32 %v86, 4294901760
    %2492 = vmatpush1.msra.mxu0 %v2491
    %2493 = vmatprep.subr.mxu0 0.0
    %v2494 = vand.u32 %v87, 4294901760
    %2495 = vmatpush1.msra.mxu0 %v2494
    %2496 = vmatprep.subr.mxu0 0.0
    %v2497 = vand.u32 %v88, 4294901760
    %2498 = vmatpush1.msra.mxu0 %v2497
    %2499 = vmatprep.subr.mxu0 0.0
    %v2500 = vand.u32 %v89, 4294901760
    %2501 = vmatpush1.msra.mxu0 %v2500
    %2502 = vmatprep.subr.mxu0 0.0
    %v2503 = vand.u32 %v90, 4294901760
    %2504 = vmatpush1.msra.mxu0 %v2503
    %2505 = vmatprep.subr.mxu0 0.0
    %v2506 = vand.u32 %v91, 4294901760
    %2507 = vmatpush1.msra.mxu0 %v2506
    %2508 = vmatprep.subr.mxu0 0.0
    %v2509 = vand.u32 %v92, 4294901760
    %2510 = vmatpush1.msra.mxu0 %v2509
    %2511 = vmatprep.subr.mxu0 0.0
    %v2512 = vand.u32 %v93, 4294901760
    %2513 = vmatpush1.msra.mxu0 %v2512
    %2514 = vmatprep.subr.mxu0 0.0
    %v2515 = vand.u32 %v94, 4294901760
    %2516 = vmatpush1.msra.mxu0 %v2515
    %2517 = vmatprep.subr.mxu0 0.0
    %v2518 = vand.u32 %v95, 4294901760
    %2519 = vmatpush1.msra.mxu0 %v2518
    %2520 = vmatprep.subr.mxu0 0.0
    %v2521 = vand.u32 %v96, 4294901760
    %2522 = vmatpush1.msra.mxu0 %v2521
    %2523 = vmatprep.subr.mxu0 0.0
    %v2524 = vand.u32 %v97, 4294901760
    %2525 = vmatpush1.msra.mxu0 %v2524
    %2526 = vmatprep.subr.mxu0 0.0
    %v2527 = vand.u32 %v98, 4294901760
    %2528 = vmatpush1.msra.mxu0 %v2527
    %2529 = vmatprep.subr.mxu0 0.0
    %v2530 = vand.u32 %v99, 4294901760
    %2531 = vmatpush1.msra.mxu0 %v2530
    %2532 = vmatprep.subr.mxu0 0.0
    %v2533 = vand.u32 %v100, 4294901760
    %2534 = vmatpush1.msra.mxu0 %v2533
    %2535 = vmatprep.subr.mxu0 0.0
    %v2536 = vand.u32 %v101, 4294901760
    %2537 = vmatpush1.msra.mxu0 %v2536
    %2538 = vmatprep.subr.mxu0 0.0
    %2539 = vmatpush1.msra.mxu0 0.0
    %2540 = vmatprep.subr.mxu0 0.0
    %2541 = vmatpush1.msra.mxu0 0.0
    %2542 = vmatprep.subr.mxu0 0.0
    %2543 = vmatpush1.msra.mxu0 0.0
    %2544 = vmatprep.subr.mxu0 0.0
    %2545 = vmatpush1.msra.mxu0 0.0
    %2546 = vmatprep.subr.mxu0 0.0
    %2547 = vmatpush1.msra.mxu0 0.0
    %2548 = vmatprep.subr.mxu0 0.0
    %2549 = vmatpush1.msra.mxu0 0.0
    %2550 = vmatprep.subr.mxu0 0.0
    %2551 = vmatpush1.msra.mxu0 0.0
    %2552 = vmatprep.subr.mxu0 0.0
    %2553 = vmatpush1.msra.mxu0 0.0
    %2554 = vmatprep.subr.mxu0 0.0
    %2555 = vmatpush1.msra.mxu0 0.0
    %2556 = vmatprep.subr.mxu0 0.0
    %2557 = vmatpush1.msra.mxu0 0.0
    %2558 = vmatprep.subr.mxu0 0.0
    %2559 = vmatpush1.msra.mxu0 0.0
    %2560 = vmatprep.subr.mxu0 0.0
    %2561 = vmatpush1.msra.mxu0 0.0
    %2562 = vmatprep.subr.mxu0 0.0
    %2563 = vmatpush1.msra.mxu0 0.0
    %2564 = vmatprep.subr.mxu0 0.0
    %2565 = vmatpush1.msra.mxu0 0.0
    %2566 = vmatprep.subr.mxu0 0.0
    %2567 = vmatpush1.msra.mxu0 0.0
    %2568 = vmatprep.subr.mxu0 0.0
    %2569 = vmatpush1.msra.mxu0 0.0
    %2570 = vmatprep.mubr.f32.mxu0 0.0
    %v2571 = vand.u32 %v2489, 4294901760
    %v2572 = vsub.f32 %v2489, %v2571
    %v2573 = vand.u32 %v2572, 4294901760
    %v2574 = vsub.f32 %v2572, %v2573
    %v2575 = vand.u32 %v2574, 4294901760
    %2576 = vmatmul.mubr.f32.gmra.mrb[0].mxu0 %v2575
    %v2577 = vpop.f32.mrb[0].mxu0
    %v2578 = vadd.f32 0.0, %v2577
    %v2579 = vpop.f32.mrb[0].mxu0
    %2580 = vdwg.mxu0
    %2581 = vmatprep.subr.mxu0 0.0
    %v2582 = vand.u32 %v86, 4294901760
    %v2583 = vsub.f32 %v86, %v2582
    %v2584 = vand.u32 %v2583, 4294901760
    %v2585 = vsub.f32 %v2583, %v2584
    %v2586 = vand.u32 %v2585, 4294901760
    %2587 = vmatpush1.msra.mxu0 %v2586
    %2588 = vmatprep.subr.mxu0 0.0
    %v2589 = vand.u32 %v87, 4294901760
    %v2590 = vsub.f32 %v87, %v2589
    %v2591 = vand.u32 %v2590, 4294901760
    %v2592 = vsub.f32 %v2590, %v2591
    %v2593 = vand.u32 %v2592, 4294901760
    %2594 = vmatpush1.msra.mxu0 %v2593
    %2595 = vmatprep.subr.mxu0 0.0
    %v2596 = vand.u32 %v88, 4294901760
    %v2597 = vsub.f32 %v88, %v2596
    %v2598 = vand.u32 %v2597, 4294901760
    %v2599 = vsub.f32 %v2597, %v2598
    %v2600 = vand.u32 %v2599, 4294901760
    %2601 = vmatpush1.msra.mxu0 %v2600
    %2602 = vmatprep.subr.mxu0 0.0
    %v2603 = vand.u32 %v89, 4294901760
    %v2604 = vsub.f32 %v89, %v2603
    %v2605 = vand.u32 %v2604, 4294901760
    %v2606 = vsub.f32 %v2604, %v2605
    %v2607 = vand.u32 %v2606, 4294901760
    %2608 = vmatpush1.msra.mxu0 %v2607
    %2609 = vmatprep.subr.mxu0 0.0
    %v2610 = vand.u32 %v90, 4294901760
    %v2611 = vsub.f32 %v90, %v2610
    %v2612 = vand.u32 %v2611, 4294901760
    %v2613 = vsub.f32 %v2611, %v2612
    %v2614 = vand.u32 %v2613, 4294901760
    %2615 = vmatpush1.msra.mxu0 %v2614
    %2616 = vmatprep.subr.mxu0 0.0
    %v2617 = vand.u32 %v91, 4294901760
    %v2618 = vsub.f32 %v91, %v2617
    %v2619 = vand.u32 %v2618, 4294901760
    %v2620 = vsub.f32 %v2618, %v2619
    %v2621 = vand.u32 %v2620, 4294901760
    %2622 = vmatpush1.msra.mxu0 %v2621
    %2623 = vmatprep.subr.mxu0 0.0
    %v2624 = vand.u32 %v92, 4294901760
    %v2625 = vsub.f32 %v92, %v2624
    %v2626 = vand.u32 %v2625, 4294901760
    %v2627 = vsub.f32 %v2625, %v2626
    %v2628 = vand.u32 %v2627, 4294901760
    %2629 = vmatpush1.msra.mxu0 %v2628
    %2630 = vmatprep.subr.mxu0 0.0
    %v2631 = vand.u32 %v93, 4294901760
    %v2632 = vsub.f32 %v93, %v2631
    %v2633 = vand.u32 %v2632, 4294901760
    %v2634 = vsub.f32 %v2632, %v2633
    %v2635 = vand.u32 %v2634, 4294901760
    %2636 = vmatpush1.msra.mxu0 %v2635
    %2637 = vmatprep.subr.mxu0 0.0
    %v2638 = vand.u32 %v94, 4294901760
    %v2639 = vsub.f32 %v94, %v2638
    %v2640 = vand.u32 %v2639, 4294901760
    %v2641 = vsub.f32 %v2639, %v2640
    %v2642 = vand.u32 %v2641, 4294901760
    %2643 = vmatpush1.msra.mxu0 %v2642
    %2644 = vmatprep.subr.mxu0 0.0
    %v2645 = vand.u32 %v95, 4294901760
    %v2646 = vsub.f32 %v95, %v2645
    %v2647 = vand.u32 %v2646, 4294901760
    %v2648 = vsub.f32 %v2646, %v2647
    %v2649 = vand.u32 %v2648, 4294901760
    %2650 = vmatpush1.msra.mxu0 %v2649
    %2651 = vmatprep.subr.mxu0 0.0
    %v2652 = vand.u32 %v96, 4294901760
    %v2653 = vsub.f32 %v96, %v2652
    %v2654 = vand.u32 %v2653, 4294901760
    %v2655 = vsub.f32 %v2653, %v2654
    %v2656 = vand.u32 %v2655, 4294901760
    %2657 = vmatpush1.msra.mxu0 %v2656
    %2658 = vmatprep.subr.mxu0 0.0
    %v2659 = vand.u32 %v97, 4294901760
    %v2660 = vsub.f32 %v97, %v2659
    %v2661 = vand.u32 %v2660, 4294901760
    %v2662 = vsub.f32 %v2660, %v2661
    %v2663 = vand.u32 %v2662, 4294901760
    %2664 = vmatpush1.msra.mxu0 %v2663
    %2665 = vmatprep.subr.mxu0 0.0
    %v2666 = vand.u32 %v98, 4294901760
    %v2667 = vsub.f32 %v98, %v2666
    %v2668 = vand.u32 %v2667, 4294901760
    %v2669 = vsub.f32 %v2667, %v2668
    %v2670 = vand.u32 %v2669, 4294901760
    %2671 = vmatpush1.msra.mxu0 %v2670
    %2672 = vmatprep.subr.mxu0 0.0
    %v2673 = vand.u32 %v99, 4294901760
    %v2674 = vsub.f32 %v99, %v2673
    %v2675 = vand.u32 %v2674, 4294901760
    %v2676 = vsub.f32 %v2674, %v2675
    %v2677 = vand.u32 %v2676, 4294901760
    %2678 = vmatpush1.msra.mxu0 %v2677
    %2679 = vmatprep.subr.mxu0 0.0
    %v2680 = vand.u32 %v100, 4294901760
    %v2681 = vsub.f32 %v100, %v2680
    %v2682 = vand.u32 %v2681, 4294901760
    %v2683 = vsub.f32 %v2681, %v2682
    %v2684 = vand.u32 %v2683, 4294901760
    %2685 = vmatpush1.msra.mxu0 %v2684
    %2686 = vmatprep.subr.mxu0 0.0
    %v2687 = vand.u32 %v101, 4294901760
    %v2688 = vsub.f32 %v101, %v2687
    %v2689 = vand.u32 %v2688, 4294901760
    %v2690 = vsub.f32 %v2688, %v2689
    %v2691 = vand.u32 %v2690, 4294901760
    %2692 = vmatpush1.msra.mxu0 %v2691
    %2693 = vmatprep.subr.mxu0 0.0
    %2694 = vmatpush1.msra.mxu0 0.0
    %2695 = vmatprep.subr.mxu0 0.0
    %2696 = vmatpush1.msra.mxu0 0.0
    %2697 = vmatprep.subr.mxu0 0.0
    %2698 = vmatpush1.msra.mxu0 0.0
    %2699 = vmatprep.subr.mxu0 0.0
    %2700 = vmatpush1.msra.mxu0 0.0
    %2701 = vmatprep.subr.mxu0 0.0
    %2702 = vmatpush1.msra.mxu0 0.0
    %2703 = vmatprep.subr.mxu0 0.0
    %2704 = vmatpush1.msra.mxu0 0.0
    %2705 = vmatprep.subr.mxu0 0.0
    %2706 = vmatpush1.msra.mxu0 0.0
    %2707 = vmatprep.subr.mxu0 0.0
    %2708 = vmatpush1.msra.mxu0 0.0
    %2709 = vmatprep.subr.mxu0 0.0
    %2710 = vmatpush1.msra.mxu0 0.0
    %2711 = vmatprep.subr.mxu0 0.0
    %2712 = vmatpush1.msra.mxu0 0.0
    %2713 = vmatprep.subr.mxu0 0.0
    %2714 = vmatpush1.msra.mxu0 0.0
    %2715 = vmatprep.subr.mxu0 0.0
    %2716 = vmatpush1.msra.mxu0 0.0
    %2717 = vmatprep.subr.mxu0 0.0
    %2718 = vmatpush1.msra.mxu0 0.0
    %2719 = vmatprep.subr.mxu0 0.0
    %2720 = vmatpush1.msra.mxu0 0.0
    %2721 = vmatprep.subr.mxu0 0.0
    %2722 = vmatpush1.msra.mxu0 0.0
    %2723 = vmatprep.subr.mxu0 0.0
    %2724 = vmatpush1.msra.mxu0 0.0
    %2725 = vmatprep.mubr.f32.mxu0 0.0
    %v2726 = vand.u32 %v2489, 4294901760
    %2727 = vmatmul.mubr.f32.gmra.mrb[0].mxu0 %v2726
    %v2728 = vpop.f32.mrb[0].mxu0
    %v2729 = vadd.f32 %v2578, %v2728
    %v2730 = vpop.f32.mrb[0].mxu0
    %2731 = vdwg.mxu0
    %2732 = vmatprep.subr.mxu0 0.0
    %v2733 = vand.u32 %v86, 4294901760
    %v2734 = vsub.f32 %v86, %v2733
    %2735 = vmatpush1.msra.mxu0 %v2734
    %2736 = vmatprep.subr.mxu0 0.0
    %v2737 = vand.u32 %v87, 4294901760
    %v2738 = vsub.f32 %v87, %v2737
    %2739 = vmatpush1.msra.mxu0 %v2738
    %2740 = vmatprep.subr.mxu0 0.0
    %v2741 = vand.u32 %v88, 4294901760
    %v2742 = vsub.f32 %v88, %v2741
    %2743 = vmatpush1.msra.mxu0 %v2742
    %2744 = vmatprep.subr.mxu0 0.0
    %v2745 = vand.u32 %v89, 4294901760
    %v2746 = vsub.f32 %v89, %v2745
    %2747 = vmatpush1.msra.mxu0 %v2746
    %2748 = vmatprep.subr.mxu0 0.0
    %v2749 = vand.u32 %v90, 4294901760
    %v2750 = vsub.f32 %v90, %v2749
    %2751 = vmatpush1.msra.mxu0 %v2750
    %2752 = vmatprep.subr.mxu0 0.0
    %v2753 = vand.u32 %v91, 4294901760
    %v2754 = vsub.f32 %v91, %v2753
    %2755 = vmatpush1.msra.mxu0 %v2754
    %2756 = vmatprep.subr.mxu0 0.0
    %v2757 = vand.u32 %v92, 4294901760
    %v2758 = vsub.f32 %v92, %v2757
    %2759 = vmatpush1.msra.mxu0 %v2758
    %2760 = vmatprep.subr.mxu0 0.0
    %v2761 = vand.u32 %v93, 4294901760
    %v2762 = vsub.f32 %v93, %v2761
    %2763 = vmatpush1.msra.mxu0 %v2762
    %2764 = vmatprep.subr.mxu0 0.0
    %v2765 = vand.u32 %v94, 4294901760
    %v2766 = vsub.f32 %v94, %v2765
    %2767 = vmatpush1.msra.mxu0 %v2766
    %2768 = vmatprep.subr.mxu0 0.0
    %v2769 = vand.u32 %v95, 4294901760
    %v2770 = vsub.f32 %v95, %v2769
    %2771 = vmatpush1.msra.mxu0 %v2770
    %2772 = vmatprep.subr.mxu0 0.0
    %v2773 = vand.u32 %v96, 4294901760
    %v2774 = vsub.f32 %v96, %v2773
    %2775 = vmatpush1.msra.mxu0 %v2774
    %2776 = vmatprep.subr.mxu0 0.0
    %v2777 = vand.u32 %v97, 4294901760
    %v2778 = vsub.f32 %v97, %v2777
    %2779 = vmatpush1.msra.mxu0 %v2778
    %2780 = vmatprep.subr.mxu0 0.0
    %v2781 = vand.u32 %v98, 4294901760
    %v2782 = vsub.f32 %v98, %v2781
    %2783 = vmatpush1.msra.mxu0 %v2782
    %2784 = vmatprep.subr.mxu0 0.0
    %v2785 = vand.u32 %v99, 4294901760
    %v2786 = vsub.f32 %v99, %v2785
    %2787 = vmatpush1.msra.mxu0 %v2786
    %2788 = vmatprep.subr.mxu0 0.0
    %v2789 = vand.u32 %v100, 4294901760
    %v2790 = vsub.f32 %v100, %v2789
    %2791 = vmatpush1.msra.mxu0 %v2790
    %2792 = vmatprep.subr.mxu0 0.0
    %v2793 = vand.u32 %v101, 4294901760
    %v2794 = vsub.f32 %v101, %v2793
    %2795 = vmatpush1.msra.mxu0 %v2794
    %2796 = vmatprep.subr.mxu0 0.0
    %2797 = vmatpush1.msra.mxu0 0.0
    %2798 = vmatprep.subr.mxu0 0.0
    %2799 = vmatpush1.msra.mxu0 0.0
    %2800 = vmatprep.subr.mxu0 0.0
    %2801 = vmatpush1.msra.mxu0 0.0
    %2802 = vmatprep.subr.mxu0 0.0
    %2803 = vmatpush1.msra.mxu0 0.0
    %2804 = vmatprep.subr.mxu0 0.0
    %2805 = vmatpush1.msra.mxu0 0.0
    %2806 = vmatprep.subr.mxu0 0.0
    %2807 = vmatpush1.msra.mxu0 0.0
    %2808 = vmatprep.subr.mxu0 0.0
    %2809 = vmatpush1.msra.mxu0 0.0
    %2810 = vmatprep.subr.mxu0 0.0
    %2811 = vmatpush1.msra.mxu0 0.0
    %2812 = vmatprep.subr.mxu0 0.0
    %2813 = vmatpush1.msra.mxu0 0.0
    %2814 = vmatprep.subr.mxu0 0.0
    %2815 = vmatpush1.msra.mxu0 0.0
    %2816 = vmatprep.subr.mxu0 0.0
    %2817 = vmatpush1.msra.mxu0 0.0
    %2818 = vmatprep.subr.mxu0 0.0
    %2819 = vmatpush1.msra.mxu0 0.0
    %2820 = vmatprep.subr.mxu0 0.0
    %2821 = vmatpush1.msra.mxu0 0.0
    %2822 = vmatprep.subr.mxu0 0.0
    %2823 = vmatpush1.msra.mxu0 0.0
    %2824 = vmatprep.subr.mxu0 0.0
    %2825 = vmatpush1.msra.mxu0 0.0
    %2826 = vmatprep.subr.mxu0 0.0
    %2827 = vmatpush1.msra.mxu0 0.0
    %2828 = vmatprep.mubr.f32.mxu0 0.0
    %v2829 = vand.u32 %v2489, 4294901760
    %v2830 = vsub.f32 %v2489, %v2829
    %2831 = vmatmul.mubr.f32.gmra.mrb[0].mxu0 %v2830
    %v2832 = vpop.f32.mrb[0].mxu0
    %v2833 = vadd.f32 %v2729, %v2832
    %v2834 = vpop.f32.mrb[0].mxu0
    %2835 = vdwg.mxu0
    %2836 = vmatprep.subr.mxu0 0.0
    %v2837 = vand.u32 %v86, 4294901760
    %2838 = vmatpush1.msra.mxu0 %v2837
    %2839 = vmatprep.subr.mxu0 0.0
    %v2840 = vand.u32 %v87, 4294901760
    %2841 = vmatpush1.msra.mxu0 %v2840
    %2842 = vmatprep.subr.mxu0 0.0
    %v2843 = vand.u32 %v88, 4294901760
    %2844 = vmatpush1.msra.mxu0 %v2843
    %2845 = vmatprep.subr.mxu0 0.0
    %v2846 = vand.u32 %v89, 4294901760
    %2847 = vmatpush1.msra.mxu0 %v2846
    %2848 = vmatprep.subr.mxu0 0.0
    %v2849 = vand.u32 %v90, 4294901760
    %2850 = vmatpush1.msra.mxu0 %v2849
    %2851 = vmatprep.subr.mxu0 0.0
    %v2852 = vand.u32 %v91, 4294901760
    %2853 = vmatpush1.msra.mxu0 %v2852
    %2854 = vmatprep.subr.mxu0 0.0
    %v2855 = vand.u32 %v92, 4294901760
    %2856 = vmatpush1.msra.mxu0 %v2855
    %2857 = vmatprep.subr.mxu0 0.0
    %v2858 = vand.u32 %v93, 4294901760
    %2859 = vmatpush1.msra.mxu0 %v2858
    %2860 = vmatprep.subr.mxu0 0.0
    %v2861 = vand.u32 %v94, 4294901760
    %2862 = vmatpush1.msra.mxu0 %v2861
    %2863 = vmatprep.subr.mxu0 0.0
    %v2864 = vand.u32 %v95, 4294901760
    %2865 = vmatpush1.msra.mxu0 %v2864
    %2866 = vmatprep.subr.mxu0 0.0
    %v2867 = vand.u32 %v96, 4294901760
    %2868 = vmatpush1.msra.mxu0 %v2867
    %2869 = vmatprep.subr.mxu0 0.0
    %v2870 = vand.u32 %v97, 4294901760
    %2871 = vmatpush1.msra.mxu0 %v2870
    %2872 = vmatprep.subr.mxu0 0.0
    %v2873 = vand.u32 %v98, 4294901760
    %2874 = vmatpush1.msra.mxu0 %v2873
    %2875 = vmatprep.subr.mxu0 0.0
    %v2876 = vand.u32 %v99, 4294901760
    %2877 = vmatpush1.msra.mxu0 %v2876
    %2878 = vmatprep.subr.mxu0 0.0
    %v2879 = vand.u32 %v100, 4294901760
    %2880 = vmatpush1.msra.mxu0 %v2879
    %2881 = vmatprep.subr.mxu0 0.0
    %v2882 = vand.u32 %v101, 4294901760
    %2883 = vmatpush1.msra.mxu0 %v2882
    %2884 = vmatprep.subr.mxu0 0.0
    %2885 = vmatpush1.msra.mxu0 0.0
    %2886 = vmatprep.subr.mxu0 0.0
    %2887 = vmatpush1.msra.mxu0 0.0
    %2888 = vmatprep.subr.mxu0 0.0
    %2889 = vmatpush1.msra.mxu0 0.0
    %2890 = vmatprep.subr.mxu0 0.0
    %2891 = vmatpush1.msra.mxu0 0.0
    %2892 = vmatprep.subr.mxu0 0.0
    %2893 = vmatpush1.msra.mxu0 0.0
    %2894 = vmatprep.subr.mxu0 0.0
    %2895 = vmatpush1.msra.mxu0 0.0
    %2896 = vmatprep.subr.mxu0 0.0
    %2897 = vmatpush1.msra.mxu0 0.0
    %2898 = vmatprep.subr.mxu0 0.0
    %2899 = vmatpush1.msra.mxu0 0.0
    %2900 = vmatprep.subr.mxu0 0.0
    %2901 = vmatpush1.msra.mxu0 0.0
    %2902 = vmatprep.subr.mxu0 0.0
    %2903 = vmatpush1.msra.mxu0 0.0
    %2904 = vmatprep.subr.mxu0 0.0
    %2905 = vmatpush1.msra.mxu0 0.0
    %2906 = vmatprep.subr.mxu0 0.0
    %2907 = vmatpush1.msra.mxu0 0.0
    %2908 = vmatprep.subr.mxu0 0.0
    %2909 = vmatpush1.msra.mxu0 0.0
    %2910 = vmatprep.subr.mxu0 0.0
    %2911 = vmatpush1.msra.mxu0 0.0
    %2912 = vmatprep.subr.mxu0 0.0
    %2913 = vmatpush1.msra.mxu0 0.0
    %2914 = vmatprep.subr.mxu0 0.0
    %2915 = vmatpush1.msra.mxu0 0.0
    %2916 = vmatprep.mubr.f32.mxu0 0.0
    %v2917 = vand.u32 %v2489, 4294901760
    %v2918 = vsub.f32 %v2489, %v2917
    %v2919 = vand.u32 %v2918, 4294901760
    %2920 = vmatmul.mubr.f32.gmra.mrb[0].mxu0 %v2919
    %v2921 = vpop.f32.mrb[0].mxu0
    %v2922 = vadd.f32 %v2833, %v2921
    %v2923 = vpop.f32.mrb[0].mxu0
    %2924 = vdwg.mxu0
    %2925 = vmatprep.subr.mxu0 0.0
    %v2926 = vand.u32 %v86, 4294901760
    %v2927 = vsub.f32 %v86, %v2926
    %v2928 = vand.u32 %v2927, 4294901760
    %2929 = vmatpush1.msra.mxu0 %v2928
    %2930 = vmatprep.subr.mxu0 0.0
    %v2931 = vand.u32 %v87, 4294901760
    %v2932 = vsub.f32 %v87, %v2931
    %v2933 = vand.u32 %v2932, 4294901760
    %2934 = vmatpush1.msra.mxu0 %v2933
    %2935 = vmatprep.subr.mxu0 0.0
    %v2936 = vand.u32 %v88, 4294901760
    %v2937 = vsub.f32 %v88, %v2936
    %v2938 = vand.u32 %v2937, 4294901760
    %2939 = vmatpush1.msra.mxu0 %v2938
    %2940 = vmatprep.subr.mxu0 0.0
    %v2941 = vand.u32 %v89, 4294901760
    %v2942 = vsub.f32 %v89, %v2941
    %v2943 = vand.u32 %v2942, 4294901760
    %2944 = vmatpush1.msra.mxu0 %v2943
    %2945 = vmatprep.subr.mxu0 0.0
    %v2946 = vand.u32 %v90, 4294901760
    %v2947 = vsub.f32 %v90, %v2946
    %v2948 = vand.u32 %v2947, 4294901760
    %2949 = vmatpush1.msra.mxu0 %v2948
    %2950 = vmatprep.subr.mxu0 0.0
    %v2951 = vand.u32 %v91, 4294901760
    %v2952 = vsub.f32 %v91, %v2951
    %v2953 = vand.u32 %v2952, 4294901760
    %2954 = vmatpush1.msra.mxu0 %v2953
    %2955 = vmatprep.subr.mxu0 0.0
    %v2956 = vand.u32 %v92, 4294901760
    %v2957 = vsub.f32 %v92, %v2956
    %v2958 = vand.u32 %v2957, 4294901760
    %2959 = vmatpush1.msra.mxu0 %v2958
    %2960 = vmatprep.subr.mxu0 0.0
    %v2961 = vand.u32 %v93, 4294901760
    %v2962 = vsub.f32 %v93, %v2961
    %v2963 = vand.u32 %v2962, 4294901760
    %2964 = vmatpush1.msra.mxu0 %v2963
    %2965 = vmatprep.subr.mxu0 0.0
    %v2966 = vand.u32 %v94, 4294901760
    %v2967 = vsub.f32 %v94, %v2966
    %v2968 = vand.u32 %v2967, 4294901760
    %2969 = vmatpush1.msra.mxu0 %v2968
    %2970 = vmatprep.subr.mxu0 0.0
    %v2971 = vand.u32 %v95, 4294901760
    %v2972 = vsub.f32 %v95, %v2971
    %v2973 = vand.u32 %v2972, 4294901760
    %2974 = vmatpush1.msra.mxu0 %v2973
    %2975 = vmatprep.subr.mxu0 0.0
    %v2976 = vand.u32 %v96, 4294901760
    %v2977 = vsub.f32 %v96, %v2976
    %v2978 = vand.u32 %v2977, 4294901760
    %2979 = vmatpush1.msra.mxu0 %v2978
    %2980 = vmatprep.subr.mxu0 0.0
    %v2981 = vand.u32 %v97, 4294901760
    %v2982 = vsub.f32 %v97, %v2981
    %v2983 = vand.u32 %v2982, 4294901760
    %2984 = vmatpush1.msra.mxu0 %v2983
    %2985 = vmatprep.subr.mxu0 0.0
    %v2986 = vand.u32 %v98, 4294901760
    %v2987 = vsub.f32 %v98, %v2986
    %v2988 = vand.u32 %v2987, 4294901760
    %2989 = vmatpush1.msra.mxu0 %v2988
    %2990 = vmatprep.subr.mxu0 0.0
    %v2991 = vand.u32 %v99, 4294901760
    %v2992 = vsub.f32 %v99, %v2991
    %v2993 = vand.u32 %v2992, 4294901760
    %2994 = vmatpush1.msra.mxu0 %v2993
    %2995 = vmatprep.subr.mxu0 0.0
    %v2996 = vand.u32 %v100, 4294901760
    %v2997 = vsub.f32 %v100, %v2996
    %v2998 = vand.u32 %v2997, 4294901760
    %2999 = vmatpush1.msra.mxu0 %v2998
    %3000 = vmatprep.subr.mxu0 0.0
    %v3001 = vand.u32 %v101, 4294901760
    %v3002 = vsub.f32 %v101, %v3001
    %v3003 = vand.u32 %v3002, 4294901760
    %3004 = vmatpush1.msra.mxu0 %v3003
    %3005 = vmatprep.subr.mxu0 0.0
    %3006 = vmatpush1.msra.mxu0 0.0
    %3007 = vmatprep.subr.mxu0 0.0
    %3008 = vmatpush1.msra.mxu0 0.0
    %3009 = vmatprep.subr.mxu0 0.0
    %3010 = vmatpush1.msra.mxu0 0.0
    %3011 = vmatprep.subr.mxu0 0.0
    %3012 = vmatpush1.msra.mxu0 0.0
    %3013 = vmatprep.subr.mxu0 0.0
    %3014 = vmatpush1.msra.mxu0 0.0
    %3015 = vmatprep.subr.mxu0 0.0
    %3016 = vmatpush1.msra.mxu0 0.0
    %3017 = vmatprep.subr.mxu0 0.0
    %3018 = vmatpush1.msra.mxu0 0.0
    %3019 = vmatprep.subr.mxu0 0.0
    %3020 = vmatpush1.msra.mxu0 0.0
    %3021 = vmatprep.subr.mxu0 0.0
    %3022 = vmatpush1.msra.mxu0 0.0
    %3023 = vmatprep.subr.mxu0 0.0
    %3024 = vmatpush1.msra.mxu0 0.0
    %3025 = vmatprep.subr.mxu0 0.0
    %3026 = vmatpush1.msra.mxu0 0.0
    %3027 = vmatprep.subr.mxu0 0.0
    %3028 = vmatpush1.msra.mxu0 0.0
    %3029 = vmatprep.subr.mxu0 0.0
    %3030 = vmatpush1.msra.mxu0 0.0
    %3031 = vmatprep.subr.mxu0 0.0
    %3032 = vmatpush1.msra.mxu0 0.0
    %3033 = vmatprep.subr.mxu0 0.0
    %3034 = vmatpush1.msra.mxu0 0.0
    %3035 = vmatprep.subr.mxu0 0.0
    %3036 = vmatpush1.msra.mxu0 0.0
    %3037 = vmatprep.mubr.f32.mxu0 0.0
    %v3038 = vand.u32 %v2489, 4294901760
    %3039 = vmatmul.mubr.f32.gmra.mrb[0].mxu0 %v3038
    %v3040 = vpop.f32.mrb[0].mxu0
    %v3041 = vadd.f32 %v2922, %v3040
    %v3042 = vpop.f32.mrb[0].mxu0
    %3043 = vdwg.mxu0
    %3044 = vmatprep.subr.mxu0 0.0
    %v3045 = vand.u32 %v86, 4294901760
    %3046 = vmatpush1.msra.mxu0 %v3045
    %3047 = vmatprep.subr.mxu0 0.0
    %v3048 = vand.u32 %v87, 4294901760
    %3049 = vmatpush1.msra.mxu0 %v3048
    %3050 = vmatprep.subr.mxu0 0.0
    %v3051 = vand.u32 %v88, 4294901760
    %3052 = vmatpush1.msra.mxu0 %v3051
    %3053 = vmatprep.subr.mxu0 0.0
    %v3054 = vand.u32 %v89, 4294901760
    %3055 = vmatpush1.msra.mxu0 %v3054
    %3056 = vmatprep.subr.mxu0 0.0
    %v3057 = vand.u32 %v90, 4294901760
    %3058 = vmatpush1.msra.mxu0 %v3057
    %3059 = vmatprep.subr.mxu0 0.0
    %v3060 = vand.u32 %v91, 4294901760
    %3061 = vmatpush1.msra.mxu0 %v3060
    %3062 = vmatprep.subr.mxu0 0.0
    %v3063 = vand.u32 %v92, 4294901760
    %3064 = vmatpush1.msra.mxu0 %v3063
    %3065 = vmatprep.subr.mxu0 0.0
    %v3066 = vand.u32 %v93, 4294901760
    %3067 = vmatpush1.msra.mxu0 %v3066
    %3068 = vmatprep.subr.mxu0 0.0
    %v3069 = vand.u32 %v94, 4294901760
    %3070 = vmatpush1.msra.mxu0 %v3069
    %3071 = vmatprep.subr.mxu0 0.0
    %v3072 = vand.u32 %v95, 4294901760
    %3073 = vmatpush1.msra.mxu0 %v3072
    %3074 = vmatprep.subr.mxu0 0.0
    %v3075 = vand.u32 %v96, 4294901760
    %3076 = vmatpush1.msra.mxu0 %v3075
    %3077 = vmatprep.subr.mxu0 0.0
    %v3078 = vand.u32 %v97, 4294901760
    %3079 = vmatpush1.msra.mxu0 %v3078
    %3080 = vmatprep.subr.mxu0 0.0
    %v3081 = vand.u32 %v98, 4294901760
    %3082 = vmatpush1.msra.mxu0 %v3081
    %3083 = vmatprep.subr.mxu0 0.0
    %v3084 = vand.u32 %v99, 4294901760
    %3085 = vmatpush1.msra.mxu0 %v3084
    %3086 = vmatprep.subr.mxu0 0.0
    %v3087 = vand.u32 %v100, 4294901760
    %3088 = vmatpush1.msra.mxu0 %v3087
    %3089 = vmatprep.subr.mxu0 0.0
    %v3090 = vand.u32 %v101, 4294901760
    %3091 = vmatpush1.msra.mxu0 %v3090
    %3092 = vmatprep.subr.mxu0 0.0
    %3093 = vmatpush1.msra.mxu0 0.0
    %3094 = vmatprep.subr.mxu0 0.0
    %3095 = vmatpush1.msra.mxu0 0.0
    %3096 = vmatprep.subr.mxu0 0.0
    %3097 = vmatpush1.msra.mxu0 0.0
    %3098 = vmatprep.subr.mxu0 0.0
    %3099 = vmatpush1.msra.mxu0 0.0
    %3100 = vmatprep.subr.mxu0 0.0
    %3101 = vmatpush1.msra.mxu0 0.0
    %3102 = vmatprep.subr.mxu0 0.0
    %3103 = vmatpush1.msra.mxu0 0.0
    %3104 = vmatprep.subr.mxu0 0.0
    %3105 = vmatpush1.msra.mxu0 0.0
    %3106 = vmatprep.subr.mxu0 0.0
    %3107 = vmatpush1.msra.mxu0 0.0
    %3108 = vmatprep.subr.mxu0 0.0
    %3109 = vmatpush1.msra.mxu0 0.0
    %3110 = vmatprep.subr.mxu0 0.0
    %3111 = vmatpush1.msra.mxu0 0.0
    %3112 = vmatprep.subr.mxu0 0.0
    %3113 = vmatpush1.msra.mxu0 0.0
    %3114 = vmatprep.subr.mxu0 0.0
    %3115 = vmatpush1.msra.mxu0 0.0
    %3116 = vmatprep.subr.mxu0 0.0
    %3117 = vmatpush1.msra.mxu0 0.0
    %3118 = vmatprep.subr.mxu0 0.0
    %3119 = vmatpush1.msra.mxu0 0.0
    %3120 = vmatprep.subr.mxu0 0.0
    %3121 = vmatpush1.msra.mxu0 0.0
    %3122 = vmatprep.subr.mxu0 0.0
    %3123 = vmatpush1.msra.mxu0 0.0
    %3124 = vmatprep.mubr.f32.mxu0 0.0
    %v3125 = vand.u32 %v2489, 4294901760
    %3126 = vmatmul.mubr.f32.gmra.mrb[0].mxu0 %v3125
    %v3127 = vpop.f32.mrb[0].mxu0
    %v3128 = vadd.f32 %v3041, %v3127
    %v3129 = vpop.f32.mrb[0].mxu0
    %3130 = vdwg.mxu0
    %v3131 = vmul.f32 %v3128, 0.001953125
    %v3132 = vlaneseq
    %v3133 = vshrl.u32 %v3132, 7
    %v3134 = vsub.s32 0, %v3133
    %v3135 = vrot.slane %v3131, %v3134
    %v3136 = vsub.f32 %v2475, %v3135
    %v3137 = vsub.f32 %v2476, %v3135
    %v3138 = vsub.f32 %v2477, %v3135
    %v3139 = vsub.f32 %v2478, %v3135
    %v3140 = vmul.f32 %v3136, %v3136
    %v3141 = vmul.f32 %v3137, %v3137
    %v3142 = vmul.f32 %v3138, %v3138
    %v3143 = vmul.f32 %v3139, %v3139
    %v3144 = vadd.f32 %v3140, %v3141
    %v3145 = vadd.f32 %v3144, %v3142
    %v3146 = vadd.f32 %v3145, %v3143
    %v3147 = vrot.slane %v3146, 4
    %v3148 = vadd.f32 %v3146, %v3147
    %v3149 = vrot.slane %v3148, 2
    %v3150 = vadd.f32 %v3148, %v3149
    %v3151 = vrot.slane %v3150, 1
    %v3152 = vadd.f32 %v3150, %v3151
    %3153 = vmatprep.subr.mxu0 0.0
    %v3154 = vand.u32 %v86, 4294901760
    %3155 = vmatpush1.msra.mxu0 %v3154
    %3156 = vmatprep.subr.mxu0 0.0
    %v3157 = vand.u32 %v87, 4294901760
    %3158 = vmatpush1.msra.mxu0 %v3157
    %3159 = vmatprep.subr.mxu0 0.0
    %v3160 = vand.u32 %v88, 4294901760
    %3161 = vmatpush1.msra.mxu0 %v3160
    %3162 = vmatprep.subr.mxu0 0.0
    %v3163 = vand.u32 %v89, 4294901760
    %3164 = vmatpush1.msra.mxu0 %v3163
    %3165 = vmatprep.subr.mxu0 0.0
    %v3166 = vand.u32 %v90, 4294901760
    %3167 = vmatpush1.msra.mxu0 %v3166
    %3168 = vmatprep.subr.mxu0 0.0
    %v3169 = vand.u32 %v91, 4294901760
    %3170 = vmatpush1.msra.mxu0 %v3169
    %3171 = vmatprep.subr.mxu0 0.0
    %v3172 = vand.u32 %v92, 4294901760
    %3173 = vmatpush1.msra.mxu0 %v3172
    %3174 = vmatprep.subr.mxu0 0.0
    %v3175 = vand.u32 %v93, 4294901760
    %3176 = vmatpush1.msra.mxu0 %v3175
    %3177 = vmatprep.subr.mxu0 0.0
    %v3178 = vand.u32 %v94, 4294901760
    %3179 = vmatpush1.msra.mxu0 %v3178
    %3180 = vmatprep.subr.mxu0 0.0
    %v3181 = vand.u32 %v95, 4294901760
    %3182 = vmatpush1.msra.mxu0 %v3181
    %3183 = vmatprep.subr.mxu0 0.0
    %v3184 = vand.u32 %v96, 4294901760
    %3185 = vmatpush1.msra.mxu0 %v3184
    %3186 = vmatprep.subr.mxu0 0.0
    %v3187 = vand.u32 %v97, 4294901760
    %3188 = vmatpush1.msra.mxu0 %v3187
    %3189 = vmatprep.subr.mxu0 0.0
    %v3190 = vand.u32 %v98, 4294901760
    %3191 = vmatpush1.msra.mxu0 %v3190
    %3192 = vmatprep.subr.mxu0 0.0
    %v3193 = vand.u32 %v99, 4294901760
    %3194 = vmatpush1.msra.mxu0 %v3193
    %3195 = vmatprep.subr.mxu0 0.0
    %v3196 = vand.u32 %v100, 4294901760
    %3197 = vmatpush1.msra.mxu0 %v3196
    %3198 = vmatprep.subr.mxu0 0.0
    %v3199 = vand.u32 %v101, 4294901760
    %3200 = vmatpush1.msra.mxu0 %v3199
    %3201 = vmatprep.subr.mxu0 0.0
    %3202 = vmatpush1.msra.mxu0 0.0
    %3203 = vmatprep.subr.mxu0 0.0
    %3204 = vmatpush1.msra.mxu0 0.0
    %3205 = vmatprep.subr.mxu0 0.0
    %3206 = vmatpush1.msra.mxu0 0.0
    %3207 = vmatprep.subr.mxu0 0.0
    %3208 = vmatpush1.msra.mxu0 0.0
    %3209 = vmatprep.subr.mxu0 0.0
    %3210 = vmatpush1.msra.mxu0 0.0
    %3211 = vmatprep.subr.mxu0 0.0
    %3212 = vmatpush1.msra.mxu0 0.0
    %3213 = vmatprep.subr.mxu0 0.0
    %3214 = vmatpush1.msra.mxu0 0.0
    %3215 = vmatprep.subr.mxu0 0.0
    %3216 = vmatpush1.msra.mxu0 0.0
    %3217 = vmatprep.subr.mxu0 0.0
    %3218 = vmatpush1.msra.mxu0 0.0
    %3219 = vmatprep.subr.mxu0 0.0
    %3220 = vmatpush1.msra.mxu0 0.0
    %3221 = vmatprep.subr.mxu0 0.0
    %3222 = vmatpush1.msra.mxu0 0.0
    %3223 = vmatprep.subr.mxu0 0.0
    %3224 = vmatpush1.msra.mxu0 0.0
    %3225 = vmatprep.subr.mxu0 0.0
    %3226 = vmatpush1.msra.mxu0 0.0
    %3227 = vmatprep.subr.mxu0 0.0
    %3228 = vmatpush1.msra.mxu0 0.0
    %3229 = vmatprep.subr.mxu0 0.0
    %3230 = vmatpush1.msra.mxu0 0.0
    %3231 = vmatprep.subr.mxu0 0.0
    %3232 = vmatpush1.msra.mxu0 0.0
    %3233 = vmatprep.mubr.f32.mxu0 0.0
    %v3234 = vand.u32 %v3152, 4294901760
    %v3235 = vsub.f32 %v3152, %v3234
    %v3236 = vand.u32 %v3235, 4294901760
    %v3237 = vsub.f32 %v3235, %v3236
    %v3238 = vand.u32 %v3237, 4294901760
    %3239 = vmatmul.mubr.f32.gmra.mrb[0].mxu0 %v3238
    %v3240 = vpop.f32.mrb[0].mxu0
    %v3241 = vadd.f32 0.0, %v3240
    %v3242 = vpop.f32.mrb[0].mxu0
    %3243 = vdwg.mxu0
    %3244 = vmatprep.subr.mxu0 0.0
    %v3245 = vand.u32 %v86, 4294901760
    %v3246 = vsub.f32 %v86, %v3245
    %v3247 = vand.u32 %v3246, 4294901760
    %v3248 = vsub.f32 %v3246, %v3247
    %v3249 = vand.u32 %v3248, 4294901760
    %3250 = vmatpush1.msra.mxu0 %v3249
    %3251 = vmatprep.subr.mxu0 0.0
    %v3252 = vand.u32 %v87, 4294901760
    %v3253 = vsub.f32 %v87, %v3252
    %v3254 = vand.u32 %v3253, 4294901760
    %v3255 = vsub.f32 %v3253, %v3254
    %v3256 = vand.u32 %v3255, 4294901760
    %3257 = vmatpush1.msra.mxu0 %v3256
    %3258 = vmatprep.subr.mxu0 0.0
    %v3259 = vand.u32 %v88, 4294901760
    %v3260 = vsub.f32 %v88, %v3259
    %v3261 = vand.u32 %v3260, 4294901760
    %v3262 = vsub.f32 %v3260, %v3261
    %v3263 = vand.u32 %v3262, 4294901760
    %3264 = vmatpush1.msra.mxu0 %v3263
    %3265 = vmatprep.subr.mxu0 0.0
    %v3266 = vand.u32 %v89, 4294901760
    %v3267 = vsub.f32 %v89, %v3266
    %v3268 = vand.u32 %v3267, 4294901760
    %v3269 = vsub.f32 %v3267, %v3268
    %v3270 = vand.u32 %v3269, 4294901760
    %3271 = vmatpush1.msra.mxu0 %v3270
    %3272 = vmatprep.subr.mxu0 0.0
    %v3273 = vand.u32 %v90, 4294901760
    %v3274 = vsub.f32 %v90, %v3273
    %v3275 = vand.u32 %v3274, 4294901760
    %v3276 = vsub.f32 %v3274, %v3275
    %v3277 = vand.u32 %v3276, 4294901760
    %3278 = vmatpush1.msra.mxu0 %v3277
    %3279 = vmatprep.subr.mxu0 0.0
    %v3280 = vand.u32 %v91, 4294901760
    %v3281 = vsub.f32 %v91, %v3280
    %v3282 = vand.u32 %v3281, 4294901760
    %v3283 = vsub.f32 %v3281, %v3282
    %v3284 = vand.u32 %v3283, 4294901760
    %3285 = vmatpush1.msra.mxu0 %v3284
    %3286 = vmatprep.subr.mxu0 0.0
    %v3287 = vand.u32 %v92, 4294901760
    %v3288 = vsub.f32 %v92, %v3287
    %v3289 = vand.u32 %v3288, 4294901760
    %v3290 = vsub.f32 %v3288, %v3289
    %v3291 = vand.u32 %v3290, 4294901760
    %3292 = vmatpush1.msra.mxu0 %v3291
    %3293 = vmatprep.subr.mxu0 0.0
    %v3294 = vand.u32 %v93, 4294901760
    %v3295 = vsub.f32 %v93, %v3294
    %v3296 = vand.u32 %v3295, 4294901760
    %v3297 = vsub.f32 %v3295, %v3296
    %v3298 = vand.u32 %v3297, 4294901760
    %3299 = vmatpush1.msra.mxu0 %v3298
    %3300 = vmatprep.subr.mxu0 0.0
    %v3301 = vand.u32 %v94, 4294901760
    %v3302 = vsub.f32 %v94, %v3301
    %v3303 = vand.u32 %v3302, 4294901760
    %v3304 = vsub.f32 %v3302, %v3303
    %v3305 = vand.u32 %v3304, 4294901760
    %3306 = vmatpush1.msra.mxu0 %v3305
    %3307 = vmatprep.subr.mxu0 0.0
    %v3308 = vand.u32 %v95, 4294901760
    %v3309 = vsub.f32 %v95, %v3308
    %v3310 = vand.u32 %v3309, 4294901760
    %v3311 = vsub.f32 %v3309, %v3310
    %v3312 = vand.u32 %v3311, 4294901760
    %3313 = vmatpush1.msra.mxu0 %v3312
    %3314 = vmatprep.subr.mxu0 0.0
    %v3315 = vand.u32 %v96, 4294901760
    %v3316 = vsub.f32 %v96, %v3315
    %v3317 = vand.u32 %v3316, 4294901760
    %v3318 = vsub.f32 %v3316, %v3317
    %v3319 = vand.u32 %v3318, 4294901760
    %3320 = vmatpush1.msra.mxu0 %v3319
    %3321 = vmatprep.subr.mxu0 0.0
    %v3322 = vand.u32 %v97, 4294901760
    %v3323 = vsub.f32 %v97, %v3322
    %v3324 = vand.u32 %v3323, 4294901760
    %v3325 = vsub.f32 %v3323, %v3324
    %v3326 = vand.u32 %v3325, 4294901760
    %3327 = vmatpush1.msra.mxu0 %v3326
    %3328 = vmatprep.subr.mxu0 0.0
    %v3329 = vand.u32 %v98, 4294901760
    %v3330 = vsub.f32 %v98, %v3329
    %v3331 = vand.u32 %v3330, 4294901760
    %v3332 = vsub.f32 %v3330, %v3331
    %v3333 = vand.u32 %v3332, 4294901760
    %3334 = vmatpush1.msra.mxu0 %v3333
    %3335 = vmatprep.subr.mxu0 0.0
    %v3336 = vand.u32 %v99, 4294901760
    %v3337 = vsub.f32 %v99, %v3336
    %v3338 = vand.u32 %v3337, 4294901760
    %v3339 = vsub.f32 %v3337, %v3338
    %v3340 = vand.u32 %v3339, 4294901760
    %3341 = vmatpush1.msra.mxu0 %v3340
    %3342 = vmatprep.subr.mxu0 0.0
    %v3343 = vand.u32 %v100, 4294901760
    %v3344 = vsub.f32 %v100, %v3343
    %v3345 = vand.u32 %v3344, 4294901760
    %v3346 = vsub.f32 %v3344, %v3345
    %v3347 = vand.u32 %v3346, 4294901760
    %3348 = vmatpush1.msra.mxu0 %v3347
    %3349 = vmatprep.subr.mxu0 0.0
    %v3350 = vand.u32 %v101, 4294901760
    %v3351 = vsub.f32 %v101, %v3350
    %v3352 = vand.u32 %v3351, 4294901760
    %v3353 = vsub.f32 %v3351, %v3352
    %v3354 = vand.u32 %v3353, 4294901760
    %3355 = vmatpush1.msra.mxu0 %v3354
    %3356 = vmatprep.subr.mxu0 0.0
    %3357 = vmatpush1.msra.mxu0 0.0
    %3358 = vmatprep.subr.mxu0 0.0
    %3359 = vmatpush1.msra.mxu0 0.0
    %3360 = vmatprep.subr.mxu0 0.0
    %3361 = vmatpush1.msra.mxu0 0.0
    %3362 = vmatprep.subr.mxu0 0.0
    %3363 = vmatpush1.msra.mxu0 0.0
    %3364 = vmatprep.subr.mxu0 0.0
    %3365 = vmatpush1.msra.mxu0 0.0
    %3366 = vmatprep.subr.mxu0 0.0
    %3367 = vmatpush1.msra.mxu0 0.0
    %3368 = vmatprep.subr.mxu0 0.0
    %3369 = vmatpush1.msra.mxu0 0.0
    %3370 = vmatprep.subr.mxu0 0.0
    %3371 = vmatpush1.msra.mxu0 0.0
    %3372 = vmatprep.subr.mxu0 0.0
    %3373 = vmatpush1.msra.mxu0 0.0
    %3374 = vmatprep.subr.mxu0 0.0
    %3375 = vmatpush1.msra.mxu0 0.0
    %3376 = vmatprep.subr.mxu0 0.0
    %3377 = vmatpush1.msra.mxu0 0.0
    %3378 = vmatprep.subr.mxu0 0.0
    %3379 = vmatpush1.msra.mxu0 0.0
    %3380 = vmatprep.subr.mxu0 0.0
    %3381 = vmatpush1.msra.mxu0 0.0
    %3382 = vmatprep.subr.mxu0 0.0
    %3383 = vmatpush1.msra.mxu0 0.0
    %3384 = vmatprep.subr.mxu0 0.0
    %3385 = vmatpush1.msra.mxu0 0.0
    %3386 = vmatprep.subr.mxu0 0.0
    %3387 = vmatpush1.msra.mxu0 0.0
    %3388 = vmatprep.mubr.f32.mxu0 0.0
    %v3389 = vand.u32 %v3152, 4294901760
    %3390 = vmatmul.mubr.f32.gmra.mrb[0].mxu0 %v3389
    %v3391 = vpop.f32.mrb[0].mxu0
    %v3392 = vadd.f32 %v3241, %v3391
    %v3393 = vpop.f32.mrb[0].mxu0
    %3394 = vdwg.mxu0
    %3395 = vmatprep.subr.mxu0 0.0
    %v3396 = vand.u32 %v86, 4294901760
    %v3397 = vsub.f32 %v86, %v3396
    %3398 = vmatpush1.msra.mxu0 %v3397
    %3399 = vmatprep.subr.mxu0 0.0
    %v3400 = vand.u32 %v87, 4294901760
    %v3401 = vsub.f32 %v87, %v3400
    %3402 = vmatpush1.msra.mxu0 %v3401
    %3403 = vmatprep.subr.mxu0 0.0
    %v3404 = vand.u32 %v88, 4294901760
    %v3405 = vsub.f32 %v88, %v3404
    %3406 = vmatpush1.msra.mxu0 %v3405
    %3407 = vmatprep.subr.mxu0 0.0
    %v3408 = vand.u32 %v89, 4294901760
    %v3409 = vsub.f32 %v89, %v3408
    %3410 = vmatpush1.msra.mxu0 %v3409
    %3411 = vmatprep.subr.mxu0 0.0
    %v3412 = vand.u32 %v90, 4294901760
    %v3413 = vsub.f32 %v90, %v3412
    %3414 = vmatpush1.msra.mxu0 %v3413
    %3415 = vmatprep.subr.mxu0 0.0
    %v3416 = vand.u32 %v91, 4294901760
    %v3417 = vsub.f32 %v91, %v3416
    %3418 = vmatpush1.msra.mxu0 %v3417
    %3419 = vmatprep.subr.mxu0 0.0
    %v3420 = vand.u32 %v92, 4294901760
    %v3421 = vsub.f32 %v92, %v3420
    %3422 = vmatpush1.msra.mxu0 %v3421
    %3423 = vmatprep.subr.mxu0 0.0
    %v3424 = vand.u32 %v93, 4294901760
    %v3425 = vsub.f32 %v93, %v3424
    %3426 = vmatpush1.msra.mxu0 %v3425
    %3427 = vmatprep.subr.mxu0 0.0
    %v3428 = vand.u32 %v94, 4294901760
    %v3429 = vsub.f32 %v94, %v3428
    %3430 = vmatpush1.msra.mxu0 %v3429
    %3431 = vmatprep.subr.mxu0 0.0
    %v3432 = vand.u32 %v95, 4294901760
    %v3433 = vsub.f32 %v95, %v3432
    %3434 = vmatpush1.msra.mxu0 %v3433
    %3435 = vmatprep.subr.mxu0 0.0
    %v3436 = vand.u32 %v96, 4294901760
    %v3437 = vsub.f32 %v96, %v3436
    %3438 = vmatpush1.msra.mxu0 %v3437
    %3439 = vmatprep.subr.mxu0 0.0
    %v3440 = vand.u32 %v97, 4294901760
    %v3441 = vsub.f32 %v97, %v3440
    %3442 = vmatpush1.msra.mxu0 %v3441
    %3443 = vmatprep.subr.mxu0 0.0
    %v3444 = vand.u32 %v98, 4294901760
    %v3445 = vsub.f32 %v98, %v3444
    %3446 = vmatpush1.msra.mxu0 %v3445
    %3447 = vmatprep.subr.mxu0 0.0
    %v3448 = vand.u32 %v99, 4294901760
    %v3449 = vsub.f32 %v99, %v3448
    %3450 = vmatpush1.msra.mxu0 %v3449
    %3451 = vmatprep.subr.mxu0 0.0
    %v3452 = vand.u32 %v100, 4294901760
    %v3453 = vsub.f32 %v100, %v3452
    %3454 = vmatpush1.msra.mxu0 %v3453
    %3455 = vmatprep.subr.mxu0 0.0
    %v3456 = vand.u32 %v101, 4294901760
    %v3457 = vsub.f32 %v101, %v3456
    %3458 = vmatpush1.msra.mxu0 %v3457
    %3459 = vmatprep.subr.mxu0 0.0
    %3460 = vmatpush1.msra.mxu0 0.0
    %3461 = vmatprep.subr.mxu0 0.0
    %3462 = vmatpush1.msra.mxu0 0.0
    %3463 = vmatprep.subr.mxu0 0.0
    %3464 = vmatpush1.msra.mxu0 0.0
    %3465 = vmatprep.subr.mxu0 0.0
    %3466 = vmatpush1.msra.mxu0 0.0
    %3467 = vmatprep.subr.mxu0 0.0
    %3468 = vmatpush1.msra.mxu0 0.0
    %3469 = vmatprep.subr.mxu0 0.0
    %3470 = vmatpush1.msra.mxu0 0.0
    %3471 = vmatprep.subr.mxu0 0.0
    %3472 = vmatpush1.msra.mxu0 0.0
    %3473 = vmatprep.subr.mxu0 0.0
    %3474 = vmatpush1.msra.mxu0 0.0
    %3475 = vmatprep.subr.mxu0 0.0
    %3476 = vmatpush1.msra.mxu0 0.0
    %3477 = vmatprep.subr.mxu0 0.0
    %3478 = vmatpush1.msra.mxu0 0.0
    %3479 = vmatprep.subr.mxu0 0.0
    %3480 = vmatpush1.msra.mxu0 0.0
    %3481 = vmatprep.subr.mxu0 0.0
    %3482 = vmatpush1.msra.mxu0 0.0
    %3483 = vmatprep.subr.mxu0 0.0
    %3484 = vmatpush1.msra.mxu0 0.0
    %3485 = vmatprep.subr.mxu0 0.0
    %3486 = vmatpush1.msra.mxu0 0.0
    %3487 = vmatprep.subr.mxu0 0.0
    %3488 = vmatpush1.msra.mxu0 0.0
    %3489 = vmatprep.subr.mxu0 0.0
    %3490 = vmatpush1.msra.mxu0 0.0
    %3491 = vmatprep.mubr.f32.mxu0 0.0
    %v3492 = vand.u32 %v3152, 4294901760
    %v3493 = vsub.f32 %v3152, %v3492
    %3494 = vmatmul.mubr.f32.gmra.mrb[0].mxu0 %v3493
    %v3495 = vpop.f32.mrb[0].mxu0
    %v3496 = vadd.f32 %v3392, %v3495
    %v3497 = vpop.f32.mrb[0].mxu0
    %3498 = vdwg.mxu0
    %3499 = vmatprep.subr.mxu0 0.0
    %v3500 = vand.u32 %v86, 4294901760
    %3501 = vmatpush1.msra.mxu0 %v3500
    %3502 = vmatprep.subr.mxu0 0.0
    %v3503 = vand.u32 %v87, 4294901760
    %3504 = vmatpush1.msra.mxu0 %v3503
    %3505 = vmatprep.subr.mxu0 0.0
    %v3506 = vand.u32 %v88, 4294901760
    %3507 = vmatpush1.msra.mxu0 %v3506
    %3508 = vmatprep.subr.mxu0 0.0
    %v3509 = vand.u32 %v89, 4294901760
    %3510 = vmatpush1.msra.mxu0 %v3509
    %3511 = vmatprep.subr.mxu0 0.0
    %v3512 = vand.u32 %v90, 4294901760
    %3513 = vmatpush1.msra.mxu0 %v3512
    %3514 = vmatprep.subr.mxu0 0.0
    %v3515 = vand.u32 %v91, 4294901760
    %3516 = vmatpush1.msra.mxu0 %v3515
    %3517 = vmatprep.subr.mxu0 0.0
    %v3518 = vand.u32 %v92, 4294901760
    %3519 = vmatpush1.msra.mxu0 %v3518
    %3520 = vmatprep.subr.mxu0 0.0
    %v3521 = vand.u32 %v93, 4294901760
    %3522 = vmatpush1.msra.mxu0 %v3521
    %3523 = vmatprep.subr.mxu0 0.0
    %v3524 = vand.u32 %v94, 4294901760
    %3525 = vmatpush1.msra.mxu0 %v3524
    %3526 = vmatprep.subr.mxu0 0.0
    %v3527 = vand.u32 %v95, 4294901760
    %3528 = vmatpush1.msra.mxu0 %v3527
    %3529 = vmatprep.subr.mxu0 0.0
    %v3530 = vand.u32 %v96, 4294901760
    %3531 = vmatpush1.msra.mxu0 %v3530
    %3532 = vmatprep.subr.mxu0 0.0
    %v3533 = vand.u32 %v97, 4294901760
    %3534 = vmatpush1.msra.mxu0 %v3533
    %3535 = vmatprep.subr.mxu0 0.0
    %v3536 = vand.u32 %v98, 4294901760
    %3537 = vmatpush1.msra.mxu0 %v3536
    %3538 = vmatprep.subr.mxu0 0.0
    %v3539 = vand.u32 %v99, 4294901760
    %3540 = vmatpush1.msra.mxu0 %v3539
    %3541 = vmatprep.subr.mxu0 0.0
    %v3542 = vand.u32 %v100, 4294901760
    %3543 = vmatpush1.msra.mxu0 %v3542
    %3544 = vmatprep.subr.mxu0 0.0
    %v3545 = vand.u32 %v101, 4294901760
    %3546 = vmatpush1.msra.mxu0 %v3545
    %3547 = vmatprep.subr.mxu0 0.0
    %3548 = vmatpush1.msra.mxu0 0.0
    %3549 = vmatprep.subr.mxu0 0.0
    %3550 = vmatpush1.msra.mxu0 0.0
    %3551 = vmatprep.subr.mxu0 0.0
    %3552 = vmatpush1.msra.mxu0 0.0
    %3553 = vmatprep.subr.mxu0 0.0
    %3554 = vmatpush1.msra.mxu0 0.0
    %3555 = vmatprep.subr.mxu0 0.0
    %3556 = vmatpush1.msra.mxu0 0.0
    %3557 = vmatprep.subr.mxu0 0.0
    %3558 = vmatpush1.msra.mxu0 0.0
    %3559 = vmatprep.subr.mxu0 0.0
    %3560 = vmatpush1.msra.mxu0 0.0
    %3561 = vmatprep.subr.mxu0 0.0
    %3562 = vmatpush1.msra.mxu0 0.0
    %3563 = vmatprep.subr.mxu0 0.0
    %3564 = vmatpush1.msra.mxu0 0.0
    %3565 = vmatprep.subr.mxu0 0.0
    %3566 = vmatpush1.msra.mxu0 0.0
    %3567 = vmatprep.subr.mxu0 0.0
    %3568 = vmatpush1.msra.mxu0 0.0
    %3569 = vmatprep.subr.mxu0 0.0
    %3570 = vmatpush1.msra.mxu0 0.0
    %3571 = vmatprep.subr.mxu0 0.0
    %3572 = vmatpush1.msra.mxu0 0.0
    %3573 = vmatprep.subr.mxu0 0.0
    %3574 = vmatpush1.msra.mxu0 0.0
    %3575 = vmatprep.subr.mxu0 0.0
    %3576 = vmatpush1.msra.mxu0 0.0
    %3577 = vmatprep.subr.mxu0 0.0
    %3578 = vmatpush1.msra.mxu0 0.0
    %3579 = vmatprep.mubr.f32.mxu0 0.0
    %v3580 = vand.u32 %v3152, 4294901760
    %v3581 = vsub.f32 %v3152, %v3580
    %v3582 = vand.u32 %v3581, 4294901760
    %3583 = vmatmul.mubr.f32.gmra.mrb[0].mxu0 %v3582
    %v3584 = vpop.f32.mrb[0].mxu0
    %v3585 = vadd.f32 %v3496, %v3584
    %v3586 = vpop.f32.mrb[0].mxu0
    %3587 = vdwg.mxu0
    %3588 = vmatprep.subr.mxu0 0.0
    %v3589 = vand.u32 %v86, 4294901760
    %v3590 = vsub.f32 %v86, %v3589
    %v3591 = vand.u32 %v3590, 4294901760
    %3592 = vmatpush1.msra.mxu0 %v3591
    %3593 = vmatprep.subr.mxu0 0.0
    %v3594 = vand.u32 %v87, 4294901760
    %v3595 = vsub.f32 %v87, %v3594
    %v3596 = vand.u32 %v3595, 4294901760
    %3597 = vmatpush1.msra.mxu0 %v3596
    %3598 = vmatprep.subr.mxu0 0.0
    %v3599 = vand.u32 %v88, 4294901760
    %v3600 = vsub.f32 %v88, %v3599
    %v3601 = vand.u32 %v3600, 4294901760
    %3602 = vmatpush1.msra.mxu0 %v3601
    %3603 = vmatprep.subr.mxu0 0.0
    %v3604 = vand.u32 %v89, 4294901760
    %v3605 = vsub.f32 %v89, %v3604
    %v3606 = vand.u32 %v3605, 4294901760
    %3607 = vmatpush1.msra.mxu0 %v3606
    %3608 = vmatprep.subr.mxu0 0.0
    %v3609 = vand.u32 %v90, 4294901760
    %v3610 = vsub.f32 %v90, %v3609
    %v3611 = vand.u32 %v3610, 4294901760
    %3612 = vmatpush1.msra.mxu0 %v3611
    %3613 = vmatprep.subr.mxu0 0.0
    %v3614 = vand.u32 %v91, 4294901760
    %v3615 = vsub.f32 %v91, %v3614
    %v3616 = vand.u32 %v3615, 4294901760
    %3617 = vmatpush1.msra.mxu0 %v3616
    %3618 = vmatprep.subr.mxu0 0.0
    %v3619 = vand.u32 %v92, 4294901760
    %v3620 = vsub.f32 %v92, %v3619
    %v3621 = vand.u32 %v3620, 4294901760
    %3622 = vmatpush1.msra.mxu0 %v3621
    %3623 = vmatprep.subr.mxu0 0.0
    %v3624 = vand.u32 %v93, 4294901760
    %v3625 = vsub.f32 %v93, %v3624
    %v3626 = vand.u32 %v3625, 4294901760
    %3627 = vmatpush1.msra.mxu0 %v3626
    %3628 = vmatprep.subr.mxu0 0.0
    %v3629 = vand.u32 %v94, 4294901760
    %v3630 = vsub.f32 %v94, %v3629
    %v3631 = vand.u32 %v3630, 4294901760
    %3632 = vmatpush1.msra.mxu0 %v3631
    %3633 = vmatprep.subr.mxu0 0.0
    %v3634 = vand.u32 %v95, 4294901760
    %v3635 = vsub.f32 %v95, %v3634
    %v3636 = vand.u32 %v3635, 4294901760
    %3637 = vmatpush1.msra.mxu0 %v3636
    %3638 = vmatprep.subr.mxu0 0.0
    %v3639 = vand.u32 %v96, 4294901760
    %v3640 = vsub.f32 %v96, %v3639
    %v3641 = vand.u32 %v3640, 4294901760
    %3642 = vmatpush1.msra.mxu0 %v3641
    %3643 = vmatprep.subr.mxu0 0.0
    %v3644 = vand.u32 %v97, 4294901760
    %v3645 = vsub.f32 %v97, %v3644
    %v3646 = vand.u32 %v3645, 4294901760
    %3647 = vmatpush1.msra.mxu0 %v3646
    %3648 = vmatprep.subr.mxu0 0.0
    %v3649 = vand.u32 %v98, 4294901760
    %v3650 = vsub.f32 %v98, %v3649
    %v3651 = vand.u32 %v3650, 4294901760
    %3652 = vmatpush1.msra.mxu0 %v3651
    %3653 = vmatprep.subr.mxu0 0.0
    %v3654 = vand.u32 %v99, 4294901760
    %v3655 = vsub.f32 %v99, %v3654
    %v3656 = vand.u32 %v3655, 4294901760
    %3657 = vmatpush1.msra.mxu0 %v3656
    %3658 = vmatprep.subr.mxu0 0.0
    %v3659 = vand.u32 %v100, 4294901760
    %v3660 = vsub.f32 %v100, %v3659
    %v3661 = vand.u32 %v3660, 4294901760
    %3662 = vmatpush1.msra.mxu0 %v3661
    %3663 = vmatprep.subr.mxu0 0.0
    %v3664 = vand.u32 %v101, 4294901760
    %v3665 = vsub.f32 %v101, %v3664
    %v3666 = vand.u32 %v3665, 4294901760
    %3667 = vmatpush1.msra.mxu0 %v3666
    %3668 = vmatprep.subr.mxu0 0.0
    %3669 = vmatpush1.msra.mxu0 0.0
    %3670 = vmatprep.subr.mxu0 0.0
    %3671 = vmatpush1.msra.mxu0 0.0
    %3672 = vmatprep.subr.mxu0 0.0
    %3673 = vmatpush1.msra.mxu0 0.0
    %3674 = vmatprep.subr.mxu0 0.0
    %3675 = vmatpush1.msra.mxu0 0.0
    %3676 = vmatprep.subr.mxu0 0.0
    %3677 = vmatpush1.msra.mxu0 0.0
    %3678 = vmatprep.subr.mxu0 0.0
    %3679 = vmatpush1.msra.mxu0 0.0
    %3680 = vmatprep.subr.mxu0 0.0
    %3681 = vmatpush1.msra.mxu0 0.0
    %3682 = vmatprep.subr.mxu0 0.0
    %3683 = vmatpush1.msra.mxu0 0.0
    %3684 = vmatprep.subr.mxu0 0.0
    %3685 = vmatpush1.msra.mxu0 0.0
    %3686 = vmatprep.subr.mxu0 0.0
    %3687 = vmatpush1.msra.mxu0 0.0
    %3688 = vmatprep.subr.mxu0 0.0
    %3689 = vmatpush1.msra.mxu0 0.0
    %3690 = vmatprep.subr.mxu0 0.0
    %3691 = vmatpush1.msra.mxu0 0.0
    %3692 = vmatprep.subr.mxu0 0.0
    %3693 = vmatpush1.msra.mxu0 0.0
    %3694 = vmatprep.subr.mxu0 0.0
    %3695 = vmatpush1.msra.mxu0 0.0
    %3696 = vmatprep.subr.mxu0 0.0
    %3697 = vmatpush1.msra.mxu0 0.0
    %3698 = vmatprep.subr.mxu0 0.0
    %3699 = vmatpush1.msra.mxu0 0.0
    %3700 = vmatprep.mubr.f32.mxu0 0.0
    %v3701 = vand.u32 %v3152, 4294901760
    %3702 = vmatmul.mubr.f32.gmra.mrb[0].mxu0 %v3701
    %v3703 = vpop.f32.mrb[0].mxu0
    %v3704 = vadd.f32 %v3585, %v3703
    %v3705 = vpop.f32.mrb[0].mxu0
    %3706 = vdwg.mxu0
    %3707 = vmatprep.subr.mxu0 0.0
    %v3708 = vand.u32 %v86, 4294901760
    %3709 = vmatpush1.msra.mxu0 %v3708
    %3710 = vmatprep.subr.mxu0 0.0
    %v3711 = vand.u32 %v87, 4294901760
    %3712 = vmatpush1.msra.mxu0 %v3711
    %3713 = vmatprep.subr.mxu0 0.0
    %v3714 = vand.u32 %v88, 4294901760
    %3715 = vmatpush1.msra.mxu0 %v3714
    %3716 = vmatprep.subr.mxu0 0.0
    %v3717 = vand.u32 %v89, 4294901760
    %3718 = vmatpush1.msra.mxu0 %v3717
    %3719 = vmatprep.subr.mxu0 0.0
    %v3720 = vand.u32 %v90, 4294901760
    %3721 = vmatpush1.msra.mxu0 %v3720
    %3722 = vmatprep.subr.mxu0 0.0
    %v3723 = vand.u32 %v91, 4294901760
    %3724 = vmatpush1.msra.mxu0 %v3723
    %3725 = vmatprep.subr.mxu0 0.0
    %v3726 = vand.u32 %v92, 4294901760
    %3727 = vmatpush1.msra.mxu0 %v3726
    %3728 = vmatprep.subr.mxu0 0.0
    %v3729 = vand.u32 %v93, 4294901760
    %3730 = vmatpush1.msra.mxu0 %v3729
    %3731 = vmatprep.subr.mxu0 0.0
    %v3732 = vand.u32 %v94, 4294901760
    %3733 = vmatpush1.msra.mxu0 %v3732
    %3734 = vmatprep.subr.mxu0 0.0
    %v3735 = vand.u32 %v95, 4294901760
    %3736 = vmatpush1.msra.mxu0 %v3735
    %3737 = vmatprep.subr.mxu0 0.0
    %v3738 = vand.u32 %v96, 4294901760
    %3739 = vmatpush1.msra.mxu0 %v3738
    %3740 = vmatprep.subr.mxu0 0.0
    %v3741 = vand.u32 %v97, 4294901760
    %3742 = vmatpush1.msra.mxu0 %v3741
    %3743 = vmatprep.subr.mxu0 0.0
    %v3744 = vand.u32 %v98, 4294901760
    %3745 = vmatpush1.msra.mxu0 %v3744
    %3746 = vmatprep.subr.mxu0 0.0
    %v3747 = vand.u32 %v99, 4294901760
    %3748 = vmatpush1.msra.mxu0 %v3747
    %3749 = vmatprep.subr.mxu0 0.0
    %v3750 = vand.u32 %v100, 4294901760
    %3751 = vmatpush1.msra.mxu0 %v3750
    %3752 = vmatprep.subr.mxu0 0.0
    %v3753 = vand.u32 %v101, 4294901760
    %3754 = vmatpush1.msra.mxu0 %v3753
    %3755 = vmatprep.subr.mxu0 0.0
    %3756 = vmatpush1.msra.mxu0 0.0
    %3757 = vmatprep.subr.mxu0 0.0
    %3758 = vmatpush1.msra.mxu0 0.0
    %3759 = vmatprep.subr.mxu0 0.0
    %3760 = vmatpush1.msra.mxu0 0.0
    %3761 = vmatprep.subr.mxu0 0.0
    %3762 = vmatpush1.msra.mxu0 0.0
    %3763 = vmatprep.subr.mxu0 0.0
    %3764 = vmatpush1.msra.mxu0 0.0
    %3765 = vmatprep.subr.mxu0 0.0
    %3766 = vmatpush1.msra.mxu0 0.0
    %3767 = vmatprep.subr.mxu0 0.0
    %3768 = vmatpush1.msra.mxu0 0.0
    %3769 = vmatprep.subr.mxu0 0.0
    %3770 = vmatpush1.msra.mxu0 0.0
    %3771 = vmatprep.subr.mxu0 0.0
    %3772 = vmatpush1.msra.mxu0 0.0
    %3773 = vmatprep.subr.mxu0 0.0
    %3774 = vmatpush1.msra.mxu0 0.0
    %3775 = vmatprep.subr.mxu0 0.0
    %3776 = vmatpush1.msra.mxu0 0.0
    %3777 = vmatprep.subr.mxu0 0.0
    %3778 = vmatpush1.msra.mxu0 0.0
    %3779 = vmatprep.subr.mxu0 0.0
    %3780 = vmatpush1.msra.mxu0 0.0
    %3781 = vmatprep.subr.mxu0 0.0
    %3782 = vmatpush1.msra.mxu0 0.0
    %3783 = vmatprep.subr.mxu0 0.0
    %3784 = vmatpush1.msra.mxu0 0.0
    %3785 = vmatprep.subr.mxu0 0.0
    %3786 = vmatpush1.msra.mxu0 0.0
    %3787 = vmatprep.mubr.f32.mxu0 0.0
    %v3788 = vand.u32 %v3152, 4294901760
    %3789 = vmatmul.mubr.f32.gmra.mrb[0].mxu0 %v3788
    %v3790 = vpop.f32.mrb[0].mxu0
    %v3791 = vadd.f32 %v3704, %v3790
    %v3792 = vpop.f32.mrb[0].mxu0
    %3793 = vdwg.mxu0
    %v3794 = vmul.f32 %v3791, 0.001953125
    %v3795 = vadd.f32 %v3794, 1e-05
    %v3796 = vrsqrt.pop %v3795
    %v3797 = vmul.f32 %v2479, %v3796
    %v3799 = vlaneseq
    %v3800 = vshrl.u32 %v3799, 7
    %v3801 = vsub.s32 0, %v3800
    %v3802 = vrot.slane %v3797, %v3801
    %v3804 = vmul.f32 %v3136, %v3802
    %v3805 = vmul.f32 %v3137, %v3802
    %v3806 = vmul.f32 %v3138, %v3802
    %v3807 = vmul.f32 %v3139, %v3802
    %v3809 = vlaneseq
    %v3810 = vshrl.u32 %v3809, 7
    %v3811 = vsub.s32 0, %v3810
    %v3812 = vrot.slane %v2480, %v3811
    %v3814 = vadd.f32 %v3804, %v3812
    %v3815 = vadd.f32 %v3805, %v3812
    %v3816 = vadd.f32 %v3806, %v3812
    %v3817 = vadd.f32 %v3807, %v3812
    %v3818 = vadd.f32 %v3814, %v102
    %v3819 = vadd.f32 %v3815, %v103
    %v3820 = vadd.f32 %v3816, %v104
    %v3821 = vadd.f32 %v3817, %v105
    %v3822 = vmax.f32 %v3818, 0.0
    %v3823 = vmax.f32 %v3819, 0.0
    %v3824 = vmax.f32 %v3820, 0.0
    %v3825 = vmax.f32 %v3821, 0.0
    %3826 = vst [vmem:[#allocation11] sm:$0xff] %v3822
    %3827 = vst [vmem:[#allocation11 + $0x8] sm:$0xff] %v3823
    %3828 = vst [vmem:[#allocation11 + $0x10] sm:$0xff] %v3824
    %3829 = vst [vmem:[#allocation11 + $0x18] sm:$0xff] %v3825
    // Predicated region
    $region50: #{tpu_custom_call.1} parent=1 // pred_check
      _
    $region51: #{tpu_custom_call.1} parent=1 // pred_check_branch
      %3831 = sbr.rel (0) target = $region53
    $region52: #{tpu_custom_call.1} parent=1 // pred_region
      %s3833 = ssub.s32 512, 512
      %3834 = vsyncadd [#allocation5], %s3833
      %s3835 = sshll.u32 [#allocation11], 4
      %s3836 = int_to_ptr.vmem [resolvable:$true] %s3835
      %3841 = dma.vmem_to_hbm [thread:$0]  %s3836, 512, %s8, [#allocation5], 128, 128, 8
    $region53: #{tpu_custom_call.1} parent=1 // pred_fallthru
      _
    // Predicated region
    $region54: #{tpu_custom_call.1} parent=1 // pred_check
      _
    $region55: #{tpu_custom_call.1} parent=1 // pred_check_branch
      %3843 = sbr.rel (0) target = $region57
    $region56: #{tpu_custom_call.1} parent=1 // pred_region
      %3844 = dma.done [#allocation5], 512
    $region57: #{tpu_custom_call.1} parent=1 // pred_fallthru
      _
    %3845 = vsyncpa [#allocation4], 1
    %3846 = vsyncpa [#allocation7], 1
    %3847 = vsyncpa [#allocation10], 1
    %3848 = vsyncpa [#allocation5], 1

</llo_original>
